<compile_context>
chip_gen: v5e
topology: v5e:2x2
jax: 0.10.0
libtpu: 0.0.40
codegen_flags: <defaults>
</compile_context>

<pallas_src>
import functools

import jax
import jax.numpy as jnp
from jax.experimental import pallas as pl
from jax.experimental.pallas import tpu as pltpu


# (oy, ox) tap offsets in raster order; tap index t = (oy+1)*3 + (ox+1).
_TAPS = tuple((oy, ox) for oy in (-1, 0, 1) for ox in (-1, 0, 1))


def _basic_block2_kernel(x_ref, w1_ref, w2_ref, b1_ref, b2_ref, out_ref, col_ref,
                         *, H, W, C, L):
    """One grid step == Nb images == the full BasicBlock2 forward.

    x_ref  : (C, L)    f32, L = Nb*H*W  -- channels on sublanes, flat (image, y, x) on lanes
    w1_ref : (C, 9*C)  f32  conv1 weight with BN1 scale folded in; cols = (dy*3+dx)*C + ci
    w2_ref : (C, 9*C)  f32  conv2 weight with BN2 scale folded in
    b*_ref : (C, 1)    f32  folded BN bias = beta - mean * gamma / sqrt(var + eps)
    out_ref: (C, L)    f32
    col_ref: (9*C, L)  f32  persistent VMEM scratch: im2col patch matrix, reused by both convs
    """
    HW = H * W
    x = x_ref[...]                                               # identity stays resident

    # Per-image border-validity masks on the flat lane axis -- ONE combined mask per tap
    # (corners pre-combined), built once per grid step and shared by both convolutions.
    pos = jax.lax.broadcasted_iota(jnp.int32, (1, L), 1)
    in_img = pos % HW                                            # position within its image
    col = pos % W
    not_top = in_img >= W
    not_bottom = in_img < HW - W
    not_left = col != 0
    not_right = col != W - 1
    row_ok = {-1: not_top, 0: None, 1: not_bottom}
    col_ok = {-1: not_left, 0: None, 1: not_right}
    tap_mask = []
    for oy, ox in _TAPS:
        m = row_ok[oy]
        if col_ok[ox] is not None:
            m = col_ok[ox] if m is None else (m & col_ok[ox])
        tap_mask.append(None if m is None else m.astype(jnp.float32))

    def fill_im2col(a):
        """Write the (9*C, L) 3x3-SAME patch matrix of `a` (C, L) into col_ref (no concat/pack)."""
        for t, (oy, ox) in enumerate(_TAPS):
            s = oy * W + ox                                      # flat source offset
            v = a if s == 0 else pltpu.roll(a, shift=(-s) % L, axis=1)
            if tap_mask[t] is not None:
                v = v * tap_mask[t]                              # zero out-of-image sources
            col_ref[pl.ds(t * C, C), :] = v

    # conv1 (BN1 scale pre-folded) -> +bias1 -> relu : one (C,9C)@(9C,L) MXU matmul, f32.
    fill_im2col(x)
    mid = jnp.dot(w1_ref[...], col_ref[...],
                  preferred_element_type=jnp.float32,
                  precision=jax.lax.Precision.HIGHEST)
    mid = jnp.maximum(mid + b1_ref[...], 0.0)

    # conv2 (BN2 scale pre-folded) -> +bias2 -> +identity -> relu.
    fill_im2col(mid)
    out = jnp.dot(w2_ref[...], col_ref[...],
                  preferred_element_type=jnp.float32,
                  precision=jax.lax.Precision.HIGHEST)
    out_ref[...] = jnp.maximum(out + b2_ref[...] + x, 0.0).astype(out_ref.dtype)


def fold_bn(gamma, beta, running_mean, running_var, eps=1e-5):
    scale = gamma / jnp.sqrt(running_var + eps)
    bias = beta - running_mean * scale
    return scale, bias


def _pack_conv_weight(w_oihw):
    """(Cout, Cin, 3, 3) OIHW -> (Cout, 9*Cin) f32, column order (dy*3+dx)*Cin + ci."""
    cout, cin = w_oihw.shape[0], w_oihw.shape[1]
    return jnp.transpose(w_oihw, (0, 2, 3, 1)).reshape(cout, 9 * cin).astype(jnp.float32)


def basic_block2_forward(x_nchw, params, images_per_step=None):
    """Pallas BasicBlock2.forward (stride=1, downsample=None, eval-mode BatchNorm)."""
    N, C, H, W = x_nchw.shape
    HW = H * W

    # Fail loudly on unsupported configurations (stride>1 / downsample / inplanes!=planes).
    assert params["w1"].shape == (C, C, 3, 3), "requires inplanes == planes, stride=1, no downsample"
    assert params["w2"].shape == (C, C, 3, 3)

    # Images per grid step: batch rides the matmul lane dimension; keep >=2 grid steps so
    # both v7x TensorCores receive work.
    if images_per_step is None:
        images_per_step = N // 2 if (N >= 2 and N % 2 == 0) else N
    Nb = images_per_step
    assert N % Nb == 0, "batch must divide evenly into images_per_step blocks"
    L = Nb * HW
    assert (L % 128 == 0) or (Nb == N), "per-step lane extent should be a multiple of 128"

    # Fold BN scale into conv weights (per output channel); only biases go to the kernel.
    s1, b1 = fold_bn(*params["bn1"])
    s2, b2 = fold_bn(*params["bn2"])
    w1 = _pack_conv_weight(params["w1"] * s1[:, None, None, None])
    w2 = _pack_conv_weight(params["w2"] * s2[:, None, None, None])

    # Layout plumbing (tiny XLA ops outside the kernel): channels -> sublanes,
    # flat (image, y, x) -> lanes, so the kernel store is lane-dense.
    x_cl = jnp.transpose(x_nchw, (1, 0, 2, 3)).reshape(C, N * HW).astype(jnp.float32)

    kernel = functools.partial(_basic_block2_kernel, H=H, W=W, C=C, L=L)

    out = pl.pallas_call(
        kernel,
        out_shape=jax.ShapeDtypeStruct((C, N * HW), jnp.float32),
        grid=(N // Nb,),
        in_specs=[
            pl.BlockSpec((C, L), lambda i: (0, i)),          # x / identity (Nb images)
            pl.BlockSpec((C, 9 * C), lambda i: (0, 0)),      # conv1 weight (BN1 scale folded)
            pl.BlockSpec((C, 9 * C), lambda i: (0, 0)),      # conv2 weight (BN2 scale folded)
            pl.BlockSpec((C, 1), lambda i: (0, 0)),          # bias1
            pl.BlockSpec((C, 1), lambda i: (0, 0)),          # bias2
        ],
        out_specs=pl.BlockSpec((C, L), lambda i: (0, i)),
        scratch_shapes=[pltpu.VMEM((9 * C, L), jnp.float32)],  # shared im2col patch matrix
        compiler_params=pltpu.CompilerParams(dimension_semantics=("parallel",)),
    )(x_cl, w1, w2,
      b1.reshape(C, 1).astype(jnp.float32),
      b2.reshape(C, 1).astype(jnp.float32))

    return jnp.transpose(out.reshape(C, N, H, W), (1, 0, 2, 3)).astype(x_nchw.dtype)


def _reference_forward(x_nchw, params):
    """Pure-JAX f32 reference (lax conv, NCHW/OIHW) for correctness checking."""
    C = x_nchw.shape[1]
    dn = ("NCHW", "OIHW", "NCHW")
    s1, b1 = fold_bn(*params["bn1"])
    s2, b2 = fold_bn(*params["bn2"])
    o = jax.lax.conv_general_dilated(x_nchw, params["w1"], (1, 1), "SAME",
                                     dimension_numbers=dn)
    o = jnp.maximum(o * s1.reshape(1, C, 1, 1) + b1.reshape(1, C, 1, 1), 0.0)
    o = jax.lax.conv_general_dilated(o, params["w2"], (1, 1), "SAME",
                                     dimension_numbers=dn)
    o = o * s2.reshape(1, C, 1, 1) + b2.reshape(1, C, 1, 1) + x_nchw
    return jnp.maximum(o, 0.0)


if __name__ == "__main__":
    # BasicBlock2(inplanes=8, planes=8, stride=1, downsample=None), eval-mode BN.
    N, C, H, W = 8, 8, 16, 16
    key = jax.random.PRNGKey(0)
    ks = jax.random.split(key, 11)

    x = jax.random.normal(ks[0], (N, C, H, W), jnp.float32)          # PyTorch NCHW

    w1 = jax.random.normal(ks[1], (C, C, 3, 3), jnp.float32) * 0.1   # OIHW (PyTorch layout)
    w2 = jax.random.normal(ks[2], (C, C, 3, 3), jnp.float32) * 0.1

    bn1 = (jax.random.uniform(ks[3], (C,), minval=0.5, maxval=1.5),  # gamma
           jax.random.normal(ks[4], (C,)) * 0.1,                     # beta
           jax.random.normal(ks[5], (C,)) * 0.1,                     # running_mean
           jax.random.uniform(ks[6], (C,), minval=0.5, maxval=1.5))  # running_var
    bn2 = (jax.random.uniform(ks[7], (C,), minval=0.5, maxval=1.5),
           jax.random.normal(ks[8], (C,)) * 0.1,
           jax.random.normal(ks[9], (C,)) * 0.1,
           jax.random.uniform(ks[10], (C,), minval=0.5, maxval=1.5))

    params = {"w1": w1, "w2": w2, "bn1": bn1, "bn2": bn2}

    out = jax.block_until_ready(basic_block2_forward(x, params))
    ref = jax.block_until_ready(_reference_forward(x, params))

    assert out.shape == (N, C, H, W) and out.dtype == jnp.float32
    err = float(jnp.max(jnp.abs(out - ref)))
    assert jnp.allclose(out, ref, atol=2e-3, rtol=2e-3), f"max abs err = {err}"

    print("KERNEL_OK")
</pallas_src>

<mosaic_0001>
module attributes {stable_mosaic.version = 11 : i64} {
  func.func @_basic_block2_kernel(%arg0: i32, %arg1: memref<8x1024xf32, #tpu.memory_space<vmem>>, %arg2: memref<8x72xf32, #tpu.memory_space<vmem>>, %arg3: memref<8x72xf32, #tpu.memory_space<vmem>>, %arg4: memref<8x1xf32, #tpu.memory_space<vmem>>, %arg5: memref<8x1xf32, #tpu.memory_space<vmem>>, %arg6: memref<8x1024xf32, #tpu.memory_space<vmem>>, %arg7: memref<72x1024xf32, #tpu.memory_space<vmem>>) attributes {dimension_semantics = [#tpu.dimension_semantics<parallel>], iteration_bounds = array<i64: 2>, scalar_prefetch = 0 : i64, scratch_operands = 1 : i64, tpu.core_type = #tpu.core_type<tc>, window_params = [{transform_indices = @transform_0, window_bounds = array<i64: 8, 1024>}, {pipeline_mode = #tpu.pipeline_mode<synchronous>, transform_indices = @transform_1, window_bounds = array<i64: 8, 72>}, {pipeline_mode = #tpu.pipeline_mode<synchronous>, transform_indices = @transform_2, window_bounds = array<i64: 8, 72>}, {pipeline_mode = #tpu.pipeline_mode<synchronous>, transform_indices = @transform_3, window_bounds = array<i64: 8, 1>}, {pipeline_mode = #tpu.pipeline_mode<synchronous>, transform_indices = @transform_4, window_bounds = array<i64: 8, 1>}, {transform_indices = @transform_5, window_bounds = array<i64: 8, 1024>}]} {
    %c0 = arith.constant 0 : index
    %c0_0 = arith.constant 0 : index
    %0 = vector.load %arg1[%c0, %c0_0] : memref<8x1024xf32, #tpu.memory_space<vmem>>, vector<8x1024xf32>
    %1 = tpu.iota {dimensions = array<i32: 1>} : vector<1x1024xi32>
    %c256_i32 = arith.constant 256 : i32
    %c0_i32 = arith.constant 0 : i32
    %2 = arith.cmpi eq, %c256_i32, %c0_i32 : i32
    %c1_i32 = arith.constant 1 : i32
    %3 = arith.select %2, %c1_i32, %c256_i32 : i32
    %4 = vector.broadcast %3 : i32 to vector<1x1024xi32>
    %5 = arith.remsi %1, %4 : vector<1x1024xi32>
    %c0_i32_1 = arith.constant 0 : i32
    %6 = vector.broadcast %c0_i32_1 : i32 to vector<1x1024xi32>
    %7 = arith.cmpi ne, %5, %6 : vector<1x1024xi32>
    %c0_i32_2 = arith.constant 0 : i32
    %8 = vector.broadcast %c0_i32_2 : i32 to vector<1x1024xi32>
    %9 = arith.cmpi slt, %5, %8 : vector<1x1024xi32>
    %c0_i32_3 = arith.constant 0 : i32
    %10 = arith.cmpi slt, %3, %c0_i32_3 : i32
    %11 = vector.broadcast %10 : i1 to vector<1x1024xi1>
    %12 = vector.broadcast %11 : vector<1x1024xi1> to vector<1x1024xi1>
    %13 = arith.xori %9, %12 : vector<1x1024xi1>
    %14 = arith.andi %13, %7 : vector<1x1024xi1>
    %15 = vector.broadcast %3 : i32 to vector<1x1024xi32>
    %16 = arith.addi %5, %15 : vector<1x1024xi32>
    %17 = arith.select %14, %16, %5 : vector<1x1024xi1>, vector<1x1024xi32>
    %c16_i32 = arith.constant 16 : i32
    %c0_i32_4 = arith.constant 0 : i32
    %18 = arith.cmpi eq, %c16_i32, %c0_i32_4 : i32
    %c1_i32_5 = arith.constant 1 : i32
    %19 = arith.select %18, %c1_i32_5, %c16_i32 : i32
    %20 = vector.broadcast %19 : i32 to vector<1x1024xi32>
    %21 = arith.remsi %1, %20 : vector<1x1024xi32>
    %c0_i32_6 = arith.constant 0 : i32
    %22 = vector.broadcast %c0_i32_6 : i32 to vector<1x1024xi32>
    %23 = arith.cmpi ne, %21, %22 : vector<1x1024xi32>
    %c0_i32_7 = arith.constant 0 : i32
    %24 = vector.broadcast %c0_i32_7 : i32 to vector<1x1024xi32>
    %25 = arith.cmpi slt, %21, %24 : vector<1x1024xi32>
    %c0_i32_8 = arith.constant 0 : i32
    %26 = arith.cmpi slt, %19, %c0_i32_8 : i32
    %27 = vector.broadcast %26 : i1 to vector<1x1024xi1>
    %28 = vector.broadcast %27 : vector<1x1024xi1> to vector<1x1024xi1>
    %29 = arith.xori %25, %28 : vector<1x1024xi1>
    %30 = arith.andi %29, %23 : vector<1x1024xi1>
    %31 = vector.broadcast %19 : i32 to vector<1x1024xi32>
    %32 = arith.addi %21, %31 : vector<1x1024xi32>
    %33 = arith.select %30, %32, %21 : vector<1x1024xi1>, vector<1x1024xi32>
    %c16_i32_9 = arith.constant 16 : i32
    %34 = vector.broadcast %c16_i32_9 : i32 to vector<1x1024xi32>
    %35 = arith.cmpi sge, %17, %34 : vector<1x1024xi32>
    %c240_i32 = arith.constant 240 : i32
    %36 = vector.broadcast %c240_i32 : i32 to vector<1x1024xi32>
    %37 = arith.cmpi slt, %17, %36 : vector<1x1024xi32>
    %c0_i32_10 = arith.constant 0 : i32
    %38 = vector.broadcast %c0_i32_10 : i32 to vector<1x1024xi32>
    %39 = arith.cmpi ne, %33, %38 : vector<1x1024xi32>
    %c15_i32 = arith.constant 15 : i32
    %40 = vector.broadcast %c15_i32 : i32 to vector<1x1024xi32>
    %41 = arith.cmpi ne, %33, %40 : vector<1x1024xi32>
    %42 = arith.andi %35, %39 : vector<1x1024xi1>
    %43 = arith.extui %42 : vector<1x1024xi1> to vector<1x1024xi32>
    %44 = arith.sitofp %43 : vector<1x1024xi32> to vector<1x1024xf32>
    %45 = arith.extui %35 : vector<1x1024xi1> to vector<1x1024xi32>
    %46 = arith.sitofp %45 : vector<1x1024xi32> to vector<1x1024xf32>
    %47 = arith.andi %35, %41 : vector<1x1024xi1>
    %48 = arith.extui %47 : vector<1x1024xi1> to vector<1x1024xi32>
    %49 = arith.sitofp %48 : vector<1x1024xi32> to vector<1x1024xf32>
    %50 = arith.extui %39 : vector<1x1024xi1> to vector<1x1024xi32>
    %51 = arith.sitofp %50 : vector<1x1024xi32> to vector<1x1024xf32>
    %52 = arith.extui %41 : vector<1x1024xi1> to vector<1x1024xi32>
    %53 = arith.sitofp %52 : vector<1x1024xi32> to vector<1x1024xf32>
    %54 = arith.andi %37, %39 : vector<1x1024xi1>
    %55 = arith.extui %54 : vector<1x1024xi1> to vector<1x1024xi32>
    %56 = arith.sitofp %55 : vector<1x1024xi32> to vector<1x1024xf32>
    %57 = arith.extui %37 : vector<1x1024xi1> to vector<1x1024xi32>
    %58 = arith.sitofp %57 : vector<1x1024xi32> to vector<1x1024xf32>
    %59 = arith.andi %37, %41 : vector<1x1024xi1>
    %60 = arith.extui %59 : vector<1x1024xi1> to vector<1x1024xi32>
    %61 = arith.sitofp %60 : vector<1x1024xi32> to vector<1x1024xf32>
    %c17_i32 = arith.constant 17 : i32
    %62 = tpu.dynamic_rotate %0 by %c17_i32 dim 1 : vector<8x1024xf32>, i32 -> vector<8x1024xf32>
    %63 = vector.broadcast %44 : vector<1x1024xf32> to vector<8x1024xf32>
    %64 = arith.mulf %62, %63 : vector<8x1024xf32>
    %c0_11 = arith.constant 0 : index
    %c0_12 = arith.constant 0 : index
    %65 = vector.load %arg7[%c0_11, %c0_12] : memref<72x1024xf32, #tpu.memory_space<vmem>>, vector<8x1024xf32>
    tpu.vector_store %arg7[%c0_11, %c0_12], %64 {strides = array<i32>} : memref<72x1024xf32, #tpu.memory_space<vmem>>, vector<8x1024xf32>,
    %c16_i32_13 = arith.constant 16 : i32
    %66 = tpu.dynamic_rotate %0 by %c16_i32_13 dim 1 : vector<8x1024xf32>, i32 -> vector<8x1024xf32>
    %67 = vector.broadcast %46 : vector<1x1024xf32> to vector<8x1024xf32>
    %68 = arith.mulf %66, %67 : vector<8x1024xf32>
    %c8 = arith.constant 8 : index
    %c0_14 = arith.constant 0 : index
    %69 = vector.load %arg7[%c8, %c0_14] : memref<72x1024xf32, #tpu.memory_space<vmem>>, vector<8x1024xf32>
    tpu.vector_store %arg7[%c8, %c0_14], %68 {strides = array<i32>} : memref<72x1024xf32, #tpu.memory_space<vmem>>, vector<8x1024xf32>,
    %c15_i32_15 = arith.constant 15 : i32
    %70 = tpu.dynamic_rotate %0 by %c15_i32_15 dim 1 : vector<8x1024xf32>, i32 -> vector<8x1024xf32>
    %71 = vector.broadcast %49 : vector<1x1024xf32> to vector<8x1024xf32>
    %72 = arith.mulf %70, %71 : vector<8x1024xf32>
    %c16 = arith.constant 16 : index
    %c0_16 = arith.constant 0 : index
    %73 = vector.load %arg7[%c16, %c0_16] : memref<72x1024xf32, #tpu.memory_space<vmem>>, vector<8x1024xf32>
    tpu.vector_store %arg7[%c16, %c0_16], %72 {strides = array<i32>} : memref<72x1024xf32, #tpu.memory_space<vmem>>, vector<8x1024xf32>,
    %c1_i32_17 = arith.constant 1 : i32
    %74 = tpu.dynamic_rotate %0 by %c1_i32_17 dim 1 : vector<8x1024xf32>, i32 -> vector<8x1024xf32>
    %75 = vector.broadcast %51 : vector<1x1024xf32> to vector<8x1024xf32>
    %76 = arith.mulf %74, %75 : vector<8x1024xf32>
    %c24 = arith.constant 24 : index
    %c0_18 = arith.constant 0 : index
    %77 = vector.load %arg7[%c24, %c0_18] : memref<72x1024xf32, #tpu.memory_space<vmem>>, vector<8x1024xf32>
    tpu.vector_store %arg7[%c24, %c0_18], %76 {strides = array<i32>} : memref<72x1024xf32, #tpu.memory_space<vmem>>, vector<8x1024xf32>,
    %c32 = arith.constant 32 : index
    %c0_19 = arith.constant 0 : index
    %78 = vector.load %arg7[%c32, %c0_19] : memref<72x1024xf32, #tpu.memory_space<vmem>>, vector<8x1024xf32>
    tpu.vector_store %arg7[%c32, %c0_19], %0 {strides = array<i32>} : memref<72x1024xf32, #tpu.memory_space<vmem>>, vector<8x1024xf32>,
    %c1023_i32 = arith.constant 1023 : i32
    %79 = tpu.dynamic_rotate %0 by %c1023_i32 dim 1 : vector<8x1024xf32>, i32 -> vector<8x1024xf32>
    %80 = vector.broadcast %53 : vector<1x1024xf32> to vector<8x1024xf32>
    %81 = arith.mulf %79, %80 : vector<8x1024xf32>
    %c40 = arith.constant 40 : index
    %c0_20 = arith.constant 0 : index
    %82 = vector.load %arg7[%c40, %c0_20] : memref<72x1024xf32, #tpu.memory_space<vmem>>, vector<8x1024xf32>
    tpu.vector_store %arg7[%c40, %c0_20], %81 {strides = array<i32>} : memref<72x1024xf32, #tpu.memory_space<vmem>>, vector<8x1024xf32>,
    %c1009_i32 = arith.constant 1009 : i32
    %83 = tpu.dynamic_rotate %0 by %c1009_i32 dim 1 : vector<8x1024xf32>, i32 -> vector<8x1024xf32>
    %84 = vector.broadcast %56 : vector<1x1024xf32> to vector<8x1024xf32>
    %85 = arith.mulf %83, %84 : vector<8x1024xf32>
    %c48 = arith.constant 48 : index
    %c0_21 = arith.constant 0 : index
    %86 = vector.load %arg7[%c48, %c0_21] : memref<72x1024xf32, #tpu.memory_space<vmem>>, vector<8x1024xf32>
    tpu.vector_store %arg7[%c48, %c0_21], %85 {strides = array<i32>} : memref<72x1024xf32, #tpu.memory_space<vmem>>, vector<8x1024xf32>,
    %c1008_i32 = arith.constant 1008 : i32
    %87 = tpu.dynamic_rotate %0 by %c1008_i32 dim 1 : vector<8x1024xf32>, i32 -> vector<8x1024xf32>
    %88 = vector.broadcast %58 : vector<1x1024xf32> to vector<8x1024xf32>
    %89 = arith.mulf %87, %88 : vector<8x1024xf32>
    %c56 = arith.constant 56 : index
    %c0_22 = arith.constant 0 : index
    %90 = vector.load %arg7[%c56, %c0_22] : memref<72x1024xf32, #tpu.memory_space<vmem>>, vector<8x1024xf32>
    tpu.vector_store %arg7[%c56, %c0_22], %89 {strides = array<i32>} : memref<72x1024xf32, #tpu.memory_space<vmem>>, vector<8x1024xf32>,
    %c1007_i32 = arith.constant 1007 : i32
    %91 = tpu.dynamic_rotate %0 by %c1007_i32 dim 1 : vector<8x1024xf32>, i32 -> vector<8x1024xf32>
    %92 = vector.broadcast %61 : vector<1x1024xf32> to vector<8x1024xf32>
    %93 = arith.mulf %91, %92 : vector<8x1024xf32>
    %c64 = arith.constant 64 : index
    %c0_23 = arith.constant 0 : index
    %94 = vector.load %arg7[%c64, %c0_23] : memref<72x1024xf32, #tpu.memory_space<vmem>>, vector<8x1024xf32>
    tpu.vector_store %arg7[%c64, %c0_23], %93 {strides = array<i32>} : memref<72x1024xf32, #tpu.memory_space<vmem>>, vector<8x1024xf32>,
    %c0_24 = arith.constant 0 : index
    %c0_25 = arith.constant 0 : index
    %95 = vector.load %arg2[%c0_24, %c0_25] : memref<8x72xf32, #tpu.memory_space<vmem>>, vector<8x72xf32>
    %c0_26 = arith.constant 0 : index
    %c0_27 = arith.constant 0 : index
    %96 = vector.load %arg7[%c0_26, %c0_27] : memref<72x1024xf32, #tpu.memory_space<vmem>>, vector<72x1024xf32>
    %cst = arith.constant dense<0.000000e+00> : vector<8x1024xf32>
    %97 = tpu.matmul %95, %96, %cst {dimension_numbers = #tpu.dot_dimension_numbers<[1], [0], [0], [1], [0, 0, 1, 1], [], []>, precision = #tpu.contract_precision<fp32>} : vector<8x72xf32>, vector<72x1024xf32>, vector<8x1024xf32> -> vector<8x1024xf32>
    %c0_28 = arith.constant 0 : index
    %c0_29 = arith.constant 0 : index
    %98 = vector.load %arg4[%c0_28, %c0_29] : memref<8x1xf32, #tpu.memory_space<vmem>>, vector<8x1xf32>
    %99 = vector.broadcast %98 : vector<8x1xf32> to vector<8x1024xf32>
    %100 = arith.addf %97, %99 : vector<8x1024xf32>
    %cst_30 = arith.constant 0.000000e+00 : f32
    %101 = vector.broadcast %cst_30 : f32 to vector<8x1024xf32>
    %102 = arith.maximumf %100, %101 : vector<8x1024xf32>
    %c17_i32_31 = arith.constant 17 : i32
    %103 = tpu.dynamic_rotate %102 by %c17_i32_31 dim 1 : vector<8x1024xf32>, i32 -> vector<8x1024xf32>
    %104 = vector.broadcast %44 : vector<1x1024xf32> to vector<8x1024xf32>
    %105 = arith.mulf %103, %104 : vector<8x1024xf32>
    %c0_32 = arith.constant 0 : index
    %c0_33 = arith.constant 0 : index
    %106 = vector.load %arg7[%c0_32, %c0_33] : memref<72x1024xf32, #tpu.memory_space<vmem>>, vector<8x1024xf32>
    tpu.vector_store %arg7[%c0_32, %c0_33], %105 {strides = array<i32>} : memref<72x1024xf32, #tpu.memory_space<vmem>>, vector<8x1024xf32>,
    %c16_i32_34 = arith.constant 16 : i32
    %107 = tpu.dynamic_rotate %102 by %c16_i32_34 dim 1 : vector<8x1024xf32>, i32 -> vector<8x1024xf32>
    %108 = vector.broadcast %46 : vector<1x1024xf32> to vector<8x1024xf32>
    %109 = arith.mulf %107, %108 : vector<8x1024xf32>
    %c8_35 = arith.constant 8 : index
    %c0_36 = arith.constant 0 : index
    %110 = vector.load %arg7[%c8_35, %c0_36] : memref<72x1024xf32, #tpu.memory_space<vmem>>, vector<8x1024xf32>
    tpu.vector_store %arg7[%c8_35, %c0_36], %109 {strides = array<i32>} : memref<72x1024xf32, #tpu.memory_space<vmem>>, vector<8x1024xf32>,
    %c15_i32_37 = arith.constant 15 : i32
    %111 = tpu.dynamic_rotate %102 by %c15_i32_37 dim 1 : vector<8x1024xf32>, i32 -> vector<8x1024xf32>
    %112 = vector.broadcast %49 : vector<1x1024xf32> to vector<8x1024xf32>
    %113 = arith.mulf %111, %112 : vector<8x1024xf32>
    %c16_38 = arith.constant 16 : index
    %c0_39 = arith.constant 0 : index
    %114 = vector.load %arg7[%c16_38, %c0_39] : memref<72x1024xf32, #tpu.memory_space<vmem>>, vector<8x1024xf32>
    tpu.vector_store %arg7[%c16_38, %c0_39], %113 {strides = array<i32>} : memref<72x1024xf32, #tpu.memory_space<vmem>>, vector<8x1024xf32>,
    %c1_i32_40 = arith.constant 1 : i32
    %115 = tpu.dynamic_rotate %102 by %c1_i32_40 dim 1 : vector<8x1024xf32>, i32 -> vector<8x1024xf32>
    %116 = vector.broadcast %51 : vector<1x1024xf32> to vector<8x1024xf32>
    %117 = arith.mulf %115, %116 : vector<8x1024xf32>
    %c24_41 = arith.constant 24 : index
    %c0_42 = arith.constant 0 : index
    %118 = vector.load %arg7[%c24_41, %c0_42] : memref<72x1024xf32, #tpu.memory_space<vmem>>, vector<8x1024xf32>
    tpu.vector_store %arg7[%c24_41, %c0_42], %117 {strides = array<i32>} : memref<72x1024xf32, #tpu.memory_space<vmem>>, vector<8x1024xf32>,
    %c32_43 = arith.constant 32 : index
    %c0_44 = arith.constant 0 : index
    %119 = vector.load %arg7[%c32_43, %c0_44] : memref<72x1024xf32, #tpu.memory_space<vmem>>, vector<8x1024xf32>
    tpu.vector_store %arg7[%c32_43, %c0_44], %102 {strides = array<i32>} : memref<72x1024xf32, #tpu.memory_space<vmem>>, vector<8x1024xf32>,
    %c1023_i32_45 = arith.constant 1023 : i32
    %120 = tpu.dynamic_rotate %102 by %c1023_i32_45 dim 1 : vector<8x1024xf32>, i32 -> vector<8x1024xf32>
    %121 = vector.broadcast %53 : vector<1x1024xf32> to vector<8x1024xf32>
    %122 = arith.mulf %120, %121 : vector<8x1024xf32>
    %c40_46 = arith.constant 40 : index
    %c0_47 = arith.constant 0 : index
    %123 = vector.load %arg7[%c40_46, %c0_47] : memref<72x1024xf32, #tpu.memory_space<vmem>>, vector<8x1024xf32>
    tpu.vector_store %arg7[%c40_46, %c0_47], %122 {strides = array<i32>} : memref<72x1024xf32, #tpu.memory_space<vmem>>, vector<8x1024xf32>,
    %c1009_i32_48 = arith.constant 1009 : i32
    %124 = tpu.dynamic_rotate %102 by %c1009_i32_48 dim 1 : vector<8x1024xf32>, i32 -> vector<8x1024xf32>
    %125 = vector.broadcast %56 : vector<1x1024xf32> to vector<8x1024xf32>
    %126 = arith.mulf %124, %125 : vector<8x1024xf32>
    %c48_49 = arith.constant 48 : index
    %c0_50 = arith.constant 0 : index
    %127 = vector.load %arg7[%c48_49, %c0_50] : memref<72x1024xf32, #tpu.memory_space<vmem>>, vector<8x1024xf32>
    tpu.vector_store %arg7[%c48_49, %c0_50], %126 {strides = array<i32>} : memref<72x1024xf32, #tpu.memory_space<vmem>>, vector<8x1024xf32>,
    %c1008_i32_51 = arith.constant 1008 : i32
    %128 = tpu.dynamic_rotate %102 by %c1008_i32_51 dim 1 : vector<8x1024xf32>, i32 -> vector<8x1024xf32>
    %129 = vector.broadcast %58 : vector<1x1024xf32> to vector<8x1024xf32>
    %130 = arith.mulf %128, %129 : vector<8x1024xf32>
    %c56_52 = arith.constant 56 : index
    %c0_53 = arith.constant 0 : index
    %131 = vector.load %arg7[%c56_52, %c0_53] : memref<72x1024xf32, #tpu.memory_space<vmem>>, vector<8x1024xf32>
    tpu.vector_store %arg7[%c56_52, %c0_53], %130 {strides = array<i32>} : memref<72x1024xf32, #tpu.memory_space<vmem>>, vector<8x1024xf32>,
    %c1007_i32_54 = arith.constant 1007 : i32
    %132 = tpu.dynamic_rotate %102 by %c1007_i32_54 dim 1 : vector<8x1024xf32>, i32 -> vector<8x1024xf32>
    %133 = vector.broadcast %61 : vector<1x1024xf32> to vector<8x1024xf32>
    %134 = arith.mulf %132, %133 : vector<8x1024xf32>
    %c64_55 = arith.constant 64 : index
    %c0_56 = arith.constant 0 : index
    %135 = vector.load %arg7[%c64_55, %c0_56] : memref<72x1024xf32, #tpu.memory_space<vmem>>, vector<8x1024xf32>
    tpu.vector_store %arg7[%c64_55, %c0_56], %134 {strides = array<i32>} : memref<72x1024xf32, #tpu.memory_space<vmem>>, vector<8x1024xf32>,
    %c0_57 = arith.constant 0 : index
    %c0_58 = arith.constant 0 : index
    %136 = vector.load %arg3[%c0_57, %c0_58] : memref<8x72xf32, #tpu.memory_space<vmem>>, vector<8x72xf32>
    %c0_59 = arith.constant 0 : index
    %c0_60 = arith.constant 0 : index
    %137 = vector.load %arg7[%c0_59, %c0_60] : memref<72x1024xf32, #tpu.memory_space<vmem>>, vector<72x1024xf32>
    %cst_61 = arith.constant dense<0.000000e+00> : vector<8x1024xf32>
    %138 = tpu.matmul %136, %137, %cst_61 {dimension_numbers = #tpu.dot_dimension_numbers<[1], [0], [0], [1], [0, 0, 1, 1], [], []>, precision = #tpu.contract_precision<fp32>} : vector<8x72xf32>, vector<72x1024xf32>, vector<8x1024xf32> -> vector<8x1024xf32>
    %c0_62 = arith.constant 0 : index
    %c0_63 = arith.constant 0 : index
    %139 = vector.load %arg5[%c0_62, %c0_63] : memref<8x1xf32, #tpu.memory_space<vmem>>, vector<8x1xf32>
    %140 = vector.broadcast %139 : vector<8x1xf32> to vector<8x1024xf32>
    %141 = arith.addf %138, %140 : vector<8x1024xf32>
    %142 = arith.addf %141, %0 : vector<8x1024xf32>
    %cst_64 = arith.constant 0.000000e+00 : f32
    %143 = vector.broadcast %cst_64 : f32 to vector<8x1024xf32>
    %144 = arith.maximumf %142, %143 : vector<8x1024xf32>
    %c0_65 = arith.constant 0 : index
    %c0_66 = arith.constant 0 : index
    %145 = vector.load %arg6[%c0_65, %c0_66] : memref<8x1024xf32, #tpu.memory_space<vmem>>, vector<8x1024xf32>
    tpu.vector_store %arg6[%c0_65, %c0_66], %144 {strides = array<i32>} : memref<8x1024xf32, #tpu.memory_space<vmem>>, vector<8x1024xf32>,
    return
  }
  func.func @transform_0(%arg0: i32) -> (i32, i32) {
    %c0_i32 = arith.constant 0 : i32
    %c0_i32_0 = arith.constant 0 : i32
    return %c0_i32, %arg0 : i32, i32
  }
  func.func @transform_1(%arg0: i32) -> (i32, i32) {
    %c0_i32 = arith.constant 0 : i32
    %c0_i32_0 = arith.constant 0 : i32
    %c0_i32_1 = arith.constant 0 : i32
    return %c0_i32, %c0_i32_0 : i32, i32
  }
  func.func @transform_2(%arg0: i32) -> (i32, i32) {
    %c0_i32 = arith.constant 0 : i32
    %c0_i32_0 = arith.constant 0 : i32
    %c0_i32_1 = arith.constant 0 : i32
    return %c0_i32, %c0_i32_0 : i32, i32
  }
  func.func @transform_3(%arg0: i32) -> (i32, i32) {
    %c0_i32 = arith.constant 0 : i32
    %c0_i32_0 = arith.constant 0 : i32
    %c0_i32_1 = arith.constant 0 : i32
    return %c0_i32, %c0_i32_0 : i32, i32
  }
  func.func @transform_4(%arg0: i32) -> (i32, i32) {
    %c0_i32 = arith.constant 0 : i32
    %c0_i32_0 = arith.constant 0 : i32
    %c0_i32_1 = arith.constant 0 : i32
    return %c0_i32, %c0_i32_0 : i32, i32
  }
  func.func @transform_5(%arg0: i32) -> (i32, i32) {
    %c0_i32 = arith.constant 0 : i32
    %c0_i32_0 = arith.constant 0 : i32
    return %c0_i32, %arg0 : i32, i32
  }
}

</mosaic_0001>

<llo_original>
// kernel: tpu_custom_call.1
$region0: #{tpu_custom_call.1}
  #allocation0 [shape = 'u32[]', space=smem, size = 0x4, offset = 0x4, fixed_abs, tag = 'smem constant byte address 0x4 - core index']
  #allocation1 [shape = 'u32[72,128]{1,0:T(1,128)}', space=vmem, size = 0x9000, scoped, tag = 'internal scratch']
  #allocation2 [shape = 'f32[72,1024]{1,0:T(8,128)}', space=vmem, size = 0x48000, scoped, tag = 'scratch operand']
  %s0 = inlined_call_operand.hbm [shape: f32[8,2048], index: 0, kind: input, shape index: {}]
  %s1 = inlined_call_operand.vmem [shape: f32[8,72], index: 1, kind: input, shape index: {}]
  %s2 = inlined_call_operand.vmem [shape: f32[8,72], index: 2, kind: input, shape index: {}]
  %s3 = inlined_call_operand.vmem [shape: f32[8,1], index: 3, kind: input, shape index: {}]
  %s4 = inlined_call_operand.vmem [shape: f32[8,1], index: 4, kind: input, shape index: {}]
  %s5 = inlined_call_operand.hbm [shape: f32[8,2048], index: 5, kind: output, shape index: {}]
  %s6 = sld [smem:[#allocation0]]
  $region57: #{tpu_custom_call.1} parent=0
    _
  %s8 = ssub.s32 1, %s6
  %s9 = scalar_select 0, %s8, %s6
  $region1: #{tpu_custom_call.1} parent=0
    #allocation3 [shape = 'u8[65536]{0}', space=vmem, size = 0x10000, scoped, tag = 'input window, operand 0']
    #allocation4 [shape = 's32[2]{0}', space=sflag, size = 0x8, scoped, tag = 'scoped memory for tpu_custom_call.1']
    #allocation5 [shape = 's32[2]{0}', space=sflag, size = 0x8, scoped, tag = 'scoped memory for tpu_custom_call.1']
    #allocation6 [shape = 'u8[65536]{0}', space=vmem, size = 0x10000, scoped, tag = 'output window, operand 0']
    %10 = vsyncpa [#allocation4], 0
    %s11 = scalar_lea.sflag [#allocation4], 1
    %12 = vsyncpa %s11, 0
    %13 = vsyncpa [#allocation5], 0
    %s14 = scalar_lea.sflag [#allocation5], 1
    %15 = vsyncpa %s14, 0
    loop: start=0, step=1, limit=4
    $region2: #{tpu_custom_call.1} parent=1 // loop_pre_header
      _
    $region3: #{tpu_custom_call.1} parent=1 // loop_header
      %s17 = sphi 0, %s21
      %p18 = scmp.ge.s32.totalorder %s17, 4
      %s27 = sphi 0, %s29
      %s30 = sphi 0, %s27
      %s31 = sphi 0, %s30
      %s47 = sphi 0, %s31
      %s51 = sphi 0, %s51
      %s53 = sphi 0, %s51
      %s54 = sphi 0, %s53
      %s68 = sphi 0, %s54
      %s72 = sphi 0, %s72
      %s74 = sphi 0, %s72
      %s75 = sphi 0, %s74
      %s89 = sphi 0, %s75
      %s93 = sphi 0, %s93
      %s95 = sphi 0, %s93
      %s96 = sphi 0, %s95
      %s110 = sphi 0, %s96
      %s114 = sphi 0, %s114
      %s116 = sphi 0, %s114
      %s117 = sphi 0, %s116
      %s131 = sphi 0, %s117
      %s137 = sphi 0, %s139
      %s140 = sphi 0, %s137
      %s141 = sphi 0, %s140
      %s157 = sphi 0, %s141
    $region4: #{tpu_custom_call.1} parent=1 // loop_header_branch
      %20 = sbr.rel (%p18) target = $region8
    $region5: #{tpu_custom_call.1} parent=1 // loop_body
      %s22 = ssub.s32 %s17, 1
      %s23 = ssub.s32 %s17, 2
      %s24 = sadd.s32 %s17, 1
      %s25 = ssub.s32 %s17, %s24
      %p26 = scmp.eq.s32.totalorder %s25, 0
      %s28 = sadd.s32 %s27, 1
      %s29 = scalar_select %p26, %s27, %s28
      %p32 = pneg %p26
      %p33 = scmp.eq.s32.totalorder %s17, 1
      %p34 = por %p32, %p33
      %p35 = scmp.ne.s32.totalorder %s27, %s30
      %p36 = scmp.eq.s32.totalorder %s17, 0
      %p37 = por %p35, %p36
      %p38 = scmp.ne.s32.totalorder %s27, %s30
      %p39 = scmp.eq.s32.totalorder %s22, 1
      %p40 = por %p38, %p39
      %p41 = scmp.ne.s32.totalorder %s30, %s31
      %p42 = scmp.eq.s32.totalorder %s22, 0
      %p43 = por %p41, %p42
      %p44 = scmp.ne.s32.totalorder %s30, %s31
      %p45 = scmp.eq.s32.totalorder %s23, 1
      %p46 = por %p44, %p45
      %p48 = scmp.ne.s32.totalorder %s31, %s47
      %p49 = scmp.eq.s32.totalorder %s23, 0
      %p50 = por %p48, %p49
      %s52 = sadd.s32 %s51, 1
      %p55 = scmp.eq.s32.totalorder %s17, 1
      %p56 = scmp.ne.s32.totalorder %s51, %s53
      %p57 = scmp.eq.s32.totalorder %s17, 0
      %p58 = por %p56, %p57
      %p59 = scmp.ne.s32.totalorder %s51, %s53
      %p60 = scmp.eq.s32.totalorder %s22, 1
      %p61 = por %p59, %p60
      %p62 = scmp.ne.s32.totalorder %s53, %s54
      %p63 = scmp.eq.s32.totalorder %s22, 0
      %p64 = por %p62, %p63
      %p65 = scmp.ne.s32.totalorder %s53, %s54
      %p66 = scmp.eq.s32.totalorder %s23, 1
      %p67 = por %p65, %p66
      %p69 = scmp.ne.s32.totalorder %s54, %s68
      %p70 = scmp.eq.s32.totalorder %s23, 0
      %p71 = por %p69, %p70
      %s73 = sadd.s32 %s72, 1
      %p76 = scmp.eq.s32.totalorder %s17, 1
      %p77 = scmp.ne.s32.totalorder %s72, %s74
      %p78 = scmp.eq.s32.totalorder %s17, 0
      %p79 = por %p77, %p78
      %p80 = scmp.ne.s32.totalorder %s72, %s74
      %p81 = scmp.eq.s32.totalorder %s22, 1
      %p82 = por %p80, %p81
      %p83 = scmp.ne.s32.totalorder %s74, %s75
      %p84 = scmp.eq.s32.totalorder %s22, 0
      %p85 = por %p83, %p84
      %p86 = scmp.ne.s32.totalorder %s74, %s75
      %p87 = scmp.eq.s32.totalorder %s23, 1
      %p88 = por %p86, %p87
      %p90 = scmp.ne.s32.totalorder %s75, %s89
      %p91 = scmp.eq.s32.totalorder %s23, 0
      %p92 = por %p90, %p91
      %s94 = sadd.s32 %s93, 1
      %p97 = scmp.eq.s32.totalorder %s17, 1
      %p98 = scmp.ne.s32.totalorder %s93, %s95
      %p99 = scmp.eq.s32.totalorder %s17, 0
      %p100 = por %p98, %p99
      %p101 = scmp.ne.s32.totalorder %s93, %s95
      %p102 = scmp.eq.s32.totalorder %s22, 1
      %p103 = por %p101, %p102
      %p104 = scmp.ne.s32.totalorder %s95, %s96
      %p105 = scmp.eq.s32.totalorder %s22, 0
      %p106 = por %p104, %p105
      %p107 = scmp.ne.s32.totalorder %s95, %s96
      %p108 = scmp.eq.s32.totalorder %s23, 1
      %p109 = por %p107, %p108
      %p111 = scmp.ne.s32.totalorder %s96, %s110
      %p112 = scmp.eq.s32.totalorder %s23, 0
      %p113 = por %p111, %p112
      %s115 = sadd.s32 %s114, 1
      %p118 = scmp.eq.s32.totalorder %s17, 1
      %p119 = scmp.ne.s32.totalorder %s114, %s116
      %p120 = scmp.eq.s32.totalorder %s17, 0
      %p121 = por %p119, %p120
      %p122 = scmp.ne.s32.totalorder %s114, %s116
      %p123 = scmp.eq.s32.totalorder %s22, 1
      %p124 = por %p122, %p123
      %p125 = scmp.ne.s32.totalorder %s116, %s117
      %p126 = scmp.eq.s32.totalorder %s22, 0
      %p127 = por %p125, %p126
      %p128 = scmp.ne.s32.totalorder %s116, %s117
      %p129 = scmp.eq.s32.totalorder %s23, 1
      %p130 = por %p128, %p129
      %p132 = scmp.ne.s32.totalorder %s117, %s131
      %p133 = scmp.eq.s32.totalorder %s23, 0
      %p134 = por %p132, %p133
      %s135 = ssub.s32 %s17, %s24
      %p136 = scmp.eq.s32.totalorder %s135, 0
      %s138 = sadd.s32 %s137, 1
      %s139 = scalar_select %p136, %s137, %s138
      %p142 = pneg %p136
      %p143 = scmp.eq.s32.totalorder %s17, 1
      %p144 = por %p142, %p143
      %p145 = scmp.ne.s32.totalorder %s137, %s140
      %p146 = scmp.eq.s32.totalorder %s17, 0
      %p147 = por %p145, %p146
      %p148 = scmp.ne.s32.totalorder %s137, %s140
      %p149 = scmp.eq.s32.totalorder %s22, 1
      %p150 = por %p148, %p149
      %p151 = scmp.ne.s32.totalorder %s140, %s141
      %p152 = scmp.eq.s32.totalorder %s22, 0
      %p153 = por %p151, %p152
      %p154 = scmp.ne.s32.totalorder %s140, %s141
      %p155 = scmp.eq.s32.totalorder %s23, 1
      %p156 = por %p154, %p155
      %p158 = scmp.ne.s32.totalorder %s141, %s157
      %p159 = scmp.eq.s32.totalorder %s23, 0
      %p160 = por %p158, %p159
      %p161 = scmp.le.s32.totalorder 1, %s17
      %p162 = scmp.lt.s32.totalorder %s17, 3
      %p163 = pnand %p161, %p162
      %p164 = pneg %p163
      // Predicated region
      $region9: #{tpu_custom_call.1} parent=5 // pred_check
        _
      $region10: #{tpu_custom_call.1} parent=5 // pred_check_branch
        %166 = sbr.rel (%p163) target = $region12
      $region11: #{tpu_custom_call.1} parent=5 // pred_region
        %s167 = ssub.s32 %s17, 1
        // Predicated region
        $region13: #{tpu_custom_call.1} parent=11 // pred_check
          %p168 = pneg %p64
        $region14: #{tpu_custom_call.1} parent=11 // pred_check_branch
          %170 = sbr.rel (%p168) target = $region16
        $region15: #{tpu_custom_call.1} parent=11 // pred_region
          _
        $region16: #{tpu_custom_call.1} parent=11 // pred_fallthru
          _
        // Predicated region
        $region17: #{tpu_custom_call.1} parent=11 // pred_check
          %p171 = pneg %p85
        $region18: #{tpu_custom_call.1} parent=11 // pred_check_branch
          %173 = sbr.rel (%p171) target = $region20
        $region19: #{tpu_custom_call.1} parent=11 // pred_region
          _
        $region20: #{tpu_custom_call.1} parent=11 // pred_fallthru
          _
        // Predicated region
        $region21: #{tpu_custom_call.1} parent=11 // pred_check
          %p174 = pneg %p106
        $region22: #{tpu_custom_call.1} parent=11 // pred_check_branch
          %176 = sbr.rel (%p174) target = $region24
        $region23: #{tpu_custom_call.1} parent=11 // pred_region
          _
        $region24: #{tpu_custom_call.1} parent=11 // pred_fallthru
          _
        // Predicated region
        $region25: #{tpu_custom_call.1} parent=11 // pred_check
          %p177 = pneg %p127
        $region26: #{tpu_custom_call.1} parent=11 // pred_check_branch
          %179 = sbr.rel (%p177) target = $region28
        $region27: #{tpu_custom_call.1} parent=11 // pred_region
          _
        $region28: #{tpu_custom_call.1} parent=11 // pred_fallthru
          _
      $region12: #{tpu_custom_call.1} parent=5 // pred_fallthru
        _
      %p180 = scmp.lt.s32.totalorder %s17, 2
      // Predicated region
      $region29: #{tpu_custom_call.1} parent=5 // pred_check
        %p181 = pneg %p180
      $region30: #{tpu_custom_call.1} parent=5 // pred_check_branch
        %183 = sbr.rel (%p181) target = $region32
      $region31: #{tpu_custom_call.1} parent=5 // pred_region
        // Predicated region
        $region33: #{tpu_custom_call.1} parent=31 // pred_check
          %p184 = pneg %p37
        $region34: #{tpu_custom_call.1} parent=31 // pred_check_branch
          %186 = sbr.rel (%p184) target = $region36
        $region35: #{tpu_custom_call.1} parent=31 // pred_region
          %s187 = sand.u32 %s27, 1
          %s188 = scalar_lea.sflag [#allocation4], %s187
          %s189 = sand.u32 %s27, 1
          %s190 = smul.addr %s189, 64
          %s191 = scalar_lea.vmem [#allocation3], %s190
          %s192 = smul.u32 8, %s17
          %194 = vsyncadd %s188, 0
          %s195 = smul.addr %s192, 8
          %s196 = scalar_lea.hbm %s0, %s195
          %s198 = sshll.u32 %s196, 4
          %s199 = int_to_ptr.hbm [resolvable:$true] %s198
          %s200 = sshll.u32 %s191, 4
          %s201 = int_to_ptr.vmem [resolvable:$true] %s200
          %203 = dma.hbm_to_vmem [thread:$0]  %s199, 1024, %s201, %s188
        $region36: #{tpu_custom_call.1} parent=31 // pred_fallthru
          _
      $region32: #{tpu_custom_call.1} parent=5 // pred_fallthru
        _
      %p204 = scmp.le.s32.totalorder 1, %s17
      %p205 = scmp.lt.s32.totalorder %s17, 3
      %p206 = pnand %p204, %p205
      %p207 = pneg %p206
      // Predicated region
      $region37: #{tpu_custom_call.1} parent=5 // pred_check
        _
      $region38: #{tpu_custom_call.1} parent=5 // pred_check_branch
        %209 = sbr.rel (%p206) target = $region40
      $region39: #{tpu_custom_call.1} parent=5 // pred_region
        %s210 = ssub.s32 %s17, 1
        %s211 = sand.u32 %s30, 1
        %s212 = scalar_lea.sflag [#allocation4], %s211
        %s213 = sand.u32 %s30, 1
        %s214 = smul.addr %s213, 64
        %s215 = scalar_lea.vmem [#allocation3], %s214
        // Predicated region
        $region41: #{tpu_custom_call.1} parent=39 // pred_check
          %p216 = pneg %p43
        $region42: #{tpu_custom_call.1} parent=39 // pred_check_branch
          %218 = sbr.rel (%p216) target = $region44
        $region43: #{tpu_custom_call.1} parent=39 // pred_region
          %220 = dma.done %s212, 1024
        $region44: #{tpu_custom_call.1} parent=39 // pred_fallthru
          _
        %s221 = sand.u32 %s30, 1
        %s222 = scalar_lea.sflag [#allocation4], %s221
        %s223 = sand.u32 %s30, 1
        %s224 = smul.addr %s223, 64
        %s225 = scalar_lea.vmem [#allocation3], %s224
        %p226 = pneg %p43
        %p227 = pneg %p40
        %p228 = pneg %p64
        %p229 = pneg %p61
        %p230 = pneg %p85
        %p231 = pneg %p82
        %p232 = pneg %p106
        %p233 = pneg %p103
        %p234 = pneg %p127
        %p235 = pneg %p124
        %p236 = pneg %p153
        %p237 = pneg %p150
        %s238 = sand.u32 %s140, 1
        %s239 = scalar_lea.sflag [#allocation5], %s238
        %s240 = sand.u32 %s140, 1
        %s241 = smul.addr %s240, 64
        %s242 = scalar_lea.vmem [#allocation6], %s241
        %s243 = smul.u32 8, %s22
        %s244 = smul.u32 8, %s22
        %v245 = vld [vmem:[%s215] sm:$0xff]
        %v246 = vld [vmem:[%s215 + $0x8] sm:$0xff]
        %v247 = vld [vmem:[%s215 + $0x10] sm:$0xff]
        %v248 = vld [vmem:[%s215 + $0x18] sm:$0xff]
        %v249 = vld [vmem:[%s215 + $0x20] sm:$0xff]
        %v250 = vld [vmem:[%s215 + $0x28] sm:$0xff]
        %v251 = vld [vmem:[%s215 + $0x30] sm:$0xff]
        %v252 = vld [vmem:[%s215 + $0x38] sm:$0xff]
        %v253 = vlaneseq
        %v254 = vand.u32 %v253, 127
        %v255 = vadd.s32 %v254, 128
        %v256 = vadd.s32 %v254, 256
        %v257 = vadd.s32 %v254, 384
        %v258 = vadd.s32 %v254, 512
        %v259 = vadd.s32 %v254, 640
        %v260 = vadd.s32 %v254, 768
        %v261 = vadd.s32 %v254, 896
        %vm262 = vcmp.lt.s32.totalorder %v254, 0
        %v263 = vsub.s32 0, %v254
        %v264 = vsel %vm262, %v263, %v254
        %v265 = vshrl.u32 %v264, 8
        %v266 = vand.u32 %v264, 255
        %v267 = vsub.s32 0, %v266
        %v268 = vsel %vm262, %v267, %v266
        %vm269 = vcmp.lt.s32.totalorder %v255, 0
        %v270 = vsub.s32 0, %v255
        %v271 = vsel %vm269, %v270, %v255
        %v272 = vshrl.u32 %v271, 8
        %v273 = vand.u32 %v271, 255
        %v274 = vsub.s32 0, %v273
        %v275 = vsel %vm269, %v274, %v273
        %vm276 = vcmp.lt.s32.totalorder %v256, 0
        %v277 = vsub.s32 0, %v256
        %v278 = vsel %vm276, %v277, %v256
        %v279 = vshrl.u32 %v278, 8
        %v280 = vand.u32 %v278, 255
        %v281 = vsub.s32 0, %v280
        %v282 = vsel %vm276, %v281, %v280
        %vm283 = vcmp.lt.s32.totalorder %v257, 0
        %v284 = vsub.s32 0, %v257
        %v285 = vsel %vm283, %v284, %v257
        %v286 = vshrl.u32 %v285, 8
        %v287 = vand.u32 %v285, 255
        %v288 = vsub.s32 0, %v287
        %v289 = vsel %vm283, %v288, %v287
        %vm290 = vcmp.lt.s32.totalorder %v258, 0
        %v291 = vsub.s32 0, %v258
        %v292 = vsel %vm290, %v291, %v258
        %v293 = vshrl.u32 %v292, 8
        %v294 = vand.u32 %v292, 255
        %v295 = vsub.s32 0, %v294
        %v296 = vsel %vm290, %v295, %v294
        %vm297 = vcmp.lt.s32.totalorder %v259, 0
        %v298 = vsub.s32 0, %v259
        %v299 = vsel %vm297, %v298, %v259
        %v300 = vshrl.u32 %v299, 8
        %v301 = vand.u32 %v299, 255
        %v302 = vsub.s32 0, %v301
        %v303 = vsel %vm297, %v302, %v301
        %vm304 = vcmp.lt.s32.totalorder %v260, 0
        %v305 = vsub.s32 0, %v260
        %v306 = vsel %vm304, %v305, %v260
        %v307 = vshrl.u32 %v306, 8
        %v308 = vand.u32 %v306, 255
        %v309 = vsub.s32 0, %v308
        %v310 = vsel %vm304, %v309, %v308
        %vm311 = vcmp.lt.s32.totalorder %v261, 0
        %v312 = vsub.s32 0, %v261
        %v313 = vsel %vm311, %v312, %v261
        %v314 = vshrl.u32 %v313, 8
        %v315 = vand.u32 %v313, 255
        %v316 = vsub.s32 0, %v315
        %v317 = vsel %vm311, %v316, %v315
        %vm318 = vcmp.ne.s32.totalorder %v268, 0
        %vm319 = vcmp.ne.s32.totalorder %v275, 0
        %vm320 = vcmp.ne.s32.totalorder %v282, 0
        %vm321 = vcmp.ne.s32.totalorder %v289, 0
        %vm322 = vcmp.ne.s32.totalorder %v296, 0
        %vm323 = vcmp.ne.s32.totalorder %v303, 0
        %vm324 = vcmp.ne.s32.totalorder %v310, 0
        %vm325 = vcmp.ne.s32.totalorder %v317, 0
        %vm326 = vcmp.lt.s32.totalorder %v268, 0
        %vm327 = vcmp.lt.s32.totalorder %v275, 0
        %vm328 = vcmp.lt.s32.totalorder %v282, 0
        %vm329 = vcmp.lt.s32.totalorder %v289, 0
        %vm330 = vcmp.lt.s32.totalorder %v296, 0
        %vm331 = vcmp.lt.s32.totalorder %v303, 0
        %vm332 = vcmp.lt.s32.totalorder %v310, 0
        %vm333 = vcmp.lt.s32.totalorder %v317, 0
        %vm334 = vmand %vm326, %vm318
        %vm335 = vmand %vm327, %vm319
        %vm336 = vmand %vm328, %vm320
        %vm337 = vmand %vm329, %vm321
        %vm338 = vmand %vm330, %vm322
        %vm339 = vmand %vm331, %vm323
        %vm340 = vmand %vm332, %vm324
        %vm341 = vmand %vm333, %vm325
        %v342 = vadd.s32 %v268, 256
        %v343 = vadd.s32 %v275, 256
        %v344 = vadd.s32 %v282, 256
        %v345 = vadd.s32 %v289, 256
        %v346 = vadd.s32 %v296, 256
        %v347 = vadd.s32 %v303, 256
        %v348 = vadd.s32 %v310, 256
        %v349 = vadd.s32 %v317, 256
        %v350 = vsel %vm334, %v342, %v268
        %v351 = vsel %vm335, %v343, %v275
        %v352 = vsel %vm336, %v344, %v282
        %v353 = vsel %vm337, %v345, %v289
        %v354 = vsel %vm338, %v346, %v296
        %v355 = vsel %vm339, %v347, %v303
        %v356 = vsel %vm340, %v348, %v310
        %v357 = vsel %vm341, %v349, %v317
        %vm358 = vcmp.lt.s32.totalorder %v254, 0
        %v359 = vsub.s32 0, %v254
        %v360 = vsel %vm358, %v359, %v254
        %v361 = vshrl.u32 %v360, 4
        %v362 = vand.u32 %v360, 15
        %v363 = vsub.s32 0, %v362
        %v364 = vsel %vm358, %v363, %v362
        %vm365 = vcmp.lt.s32.totalorder %v255, 0
        %v366 = vsub.s32 0, %v255
        %v367 = vsel %vm365, %v366, %v255
        %v368 = vshrl.u32 %v367, 4
        %v369 = vand.u32 %v367, 15
        %v370 = vsub.s32 0, %v369
        %v371 = vsel %vm365, %v370, %v369
        %vm372 = vcmp.lt.s32.totalorder %v256, 0
        %v373 = vsub.s32 0, %v256
        %v374 = vsel %vm372, %v373, %v256
        %v375 = vshrl.u32 %v374, 4
        %v376 = vand.u32 %v374, 15
        %v377 = vsub.s32 0, %v376
        %v378 = vsel %vm372, %v377, %v376
        %vm379 = vcmp.lt.s32.totalorder %v257, 0
        %v380 = vsub.s32 0, %v257
        %v381 = vsel %vm379, %v380, %v257
        %v382 = vshrl.u32 %v381, 4
        %v383 = vand.u32 %v381, 15
        %v384 = vsub.s32 0, %v383
        %v385 = vsel %vm379, %v384, %v383
        %vm386 = vcmp.lt.s32.totalorder %v258, 0
        %v387 = vsub.s32 0, %v258
        %v388 = vsel %vm386, %v387, %v258
        %v389 = vshrl.u32 %v388, 4
        %v390 = vand.u32 %v388, 15
        %v391 = vsub.s32 0, %v390
        %v392 = vsel %vm386, %v391, %v390
        %vm393 = vcmp.lt.s32.totalorder %v259, 0
        %v394 = vsub.s32 0, %v259
        %v395 = vsel %vm393, %v394, %v259
        %v396 = vshrl.u32 %v395, 4
        %v397 = vand.u32 %v395, 15
        %v398 = vsub.s32 0, %v397
        %v399 = vsel %vm393, %v398, %v397
        %vm400 = vcmp.lt.s32.totalorder %v260, 0
        %v401 = vsub.s32 0, %v260
        %v402 = vsel %vm400, %v401, %v260
        %v403 = vshrl.u32 %v402, 4
        %v404 = vand.u32 %v402, 15
        %v405 = vsub.s32 0, %v404
        %v406 = vsel %vm400, %v405, %v404
        %vm407 = vcmp.lt.s32.totalorder %v261, 0
        %v408 = vsub.s32 0, %v261
        %v409 = vsel %vm407, %v408, %v261
        %v410 = vshrl.u32 %v409, 4
        %v411 = vand.u32 %v409, 15
        %v412 = vsub.s32 0, %v411
        %v413 = vsel %vm407, %v412, %v411
        %vm414 = vcmp.ne.s32.totalorder %v364, 0
        %vm415 = vcmp.ne.s32.totalorder %v371, 0
        %vm416 = vcmp.ne.s32.totalorder %v378, 0
        %vm417 = vcmp.ne.s32.totalorder %v385, 0
        %vm418 = vcmp.ne.s32.totalorder %v392, 0
        %vm419 = vcmp.ne.s32.totalorder %v399, 0
        %vm420 = vcmp.ne.s32.totalorder %v406, 0
        %vm421 = vcmp.ne.s32.totalorder %v413, 0
        %vm422 = vcmp.lt.s32.totalorder %v364, 0
        %vm423 = vcmp.lt.s32.totalorder %v371, 0
        %vm424 = vcmp.lt.s32.totalorder %v378, 0
        %vm425 = vcmp.lt.s32.totalorder %v385, 0
        %vm426 = vcmp.lt.s32.totalorder %v392, 0
        %vm427 = vcmp.lt.s32.totalorder %v399, 0
        %vm428 = vcmp.lt.s32.totalorder %v406, 0
        %vm429 = vcmp.lt.s32.totalorder %v413, 0
        %vm430 = vmand %vm422, %vm414
        %vm431 = vmand %vm423, %vm415
        %vm432 = vmand %vm424, %vm416
        %vm433 = vmand %vm425, %vm417
        %vm434 = vmand %vm426, %vm418
        %vm435 = vmand %vm427, %vm419
        %vm436 = vmand %vm428, %vm420
        %vm437 = vmand %vm429, %vm421
        %v438 = vadd.s32 %v364, 16
        %v439 = vadd.s32 %v371, 16
        %v440 = vadd.s32 %v378, 16
        %v441 = vadd.s32 %v385, 16
        %v442 = vadd.s32 %v392, 16
        %v443 = vadd.s32 %v399, 16
        %v444 = vadd.s32 %v406, 16
        %v445 = vadd.s32 %v413, 16
        %v446 = vsel %vm430, %v438, %v364
        %v447 = vsel %vm431, %v439, %v371
        %v448 = vsel %vm432, %v440, %v378
        %v449 = vsel %vm433, %v441, %v385
        %v450 = vsel %vm434, %v442, %v392
        %v451 = vsel %vm435, %v443, %v399
        %v452 = vsel %vm436, %v444, %v406
        %v453 = vsel %vm437, %v445, %v413
        %vm454 = vcmp.ge.s32.totalorder %v350, 16
        %vm455 = vcmp.ge.s32.totalorder %v351, 16
        %vm456 = vcmp.ge.s32.totalorder %v352, 16
        %vm457 = vcmp.ge.s32.totalorder %v353, 16
        %vm458 = vcmp.ge.s32.totalorder %v354, 16
        %vm459 = vcmp.ge.s32.totalorder %v355, 16
        %vm460 = vcmp.ge.s32.totalorder %v356, 16
        %vm461 = vcmp.ge.s32.totalorder %v357, 16
        %vm462 = vcmp.lt.s32.totalorder %v350, 240
        %vm463 = vcmp.lt.s32.totalorder %v351, 240
        %vm464 = vcmp.lt.s32.totalorder %v352, 240
        %vm465 = vcmp.lt.s32.totalorder %v353, 240
        %vm466 = vcmp.lt.s32.totalorder %v354, 240
        %vm467 = vcmp.lt.s32.totalorder %v355, 240
        %vm468 = vcmp.lt.s32.totalorder %v356, 240
        %vm469 = vcmp.lt.s32.totalorder %v357, 240
        %vm470 = vcmp.ne.s32.totalorder %v446, 0
        %vm471 = vcmp.ne.s32.totalorder %v447, 0
        %vm472 = vcmp.ne.s32.totalorder %v448, 0
        %vm473 = vcmp.ne.s32.totalorder %v449, 0
        %vm474 = vcmp.ne.s32.totalorder %v450, 0
        %vm475 = vcmp.ne.s32.totalorder %v451, 0
        %vm476 = vcmp.ne.s32.totalorder %v452, 0
        %vm477 = vcmp.ne.s32.totalorder %v453, 0
        %vm478 = vcmp.ne.s32.totalorder %v446, 15
        %vm479 = vcmp.ne.s32.totalorder %v447, 15
        %vm480 = vcmp.ne.s32.totalorder %v448, 15
        %vm481 = vcmp.ne.s32.totalorder %v449, 15
        %vm482 = vcmp.ne.s32.totalorder %v450, 15
        %vm483 = vcmp.ne.s32.totalorder %v451, 15
        %vm484 = vcmp.ne.s32.totalorder %v452, 15
        %vm485 = vcmp.ne.s32.totalorder %v453, 15
        %vm486 = vmand %vm454, %vm470
        %vm487 = vmand %vm455, %vm471
        %vm488 = vmand %vm456, %vm472
        %vm489 = vmand %vm457, %vm473
        %vm490 = vmand %vm458, %vm474
        %vm491 = vmand %vm459, %vm475
        %vm492 = vmand %vm460, %vm476
        %vm493 = vmand %vm461, %vm477
        %v494 = vsel %vm486, 1, 0
        %v495 = vsel %vm487, 1, 0
        %v496 = vsel %vm488, 1, 0
        %v497 = vsel %vm489, 1, 0
        %v498 = vsel %vm490, 1, 0
        %v499 = vsel %vm491, 1, 0
        %v500 = vsel %vm492, 1, 0
        %v501 = vsel %vm493, 1, 0
        %v502 = vcvt.s32.f32 %v494
        %v503 = vcvt.s32.f32 %v495
        %v504 = vcvt.s32.f32 %v496
        %v505 = vcvt.s32.f32 %v497
        %v506 = vcvt.s32.f32 %v498
        %v507 = vcvt.s32.f32 %v499
        %v508 = vcvt.s32.f32 %v500
        %v509 = vcvt.s32.f32 %v501
        %v510 = vsel %vm454, 1, 0
        %v511 = vsel %vm455, 1, 0
        %v512 = vsel %vm456, 1, 0
        %v513 = vsel %vm457, 1, 0
        %v514 = vsel %vm458, 1, 0
        %v515 = vsel %vm459, 1, 0
        %v516 = vsel %vm460, 1, 0
        %v517 = vsel %vm461, 1, 0
        %v518 = vcvt.s32.f32 %v510
        %v519 = vcvt.s32.f32 %v511
        %v520 = vcvt.s32.f32 %v512
        %v521 = vcvt.s32.f32 %v513
        %v522 = vcvt.s32.f32 %v514
        %v523 = vcvt.s32.f32 %v515
        %v524 = vcvt.s32.f32 %v516
        %v525 = vcvt.s32.f32 %v517
        %vm526 = vmand %vm454, %vm478
        %vm527 = vmand %vm455, %vm479
        %vm528 = vmand %vm456, %vm480
        %vm529 = vmand %vm457, %vm481
        %vm530 = vmand %vm458, %vm482
        %vm531 = vmand %vm459, %vm483
        %vm532 = vmand %vm460, %vm484
        %vm533 = vmand %vm461, %vm485
        %v534 = vsel %vm526, 1, 0
        %v535 = vsel %vm527, 1, 0
        %v536 = vsel %vm528, 1, 0
        %v537 = vsel %vm529, 1, 0
        %v538 = vsel %vm530, 1, 0
        %v539 = vsel %vm531, 1, 0
        %v540 = vsel %vm532, 1, 0
        %v541 = vsel %vm533, 1, 0
        %v542 = vcvt.s32.f32 %v534
        %v543 = vcvt.s32.f32 %v535
        %v544 = vcvt.s32.f32 %v536
        %v545 = vcvt.s32.f32 %v537
        %v546 = vcvt.s32.f32 %v538
        %v547 = vcvt.s32.f32 %v539
        %v548 = vcvt.s32.f32 %v540
        %v549 = vcvt.s32.f32 %v541
        %v550 = vsel %vm470, 1, 0
        %v551 = vsel %vm471, 1, 0
        %v552 = vsel %vm472, 1, 0
        %v553 = vsel %vm473, 1, 0
        %v554 = vsel %vm474, 1, 0
        %v555 = vsel %vm475, 1, 0
        %v556 = vsel %vm476, 1, 0
        %v557 = vsel %vm477, 1, 0
        %v558 = vcvt.s32.f32 %v550
        %v559 = vcvt.s32.f32 %v551
        %v560 = vcvt.s32.f32 %v552
        %v561 = vcvt.s32.f32 %v553
        %v562 = vcvt.s32.f32 %v554
        %v563 = vcvt.s32.f32 %v555
        %v564 = vcvt.s32.f32 %v556
        %v565 = vcvt.s32.f32 %v557
        %v566 = vsel %vm478, 1, 0
        %v567 = vsel %vm479, 1, 0
        %v568 = vsel %vm480, 1, 0
        %v569 = vsel %vm481, 1, 0
        %v570 = vsel %vm482, 1, 0
        %v571 = vsel %vm483, 1, 0
        %v572 = vsel %vm484, 1, 0
        %v573 = vsel %vm485, 1, 0
        %v574 = vcvt.s32.f32 %v566
        %v575 = vcvt.s32.f32 %v567
        %v576 = vcvt.s32.f32 %v568
        %v577 = vcvt.s32.f32 %v569
        %v578 = vcvt.s32.f32 %v570
        %v579 = vcvt.s32.f32 %v571
        %v580 = vcvt.s32.f32 %v572
        %v581 = vcvt.s32.f32 %v573
        %vm582 = vmand %vm462, %vm470
        %vm583 = vmand %vm463, %vm471
        %vm584 = vmand %vm464, %vm472
        %vm585 = vmand %vm465, %vm473
        %vm586 = vmand %vm466, %vm474
        %vm587 = vmand %vm467, %vm475
        %vm588 = vmand %vm468, %vm476
        %vm589 = vmand %vm469, %vm477
        %v590 = vsel %vm582, 1, 0
        %v591 = vsel %vm583, 1, 0
        %v592 = vsel %vm584, 1, 0
        %v593 = vsel %vm585, 1, 0
        %v594 = vsel %vm586, 1, 0
        %v595 = vsel %vm587, 1, 0
        %v596 = vsel %vm588, 1, 0
        %v597 = vsel %vm589, 1, 0
        %v598 = vcvt.s32.f32 %v590
        %v599 = vcvt.s32.f32 %v591
        %v600 = vcvt.s32.f32 %v592
        %v601 = vcvt.s32.f32 %v593
        %v602 = vcvt.s32.f32 %v594
        %v603 = vcvt.s32.f32 %v595
        %v604 = vcvt.s32.f32 %v596
        %v605 = vcvt.s32.f32 %v597
        %v606 = vsel %vm462, 1, 0
        %v607 = vsel %vm463, 1, 0
        %v608 = vsel %vm464, 1, 0
        %v609 = vsel %vm465, 1, 0
        %v610 = vsel %vm466, 1, 0
        %v611 = vsel %vm467, 1, 0
        %v612 = vsel %vm468, 1, 0
        %v613 = vsel %vm469, 1, 0
        %v614 = vcvt.s32.f32 %v606
        %v615 = vcvt.s32.f32 %v607
        %v616 = vcvt.s32.f32 %v608
        %v617 = vcvt.s32.f32 %v609
        %v618 = vcvt.s32.f32 %v610
        %v619 = vcvt.s32.f32 %v611
        %v620 = vcvt.s32.f32 %v612
        %v621 = vcvt.s32.f32 %v613
        %vm622 = vmand %vm462, %vm478
        %vm623 = vmand %vm463, %vm479
        %vm624 = vmand %vm464, %vm480
        %vm625 = vmand %vm465, %vm481
        %vm626 = vmand %vm466, %vm482
        %vm627 = vmand %vm467, %vm483
        %vm628 = vmand %vm468, %vm484
        %vm629 = vmand %vm469, %vm485
        %v630 = vsel %vm622, 1, 0
        %v631 = vsel %vm623, 1, 0
        %v632 = vsel %vm624, 1, 0
        %v633 = vsel %vm625, 1, 0
        %v634 = vsel %vm626, 1, 0
        %v635 = vsel %vm627, 1, 0
        %v636 = vsel %vm628, 1, 0
        %v637 = vsel %vm629, 1, 0
        %v638 = vcvt.s32.f32 %v630
        %v639 = vcvt.s32.f32 %v631
        %v640 = vcvt.s32.f32 %v632
        %v641 = vcvt.s32.f32 %v633
        %v642 = vcvt.s32.f32 %v634
        %v643 = vcvt.s32.f32 %v635
        %v644 = vcvt.s32.f32 %v636
        %v645 = vcvt.s32.f32 %v637
        %646 = vrot.lane.b32.xlu0 %v245, 17
        %v647 = vpop.permute.xlu0 %646
        %648 = vrot.lane.b32.xlu0 %v246, 17
        %v649 = vpop.permute.xlu0 %648
        %650 = vrot.lane.b32.xlu0 %v247, 17
        %v651 = vpop.permute.xlu0 %650
        %652 = vrot.lane.b32.xlu0 %v248, 17
        %v653 = vpop.permute.xlu0 %652
        %654 = vrot.lane.b32.xlu0 %v249, 17
        %v655 = vpop.permute.xlu0 %654
        %656 = vrot.lane.b32.xlu0 %v250, 17
        %v657 = vpop.permute.xlu0 %656
        %658 = vrot.lane.b32.xlu0 %v251, 17
        %v659 = vpop.permute.xlu0 %658
        %660 = vrot.lane.b32.xlu0 %v252, 17
        %v661 = vpop.permute.xlu0 %660
        %vm662 = vcmp.lt.s32.totalorder %v254, 17
        %v663 = vsel %vm662, %v659, %v661
        %v664 = vsel %vm662, %v657, %v659
        %v665 = vsel %vm662, %v655, %v657
        %v666 = vsel %vm662, %v653, %v655
        %v667 = vsel %vm662, %v651, %v653
        %v668 = vsel %vm662, %v649, %v651
        %v669 = vsel %vm662, %v647, %v649
        %v670 = vsel %vm662, %v661, %v647
        %v671 = vmul.f32 %v670, %v502
        %v672 = vmul.f32 %v669, %v503
        %v673 = vmul.f32 %v668, %v504
        %v674 = vmul.f32 %v667, %v505
        %v675 = vmul.f32 %v666, %v506
        %v676 = vmul.f32 %v665, %v507
        %v677 = vmul.f32 %v664, %v508
        %v678 = vmul.f32 %v663, %v509
        %679 = vst [vmem:[#allocation2] sm:$0xff] %v671
        %680 = vst [vmem:[#allocation2 + $0x8] sm:$0xff] %v672
        %681 = vst [vmem:[#allocation2 + $0x10] sm:$0xff] %v673
        %682 = vst [vmem:[#allocation2 + $0x18] sm:$0xff] %v674
        %683 = vst [vmem:[#allocation2 + $0x20] sm:$0xff] %v675
        %684 = vst [vmem:[#allocation2 + $0x28] sm:$0xff] %v676
        %685 = vst [vmem:[#allocation2 + $0x30] sm:$0xff] %v677
        %686 = vst [vmem:[#allocation2 + $0x38] sm:$0xff] %v678
        %687 = vrot.lane.b32.xlu0 %v245, 16
        %v688 = vpop.permute.xlu0 %687
        %689 = vrot.lane.b32.xlu0 %v246, 16
        %v690 = vpop.permute.xlu0 %689
        %691 = vrot.lane.b32.xlu0 %v247, 16
        %v692 = vpop.permute.xlu0 %691
        %693 = vrot.lane.b32.xlu0 %v248, 16
        %v694 = vpop.permute.xlu0 %693
        %695 = vrot.lane.b32.xlu0 %v249, 16
        %v696 = vpop.permute.xlu0 %695
        %697 = vrot.lane.b32.xlu0 %v250, 16
        %v698 = vpop.permute.xlu0 %697
        %699 = vrot.lane.b32.xlu0 %v251, 16
        %v700 = vpop.permute.xlu0 %699
        %701 = vrot.lane.b32.xlu0 %v252, 16
        %v702 = vpop.permute.xlu0 %701
        %vm703 = vcmp.lt.s32.totalorder %v254, 16
        %v704 = vsel %vm703, %v700, %v702
        %v705 = vsel %vm703, %v698, %v700
        %v706 = vsel %vm703, %v696, %v698
        %v707 = vsel %vm703, %v694, %v696
        %v708 = vsel %vm703, %v692, %v694
        %v709 = vsel %vm703, %v690, %v692
        %v710 = vsel %vm703, %v688, %v690
        %v711 = vsel %vm703, %v702, %v688
        %v712 = vmul.f32 %v711, %v518
        %v713 = vmul.f32 %v710, %v519
        %v714 = vmul.f32 %v709, %v520
        %v715 = vmul.f32 %v708, %v521
        %v716 = vmul.f32 %v707, %v522
        %v717 = vmul.f32 %v706, %v523
        %v718 = vmul.f32 %v705, %v524
        %v719 = vmul.f32 %v704, %v525
        %720 = vst [vmem:[#allocation2 + $0x40] sm:$0xff] %v712
        %721 = vst [vmem:[#allocation2 + $0x48] sm:$0xff] %v713
        %722 = vst [vmem:[#allocation2 + $0x50] sm:$0xff] %v714
        %723 = vst [vmem:[#allocation2 + $0x58] sm:$0xff] %v715
        %724 = vst [vmem:[#allocation2 + $0x60] sm:$0xff] %v716
        %725 = vst [vmem:[#allocation2 + $0x68] sm:$0xff] %v717
        %726 = vst [vmem:[#allocation2 + $0x70] sm:$0xff] %v718
        %727 = vst [vmem:[#allocation2 + $0x78] sm:$0xff] %v719
        %728 = vrot.lane.b32.xlu0 %v245, 15
        %v729 = vpop.permute.xlu0 %728
        %730 = vrot.lane.b32.xlu0 %v246, 15
        %v731 = vpop.permute.xlu0 %730
        %732 = vrot.lane.b32.xlu0 %v247, 15
        %v733 = vpop.permute.xlu0 %732
        %734 = vrot.lane.b32.xlu0 %v248, 15
        %v735 = vpop.permute.xlu0 %734
        %736 = vrot.lane.b32.xlu0 %v249, 15
        %v737 = vpop.permute.xlu0 %736
        %738 = vrot.lane.b32.xlu0 %v250, 15
        %v739 = vpop.permute.xlu0 %738
        %740 = vrot.lane.b32.xlu0 %v251, 15
        %v741 = vpop.permute.xlu0 %740
        %742 = vrot.lane.b32.xlu0 %v252, 15
        %v743 = vpop.permute.xlu0 %742
        %vm744 = vcmp.lt.s32.totalorder %v254, 15
        %v745 = vsel %vm744, %v741, %v743
        %v746 = vsel %vm744, %v739, %v741
        %v747 = vsel %vm744, %v737, %v739
        %v748 = vsel %vm744, %v735, %v737
        %v749 = vsel %vm744, %v733, %v735
        %v750 = vsel %vm744, %v731, %v733
        %v751 = vsel %vm744, %v729, %v731
        %v752 = vsel %vm744, %v743, %v729
        %v753 = vmul.f32 %v752, %v542
        %v754 = vmul.f32 %v751, %v543
        %v755 = vmul.f32 %v750, %v544
        %v756 = vmul.f32 %v749, %v545
        %v757 = vmul.f32 %v748, %v546
        %v758 = vmul.f32 %v747, %v547
        %v759 = vmul.f32 %v746, %v548
        %v760 = vmul.f32 %v745, %v549
        %761 = vst [vmem:[#allocation2 + $0x80] sm:$0xff] %v753
        %762 = vst [vmem:[#allocation2 + $0x88] sm:$0xff] %v754
        %763 = vst [vmem:[#allocation2 + $0x90] sm:$0xff] %v755
        %764 = vst [vmem:[#allocation2 + $0x98] sm:$0xff] %v756
        %765 = vst [vmem:[#allocation2 + $0xa0] sm:$0xff] %v757
        %766 = vst [vmem:[#allocation2 + $0xa8] sm:$0xff] %v758
        %767 = vst [vmem:[#allocation2 + $0xb0] sm:$0xff] %v759
        %768 = vst [vmem:[#allocation2 + $0xb8] sm:$0xff] %v760
        %769 = vrot.lane.b32.xlu0 %v245, 1
        %v770 = vpop.permute.xlu0 %769
        %771 = vrot.lane.b32.xlu0 %v246, 1
        %v772 = vpop.permute.xlu0 %771
        %773 = vrot.lane.b32.xlu0 %v247, 1
        %v774 = vpop.permute.xlu0 %773
        %775 = vrot.lane.b32.xlu0 %v248, 1
        %v776 = vpop.permute.xlu0 %775
        %777 = vrot.lane.b32.xlu0 %v249, 1
        %v778 = vpop.permute.xlu0 %777
        %779 = vrot.lane.b32.xlu0 %v250, 1
        %v780 = vpop.permute.xlu0 %779
        %781 = vrot.lane.b32.xlu0 %v251, 1
        %v782 = vpop.permute.xlu0 %781
        %783 = vrot.lane.b32.xlu0 %v252, 1
        %v784 = vpop.permute.xlu0 %783
        %vm785 = vcmp.lt.s32.totalorder %v254, 1
        %v786 = vsel %vm785, %v782, %v784
        %v787 = vsel %vm785, %v780, %v782
        %v788 = vsel %vm785, %v778, %v780
        %v789 = vsel %vm785, %v776, %v778
        %v790 = vsel %vm785, %v774, %v776
        %v791 = vsel %vm785, %v772, %v774
        %v792 = vsel %vm785, %v770, %v772
        %v793 = vsel %vm785, %v784, %v770
        %v794 = vmul.f32 %v793, %v558
        %v795 = vmul.f32 %v792, %v559
        %v796 = vmul.f32 %v791, %v560
        %v797 = vmul.f32 %v790, %v561
        %v798 = vmul.f32 %v789, %v562
        %v799 = vmul.f32 %v788, %v563
        %v800 = vmul.f32 %v787, %v564
        %v801 = vmul.f32 %v786, %v565
        %802 = vst [vmem:[#allocation2 + $0xc0] sm:$0xff] %v794
        %803 = vst [vmem:[#allocation2 + $0xc8] sm:$0xff] %v795
        %804 = vst [vmem:[#allocation2 + $0xd0] sm:$0xff] %v796
        %805 = vst [vmem:[#allocation2 + $0xd8] sm:$0xff] %v797
        %806 = vst [vmem:[#allocation2 + $0xe0] sm:$0xff] %v798
        %807 = vst [vmem:[#allocation2 + $0xe8] sm:$0xff] %v799
        %808 = vst [vmem:[#allocation2 + $0xf0] sm:$0xff] %v800
        %809 = vst [vmem:[#allocation2 + $0xf8] sm:$0xff] %v801
        %810 = vst [vmem:[#allocation2 + $0x100] sm:$0xff] %v245
        %811 = vst [vmem:[#allocation2 + $0x108] sm:$0xff] %v246
        %812 = vst [vmem:[#allocation2 + $0x110] sm:$0xff] %v247
        %813 = vst [vmem:[#allocation2 + $0x118] sm:$0xff] %v248
        %814 = vst [vmem:[#allocation2 + $0x120] sm:$0xff] %v249
        %815 = vst [vmem:[#allocation2 + $0x128] sm:$0xff] %v250
        %816 = vst [vmem:[#allocation2 + $0x130] sm:$0xff] %v251
        %817 = vst [vmem:[#allocation2 + $0x138] sm:$0xff] %v252
        %818 = vrot.lane.b32.xlu0 %v245, 127
        %v819 = vpop.permute.xlu0 %818
        %820 = vrot.lane.b32.xlu0 %v246, 127
        %v821 = vpop.permute.xlu0 %820
        %822 = vrot.lane.b32.xlu0 %v247, 127
        %v823 = vpop.permute.xlu0 %822
        %824 = vrot.lane.b32.xlu0 %v248, 127
        %v825 = vpop.permute.xlu0 %824
        %826 = vrot.lane.b32.xlu0 %v249, 127
        %v827 = vpop.permute.xlu0 %826
        %828 = vrot.lane.b32.xlu0 %v250, 127
        %v829 = vpop.permute.xlu0 %828
        %830 = vrot.lane.b32.xlu0 %v251, 127
        %v831 = vpop.permute.xlu0 %830
        %832 = vrot.lane.b32.xlu0 %v252, 127
        %v833 = vpop.permute.xlu0 %832
        %vm834 = vcmp.lt.s32.totalorder %v254, 127
        %v835 = vsel %vm834, %v831, %v833
        %v836 = vsel %vm834, %v829, %v831
        %v837 = vsel %vm834, %v827, %v829
        %v838 = vsel %vm834, %v825, %v827
        %v839 = vsel %vm834, %v823, %v825
        %v840 = vsel %vm834, %v821, %v823
        %v841 = vsel %vm834, %v819, %v821
        %v842 = vsel %vm834, %v833, %v819
        %v843 = vmul.f32 %v841, %v574
        %v844 = vmul.f32 %v840, %v575
        %v845 = vmul.f32 %v839, %v576
        %v846 = vmul.f32 %v838, %v577
        %v847 = vmul.f32 %v837, %v578
        %v848 = vmul.f32 %v836, %v579
        %v849 = vmul.f32 %v835, %v580
        %v850 = vmul.f32 %v842, %v581
        %851 = vst [vmem:[#allocation2 + $0x140] sm:$0xff] %v843
        %852 = vst [vmem:[#allocation2 + $0x148] sm:$0xff] %v844
        %853 = vst [vmem:[#allocation2 + $0x150] sm:$0xff] %v845
        %854 = vst [vmem:[#allocation2 + $0x158] sm:$0xff] %v846
        %855 = vst [vmem:[#allocation2 + $0x160] sm:$0xff] %v847
        %856 = vst [vmem:[#allocation2 + $0x168] sm:$0xff] %v848
        %857 = vst [vmem:[#allocation2 + $0x170] sm:$0xff] %v849
        %858 = vst [vmem:[#allocation2 + $0x178] sm:$0xff] %v850
        %859 = vrot.lane.b32.xlu0 %v245, 113
        %v860 = vpop.permute.xlu0 %859
        %861 = vrot.lane.b32.xlu0 %v246, 113
        %v862 = vpop.permute.xlu0 %861
        %863 = vrot.lane.b32.xlu0 %v247, 113
        %v864 = vpop.permute.xlu0 %863
        %865 = vrot.lane.b32.xlu0 %v248, 113
        %v866 = vpop.permute.xlu0 %865
        %867 = vrot.lane.b32.xlu0 %v249, 113
        %v868 = vpop.permute.xlu0 %867
        %869 = vrot.lane.b32.xlu0 %v250, 113
        %v870 = vpop.permute.xlu0 %869
        %871 = vrot.lane.b32.xlu0 %v251, 113
        %v872 = vpop.permute.xlu0 %871
        %873 = vrot.lane.b32.xlu0 %v252, 113
        %v874 = vpop.permute.xlu0 %873
        %vm875 = vcmp.lt.s32.totalorder %v254, 113
        %v876 = vsel %vm875, %v872, %v874
        %v877 = vsel %vm875, %v870, %v872
        %v878 = vsel %vm875, %v868, %v870
        %v879 = vsel %vm875, %v866, %v868
        %v880 = vsel %vm875, %v864, %v866
        %v881 = vsel %vm875, %v862, %v864
        %v882 = vsel %vm875, %v860, %v862
        %v883 = vsel %vm875, %v874, %v860
        %v884 = vmul.f32 %v882, %v598
        %v885 = vmul.f32 %v881, %v599
        %v886 = vmul.f32 %v880, %v600
        %v887 = vmul.f32 %v879, %v601
        %v888 = vmul.f32 %v878, %v602
        %v889 = vmul.f32 %v877, %v603
        %v890 = vmul.f32 %v876, %v604
        %v891 = vmul.f32 %v883, %v605
        %892 = vst [vmem:[#allocation2 + $0x180] sm:$0xff] %v884
        %893 = vst [vmem:[#allocation2 + $0x188] sm:$0xff] %v885
        %894 = vst [vmem:[#allocation2 + $0x190] sm:$0xff] %v886
        %895 = vst [vmem:[#allocation2 + $0x198] sm:$0xff] %v887
        %896 = vst [vmem:[#allocation2 + $0x1a0] sm:$0xff] %v888
        %897 = vst [vmem:[#allocation2 + $0x1a8] sm:$0xff] %v889
        %898 = vst [vmem:[#allocation2 + $0x1b0] sm:$0xff] %v890
        %899 = vst [vmem:[#allocation2 + $0x1b8] sm:$0xff] %v891
        %900 = vrot.lane.b32.xlu0 %v245, 112
        %v901 = vpop.permute.xlu0 %900
        %902 = vrot.lane.b32.xlu0 %v246, 112
        %v903 = vpop.permute.xlu0 %902
        %904 = vrot.lane.b32.xlu0 %v247, 112
        %v905 = vpop.permute.xlu0 %904
        %906 = vrot.lane.b32.xlu0 %v248, 112
        %v907 = vpop.permute.xlu0 %906
        %908 = vrot.lane.b32.xlu0 %v249, 112
        %v909 = vpop.permute.xlu0 %908
        %910 = vrot.lane.b32.xlu0 %v250, 112
        %v911 = vpop.permute.xlu0 %910
        %912 = vrot.lane.b32.xlu0 %v251, 112
        %v913 = vpop.permute.xlu0 %912
        %914 = vrot.lane.b32.xlu0 %v252, 112
        %v915 = vpop.permute.xlu0 %914
        %vm916 = vcmp.lt.s32.totalorder %v254, 112
        %v917 = vsel %vm916, %v913, %v915
        %v918 = vsel %vm916, %v911, %v913
        %v919 = vsel %vm916, %v909, %v911
        %v920 = vsel %vm916, %v907, %v909
        %v921 = vsel %vm916, %v905, %v907
        %v922 = vsel %vm916, %v903, %v905
        %v923 = vsel %vm916, %v901, %v903
        %v924 = vsel %vm916, %v915, %v901
        %v925 = vmul.f32 %v923, %v614
        %v926 = vmul.f32 %v922, %v615
        %v927 = vmul.f32 %v921, %v616
        %v928 = vmul.f32 %v920, %v617
        %v929 = vmul.f32 %v919, %v618
        %v930 = vmul.f32 %v918, %v619
        %v931 = vmul.f32 %v917, %v620
        %v932 = vmul.f32 %v924, %v621
        %933 = vst [vmem:[#allocation2 + $0x1c0] sm:$0xff] %v925
        %934 = vst [vmem:[#allocation2 + $0x1c8] sm:$0xff] %v926
        %935 = vst [vmem:[#allocation2 + $0x1d0] sm:$0xff] %v927
        %936 = vst [vmem:[#allocation2 + $0x1d8] sm:$0xff] %v928
        %937 = vst [vmem:[#allocation2 + $0x1e0] sm:$0xff] %v929
        %938 = vst [vmem:[#allocation2 + $0x1e8] sm:$0xff] %v930
        %939 = vst [vmem:[#allocation2 + $0x1f0] sm:$0xff] %v931
        %940 = vst [vmem:[#allocation2 + $0x1f8] sm:$0xff] %v932
        %941 = vrot.lane.b32.xlu0 %v245, 111
        %v942 = vpop.permute.xlu0 %941
        %943 = vrot.lane.b32.xlu0 %v246, 111
        %v944 = vpop.permute.xlu0 %943
        %945 = vrot.lane.b32.xlu0 %v247, 111
        %v946 = vpop.permute.xlu0 %945
        %947 = vrot.lane.b32.xlu0 %v248, 111
        %v948 = vpop.permute.xlu0 %947
        %949 = vrot.lane.b32.xlu0 %v249, 111
        %v950 = vpop.permute.xlu0 %949
        %951 = vrot.lane.b32.xlu0 %v250, 111
        %v952 = vpop.permute.xlu0 %951
        %953 = vrot.lane.b32.xlu0 %v251, 111
        %v954 = vpop.permute.xlu0 %953
        %955 = vrot.lane.b32.xlu0 %v252, 111
        %v956 = vpop.permute.xlu0 %955
        %vm957 = vcmp.lt.s32.totalorder %v254, 111
        %v958 = vsel %vm957, %v954, %v956
        %v959 = vsel %vm957, %v952, %v954
        %v960 = vsel %vm957, %v950, %v952
        %v961 = vsel %vm957, %v948, %v950
        %v962 = vsel %vm957, %v946, %v948
        %v963 = vsel %vm957, %v944, %v946
        %v964 = vsel %vm957, %v942, %v944
        %v965 = vsel %vm957, %v956, %v942
        %v966 = vmul.f32 %v964, %v638
        %v967 = vmul.f32 %v963, %v639
        %v968 = vmul.f32 %v962, %v640
        %v969 = vmul.f32 %v961, %v641
        %v970 = vmul.f32 %v960, %v642
        %v971 = vmul.f32 %v959, %v643
        %v972 = vmul.f32 %v958, %v644
        %v973 = vmul.f32 %v965, %v645
        %974 = vst [vmem:[#allocation2 + $0x200] sm:$0xff] %v966
        %975 = vst [vmem:[#allocation2 + $0x208] sm:$0xff] %v967
        %976 = vst [vmem:[#allocation2 + $0x210] sm:$0xff] %v968
        %977 = vst [vmem:[#allocation2 + $0x218] sm:$0xff] %v969
        %978 = vst [vmem:[#allocation2 + $0x220] sm:$0xff] %v970
        %979 = vst [vmem:[#allocation2 + $0x228] sm:$0xff] %v971
        %980 = vst [vmem:[#allocation2 + $0x230] sm:$0xff] %v972
        %981 = vst [vmem:[#allocation2 + $0x238] sm:$0xff] %v973
        %v982 = vld [vmem:[%s1] sm:$0xff]
        %v983 = vld [vmem:[#allocation2] sm:$0xff]
        %v984 = vld [vmem:[#allocation2 + $0x8] sm:$0xff]
        %v985 = vld [vmem:[#allocation2 + $0x10] sm:$0xff]
        %v986 = vld [vmem:[#allocation2 + $0x18] sm:$0xff]
        %v987 = vld [vmem:[#allocation2 + $0x20] sm:$0xff]
        %v988 = vld [vmem:[#allocation2 + $0x28] sm:$0xff]
        %v989 = vld [vmem:[#allocation2 + $0x30] sm:$0xff]
        %v990 = vld [vmem:[#allocation2 + $0x38] sm:$0xff]
        %v991 = vld [vmem:[#allocation2 + $0x40] sm:$0xff]
        %v992 = vld [vmem:[#allocation2 + $0x48] sm:$0xff]
        %v993 = vld [vmem:[#allocation2 + $0x50] sm:$0xff]
        %v994 = vld [vmem:[#allocation2 + $0x58] sm:$0xff]
        %v995 = vld [vmem:[#allocation2 + $0x60] sm:$0xff]
        %v996 = vld [vmem:[#allocation2 + $0x68] sm:$0xff]
        %v997 = vld [vmem:[#allocation2 + $0x70] sm:$0xff]
        %v998 = vld [vmem:[#allocation2 + $0x78] sm:$0xff]
        %v999 = vld [vmem:[#allocation2 + $0x80] sm:$0xff]
        %v1000 = vld [vmem:[#allocation2 + $0x88] sm:$0xff]
        %v1001 = vld [vmem:[#allocation2 + $0x90] sm:$0xff]
        %v1002 = vld [vmem:[#allocation2 + $0x98] sm:$0xff]
        %v1003 = vld [vmem:[#allocation2 + $0xa0] sm:$0xff]
        %v1004 = vld [vmem:[#allocation2 + $0xa8] sm:$0xff]
        %v1005 = vld [vmem:[#allocation2 + $0xb0] sm:$0xff]
        %v1006 = vld [vmem:[#allocation2 + $0xb8] sm:$0xff]
        %v1007 = vld [vmem:[#allocation2 + $0xc0] sm:$0xff]
        %v1008 = vld [vmem:[#allocation2 + $0xc8] sm:$0xff]
        %v1009 = vld [vmem:[#allocation2 + $0xd0] sm:$0xff]
        %v1010 = vld [vmem:[#allocation2 + $0xd8] sm:$0xff]
        %v1011 = vld [vmem:[#allocation2 + $0xe0] sm:$0xff]
        %v1012 = vld [vmem:[#allocation2 + $0xe8] sm:$0xff]
        %v1013 = vld [vmem:[#allocation2 + $0xf0] sm:$0xff]
        %v1014 = vld [vmem:[#allocation2 + $0xf8] sm:$0xff]
        %v1015 = vld [vmem:[#allocation2 + $0x100] sm:$0xff]
        %v1016 = vld [vmem:[#allocation2 + $0x108] sm:$0xff]
        %v1017 = vld [vmem:[#allocation2 + $0x110] sm:$0xff]
        %v1018 = vld [vmem:[#allocation2 + $0x118] sm:$0xff]
        %v1019 = vld [vmem:[#allocation2 + $0x120] sm:$0xff]
        %v1020 = vld [vmem:[#allocation2 + $0x128] sm:$0xff]
        %v1021 = vld [vmem:[#allocation2 + $0x130] sm:$0xff]
        %v1022 = vld [vmem:[#allocation2 + $0x138] sm:$0xff]
        %v1023 = vld [vmem:[#allocation2 + $0x140] sm:$0xff]
        %v1024 = vld [vmem:[#allocation2 + $0x148] sm:$0xff]
        %v1025 = vld [vmem:[#allocation2 + $0x150] sm:$0xff]
        %v1026 = vld [vmem:[#allocation2 + $0x158] sm:$0xff]
        %v1027 = vld [vmem:[#allocation2 + $0x160] sm:$0xff]
        %v1028 = vld [vmem:[#allocation2 + $0x168] sm:$0xff]
        %v1029 = vld [vmem:[#allocation2 + $0x170] sm:$0xff]
        %v1030 = vld [vmem:[#allocation2 + $0x178] sm:$0xff]
        %v1031 = vld [vmem:[#allocation2 + $0x180] sm:$0xff]
        %v1032 = vld [vmem:[#allocation2 + $0x188] sm:$0xff]
        %v1033 = vld [vmem:[#allocation2 + $0x190] sm:$0xff]
        %v1034 = vld [vmem:[#allocation2 + $0x198] sm:$0xff]
        %v1035 = vld [vmem:[#allocation2 + $0x1a0] sm:$0xff]
        %v1036 = vld [vmem:[#allocation2 + $0x1a8] sm:$0xff]
        %v1037 = vld [vmem:[#allocation2 + $0x1b0] sm:$0xff]
        %v1038 = vld [vmem:[#allocation2 + $0x1b8] sm:$0xff]
        %v1039 = vld [vmem:[#allocation2 + $0x1c0] sm:$0xff]
        %v1040 = vld [vmem:[#allocation2 + $0x1c8] sm:$0xff]
        %v1041 = vld [vmem:[#allocation2 + $0x1d0] sm:$0xff]
        %v1042 = vld [vmem:[#allocation2 + $0x1d8] sm:$0xff]
        %v1043 = vld [vmem:[#allocation2 + $0x1e0] sm:$0xff]
        %v1044 = vld [vmem:[#allocation2 + $0x1e8] sm:$0xff]
        %v1045 = vld [vmem:[#allocation2 + $0x1f0] sm:$0xff]
        %v1046 = vld [vmem:[#allocation2 + $0x1f8] sm:$0xff]
        %v1047 = vld [vmem:[#allocation2 + $0x200] sm:$0xff]
        %v1048 = vld [vmem:[#allocation2 + $0x208] sm:$0xff]
        %v1049 = vld [vmem:[#allocation2 + $0x210] sm:$0xff]
        %v1050 = vld [vmem:[#allocation2 + $0x218] sm:$0xff]
        %v1051 = vld [vmem:[#allocation2 + $0x220] sm:$0xff]
        %v1052 = vld [vmem:[#allocation2 + $0x228] sm:$0xff]
        %v1053 = vld [vmem:[#allocation2 + $0x230] sm:$0xff]
        %v1054 = vld [vmem:[#allocation2 + $0x238] sm:$0xff]
        %v1055 = vld [vmem:[%s3] sm:$0xff]
        %1057 = vset.pattern.permute.xlu0 0
        %1058 = vperm.xlu0 %1057, %v1055
        %v1059 = vpop.permute.xlu0 %1058
        %vm1061 = vcmask 588800
        %v1063 = vsel %vm1061, %v982, 0
        %1065 = vmatpush.msra.mxu0 0.0
        %1066 = vmatpush.msra.mxu0 0.0
        %1067 = vmatpush.msra.mxu0 0.0
        %1068 = vmatpush.msra.mxu0 0.0
        %1069 = vmatpush.msra.mxu0 0.0
        %1070 = vmatpush.msra.mxu0 0.0
        %1071 = vmatpush.msra.mxu0 0.0
        %v1072 = vand.u32 %v1047, 4294901760
        %1073 = vmatpush.msra.mxu0 %v1072
        %v1074 = vand.u32 %v1039, 4294901760
        %1075 = vmatpush.msra.mxu0 %v1074
        %v1076 = vand.u32 %v1031, 4294901760
        %1077 = vmatpush.msra.mxu0 %v1076
        %v1078 = vand.u32 %v1023, 4294901760
        %1079 = vmatpush.msra.mxu0 %v1078
        %v1080 = vand.u32 %v1015, 4294901760
        %1081 = vmatpush.msra.mxu0 %v1080
        %v1082 = vand.u32 %v1007, 4294901760
        %1083 = vmatpush.msra.mxu0 %v1082
        %v1084 = vand.u32 %v999, 4294901760
        %1085 = vmatpush.msra.mxu0 %v1084
        %v1086 = vand.u32 %v991, 4294901760
        %1087 = vmatpush.msra.mxu0 %v1086
        %v1088 = vand.u32 %v983, 4294901760
        %1089 = vmatpush.msra.mxu0 %v1088
        %v1090 = vand.u32 %v1063, 4294901760
        %v1091 = vsub.f32 %v1063, %v1090
        %v1092 = vand.u32 %v1091, 4294901760
        %v1093 = vsub.f32 %v1091, %v1092
        %v1094 = vand.u32 %v1093, 4294901760
        %1095 = vmatmul.f32.gmra.mxu0 %v1094
        %v1096 = vpop.f32.mrf.mxu0
        %v1097 = vadd.f32 %v1059, %v1096
        %1098 = vdwg.mxu0
        %1099 = vmatpush.msra.mxu0 0.0
        %1100 = vmatpush.msra.mxu0 0.0
        %1101 = vmatpush.msra.mxu0 0.0
        %1102 = vmatpush.msra.mxu0 0.0
        %1103 = vmatpush.msra.mxu0 0.0
        %1104 = vmatpush.msra.mxu0 0.0
        %1105 = vmatpush.msra.mxu0 0.0
        %v1106 = vand.u32 %v1047, 4294901760
        %v1107 = vsub.f32 %v1047, %v1106
        %v1108 = vand.u32 %v1107, 4294901760
        %v1109 = vsub.f32 %v1107, %v1108
        %v1110 = vand.u32 %v1109, 4294901760
        %1111 = vmatpush.msra.mxu0 %v1110
        %v1112 = vand.u32 %v1039, 4294901760
        %v1113 = vsub.f32 %v1039, %v1112
        %v1114 = vand.u32 %v1113, 4294901760
        %v1115 = vsub.f32 %v1113, %v1114
        %v1116 = vand.u32 %v1115, 4294901760
        %1117 = vmatpush.msra.mxu0 %v1116
        %v1118 = vand.u32 %v1031, 4294901760
        %v1119 = vsub.f32 %v1031, %v1118
        %v1120 = vand.u32 %v1119, 4294901760
        %v1121 = vsub.f32 %v1119, %v1120
        %v1122 = vand.u32 %v1121, 4294901760
        %1123 = vmatpush.msra.mxu0 %v1122
        %v1124 = vand.u32 %v1023, 4294901760
        %v1125 = vsub.f32 %v1023, %v1124
        %v1126 = vand.u32 %v1125, 4294901760
        %v1127 = vsub.f32 %v1125, %v1126
        %v1128 = vand.u32 %v1127, 4294901760
        %1129 = vmatpush.msra.mxu0 %v1128
        %v1130 = vand.u32 %v1015, 4294901760
        %v1131 = vsub.f32 %v1015, %v1130
        %v1132 = vand.u32 %v1131, 4294901760
        %v1133 = vsub.f32 %v1131, %v1132
        %v1134 = vand.u32 %v1133, 4294901760
        %1135 = vmatpush.msra.mxu0 %v1134
        %v1136 = vand.u32 %v1007, 4294901760
        %v1137 = vsub.f32 %v1007, %v1136
        %v1138 = vand.u32 %v1137, 4294901760
        %v1139 = vsub.f32 %v1137, %v1138
        %v1140 = vand.u32 %v1139, 4294901760
        %1141 = vmatpush.msra.mxu0 %v1140
        %v1142 = vand.u32 %v999, 4294901760
        %v1143 = vsub.f32 %v999, %v1142
        %v1144 = vand.u32 %v1143, 4294901760
        %v1145 = vsub.f32 %v1143, %v1144
        %v1146 = vand.u32 %v1145, 4294901760
        %1147 = vmatpush.msra.mxu0 %v1146
        %v1148 = vand.u32 %v991, 4294901760
        %v1149 = vsub.f32 %v991, %v1148
        %v1150 = vand.u32 %v1149, 4294901760
        %v1151 = vsub.f32 %v1149, %v1150
        %v1152 = vand.u32 %v1151, 4294901760
        %1153 = vmatpush.msra.mxu0 %v1152
        %v1154 = vand.u32 %v983, 4294901760
        %v1155 = vsub.f32 %v983, %v1154
        %v1156 = vand.u32 %v1155, 4294901760
        %v1157 = vsub.f32 %v1155, %v1156
        %v1158 = vand.u32 %v1157, 4294901760
        %1159 = vmatpush.msra.mxu0 %v1158
        %v1160 = vand.u32 %v1063, 4294901760
        %1161 = vmatmul.f32.gmra.mxu0 %v1160
        %v1162 = vpop.f32.mrf.mxu0
        %v1163 = vadd.f32 %v1097, %v1162
        %1164 = vdwg.mxu0
        %1165 = vmatpush.msra.mxu0 0.0
        %1166 = vmatpush.msra.mxu0 0.0
        %1167 = vmatpush.msra.mxu0 0.0
        %1168 = vmatpush.msra.mxu0 0.0
        %1169 = vmatpush.msra.mxu0 0.0
        %1170 = vmatpush.msra.mxu0 0.0
        %1171 = vmatpush.msra.mxu0 0.0
        %v1172 = vand.u32 %v1047, 4294901760
        %v1173 = vsub.f32 %v1047, %v1172
        %1174 = vmatpush.msra.mxu0 %v1173
        %v1175 = vand.u32 %v1039, 4294901760
        %v1176 = vsub.f32 %v1039, %v1175
        %1177 = vmatpush.msra.mxu0 %v1176
        %v1178 = vand.u32 %v1031, 4294901760
        %v1179 = vsub.f32 %v1031, %v1178
        %1180 = vmatpush.msra.mxu0 %v1179
        %v1181 = vand.u32 %v1023, 4294901760
        %v1182 = vsub.f32 %v1023, %v1181
        %1183 = vmatpush.msra.mxu0 %v1182
        %v1184 = vand.u32 %v1015, 4294901760
        %v1185 = vsub.f32 %v1015, %v1184
        %1186 = vmatpush.msra.mxu0 %v1185
        %v1187 = vand.u32 %v1007, 4294901760
        %v1188 = vsub.f32 %v1007, %v1187
        %1189 = vmatpush.msra.mxu0 %v1188
        %v1190 = vand.u32 %v999, 4294901760
        %v1191 = vsub.f32 %v999, %v1190
        %1192 = vmatpush.msra.mxu0 %v1191
        %v1193 = vand.u32 %v991, 4294901760
        %v1194 = vsub.f32 %v991, %v1193
        %1195 = vmatpush.msra.mxu0 %v1194
        %v1196 = vand.u32 %v983, 4294901760
        %v1197 = vsub.f32 %v983, %v1196
        %1198 = vmatpush.msra.mxu0 %v1197
        %v1199 = vand.u32 %v1063, 4294901760
        %v1200 = vsub.f32 %v1063, %v1199
        %1201 = vmatmul.f32.gmra.mxu0 %v1200
        %v1202 = vpop.f32.mrf.mxu0
        %v1203 = vadd.f32 %v1163, %v1202
        %1204 = vdwg.mxu0
        %1205 = vmatpush.msra.mxu0 0.0
        %1206 = vmatpush.msra.mxu0 0.0
        %1207 = vmatpush.msra.mxu0 0.0
        %1208 = vmatpush.msra.mxu0 0.0
        %1209 = vmatpush.msra.mxu0 0.0
        %1210 = vmatpush.msra.mxu0 0.0
        %1211 = vmatpush.msra.mxu0 0.0
        %v1212 = vand.u32 %v1047, 4294901760
        %1213 = vmatpush.msra.mxu0 %v1212
        %v1214 = vand.u32 %v1039, 4294901760
        %1215 = vmatpush.msra.mxu0 %v1214
        %v1216 = vand.u32 %v1031, 4294901760
        %1217 = vmatpush.msra.mxu0 %v1216
        %v1218 = vand.u32 %v1023, 4294901760
        %1219 = vmatpush.msra.mxu0 %v1218
        %v1220 = vand.u32 %v1015, 4294901760
        %1221 = vmatpush.msra.mxu0 %v1220
        %v1222 = vand.u32 %v1007, 4294901760
        %1223 = vmatpush.msra.mxu0 %v1222
        %v1224 = vand.u32 %v999, 4294901760
        %1225 = vmatpush.msra.mxu0 %v1224
        %v1226 = vand.u32 %v991, 4294901760
        %1227 = vmatpush.msra.mxu0 %v1226
        %v1228 = vand.u32 %v983, 4294901760
        %1229 = vmatpush.msra.mxu0 %v1228
        %v1230 = vand.u32 %v1063, 4294901760
        %v1231 = vsub.f32 %v1063, %v1230
        %v1232 = vand.u32 %v1231, 4294901760
        %1233 = vmatmul.f32.gmra.mxu0 %v1232
        %v1234 = vpop.f32.mrf.mxu0
        %v1235 = vadd.f32 %v1203, %v1234
        %1236 = vdwg.mxu0
        %1237 = vmatpush.msra.mxu0 0.0
        %1238 = vmatpush.msra.mxu0 0.0
        %1239 = vmatpush.msra.mxu0 0.0
        %1240 = vmatpush.msra.mxu0 0.0
        %1241 = vmatpush.msra.mxu0 0.0
        %1242 = vmatpush.msra.mxu0 0.0
        %1243 = vmatpush.msra.mxu0 0.0
        %v1244 = vand.u32 %v1047, 4294901760
        %v1245 = vsub.f32 %v1047, %v1244
        %v1246 = vand.u32 %v1245, 4294901760
        %1247 = vmatpush.msra.mxu0 %v1246
        %v1248 = vand.u32 %v1039, 4294901760
        %v1249 = vsub.f32 %v1039, %v1248
        %v1250 = vand.u32 %v1249, 4294901760
        %1251 = vmatpush.msra.mxu0 %v1250
        %v1252 = vand.u32 %v1031, 4294901760
        %v1253 = vsub.f32 %v1031, %v1252
        %v1254 = vand.u32 %v1253, 4294901760
        %1255 = vmatpush.msra.mxu0 %v1254
        %v1256 = vand.u32 %v1023, 4294901760
        %v1257 = vsub.f32 %v1023, %v1256
        %v1258 = vand.u32 %v1257, 4294901760
        %1259 = vmatpush.msra.mxu0 %v1258
        %v1260 = vand.u32 %v1015, 4294901760
        %v1261 = vsub.f32 %v1015, %v1260
        %v1262 = vand.u32 %v1261, 4294901760
        %1263 = vmatpush.msra.mxu0 %v1262
        %v1264 = vand.u32 %v1007, 4294901760
        %v1265 = vsub.f32 %v1007, %v1264
        %v1266 = vand.u32 %v1265, 4294901760
        %1267 = vmatpush.msra.mxu0 %v1266
        %v1268 = vand.u32 %v999, 4294901760
        %v1269 = vsub.f32 %v999, %v1268
        %v1270 = vand.u32 %v1269, 4294901760
        %1271 = vmatpush.msra.mxu0 %v1270
        %v1272 = vand.u32 %v991, 4294901760
        %v1273 = vsub.f32 %v991, %v1272
        %v1274 = vand.u32 %v1273, 4294901760
        %1275 = vmatpush.msra.mxu0 %v1274
        %v1276 = vand.u32 %v983, 4294901760
        %v1277 = vsub.f32 %v983, %v1276
        %v1278 = vand.u32 %v1277, 4294901760
        %1279 = vmatpush.msra.mxu0 %v1278
        %v1280 = vand.u32 %v1063, 4294901760
        %1281 = vmatmul.f32.gmra.mxu0 %v1280
        %v1282 = vpop.f32.mrf.mxu0
        %v1283 = vadd.f32 %v1235, %v1282
        %1284 = vdwg.mxu0
        %1285 = vmatpush.msra.mxu0 0.0
        %1286 = vmatpush.msra.mxu0 0.0
        %1287 = vmatpush.msra.mxu0 0.0
        %1288 = vmatpush.msra.mxu0 0.0
        %1289 = vmatpush.msra.mxu0 0.0
        %1290 = vmatpush.msra.mxu0 0.0
        %1291 = vmatpush.msra.mxu0 0.0
        %v1292 = vand.u32 %v1047, 4294901760
        %1293 = vmatpush.msra.mxu0 %v1292
        %v1294 = vand.u32 %v1039, 4294901760
        %1295 = vmatpush.msra.mxu0 %v1294
        %v1296 = vand.u32 %v1031, 4294901760
        %1297 = vmatpush.msra.mxu0 %v1296
        %v1298 = vand.u32 %v1023, 4294901760
        %1299 = vmatpush.msra.mxu0 %v1298
        %v1300 = vand.u32 %v1015, 4294901760
        %1301 = vmatpush.msra.mxu0 %v1300
        %v1302 = vand.u32 %v1007, 4294901760
        %1303 = vmatpush.msra.mxu0 %v1302
        %v1304 = vand.u32 %v999, 4294901760
        %1305 = vmatpush.msra.mxu0 %v1304
        %v1306 = vand.u32 %v991, 4294901760
        %1307 = vmatpush.msra.mxu0 %v1306
        %v1308 = vand.u32 %v983, 4294901760
        %1309 = vmatpush.msra.mxu0 %v1308
        %v1310 = vand.u32 %v1063, 4294901760
        %1311 = vmatmul.f32.gmra.mxu0 %v1310
        %v1312 = vpop.f32.mrf.mxu0
        %v1313 = vadd.f32 %v1283, %v1312
        %1314 = vdwg.mxu0
        %1315 = vmatpush.msra.mxu0 0.0
        %1316 = vmatpush.msra.mxu0 0.0
        %1317 = vmatpush.msra.mxu0 0.0
        %1318 = vmatpush.msra.mxu0 0.0
        %1319 = vmatpush.msra.mxu0 0.0
        %1320 = vmatpush.msra.mxu0 0.0
        %1321 = vmatpush.msra.mxu0 0.0
        %v1322 = vand.u32 %v1048, 4294901760
        %1323 = vmatpush.msra.mxu0 %v1322
        %v1324 = vand.u32 %v1040, 4294901760
        %1325 = vmatpush.msra.mxu0 %v1324
        %v1326 = vand.u32 %v1032, 4294901760
        %1327 = vmatpush.msra.mxu0 %v1326
        %v1328 = vand.u32 %v1024, 4294901760
        %1329 = vmatpush.msra.mxu0 %v1328
        %v1330 = vand.u32 %v1016, 4294901760
        %1331 = vmatpush.msra.mxu0 %v1330
        %v1332 = vand.u32 %v1008, 4294901760
        %1333 = vmatpush.msra.mxu0 %v1332
        %v1334 = vand.u32 %v1000, 4294901760
        %1335 = vmatpush.msra.mxu0 %v1334
        %v1336 = vand.u32 %v992, 4294901760
        %1337 = vmatpush.msra.mxu0 %v1336
        %v1338 = vand.u32 %v984, 4294901760
        %1339 = vmatpush.msra.mxu0 %v1338
        %v1340 = vand.u32 %v1063, 4294901760
        %v1341 = vsub.f32 %v1063, %v1340
        %v1342 = vand.u32 %v1341, 4294901760
        %v1343 = vsub.f32 %v1341, %v1342
        %v1344 = vand.u32 %v1343, 4294901760
        %1345 = vmatmul.f32.gmra.mxu0 %v1344
        %v1346 = vpop.f32.mrf.mxu0
        %v1347 = vadd.f32 %v1059, %v1346
        %1348 = vdwg.mxu0
        %1349 = vmatpush.msra.mxu0 0.0
        %1350 = vmatpush.msra.mxu0 0.0
        %1351 = vmatpush.msra.mxu0 0.0
        %1352 = vmatpush.msra.mxu0 0.0
        %1353 = vmatpush.msra.mxu0 0.0
        %1354 = vmatpush.msra.mxu0 0.0
        %1355 = vmatpush.msra.mxu0 0.0
        %v1356 = vand.u32 %v1048, 4294901760
        %v1357 = vsub.f32 %v1048, %v1356
        %v1358 = vand.u32 %v1357, 4294901760
        %v1359 = vsub.f32 %v1357, %v1358
        %v1360 = vand.u32 %v1359, 4294901760
        %1361 = vmatpush.msra.mxu0 %v1360
        %v1362 = vand.u32 %v1040, 4294901760
        %v1363 = vsub.f32 %v1040, %v1362
        %v1364 = vand.u32 %v1363, 4294901760
        %v1365 = vsub.f32 %v1363, %v1364
        %v1366 = vand.u32 %v1365, 4294901760
        %1367 = vmatpush.msra.mxu0 %v1366
        %v1368 = vand.u32 %v1032, 4294901760
        %v1369 = vsub.f32 %v1032, %v1368
        %v1370 = vand.u32 %v1369, 4294901760
        %v1371 = vsub.f32 %v1369, %v1370
        %v1372 = vand.u32 %v1371, 4294901760
        %1373 = vmatpush.msra.mxu0 %v1372
        %v1374 = vand.u32 %v1024, 4294901760
        %v1375 = vsub.f32 %v1024, %v1374
        %v1376 = vand.u32 %v1375, 4294901760
        %v1377 = vsub.f32 %v1375, %v1376
        %v1378 = vand.u32 %v1377, 4294901760
        %1379 = vmatpush.msra.mxu0 %v1378
        %v1380 = vand.u32 %v1016, 4294901760
        %v1381 = vsub.f32 %v1016, %v1380
        %v1382 = vand.u32 %v1381, 4294901760
        %v1383 = vsub.f32 %v1381, %v1382
        %v1384 = vand.u32 %v1383, 4294901760
        %1385 = vmatpush.msra.mxu0 %v1384
        %v1386 = vand.u32 %v1008, 4294901760
        %v1387 = vsub.f32 %v1008, %v1386
        %v1388 = vand.u32 %v1387, 4294901760
        %v1389 = vsub.f32 %v1387, %v1388
        %v1390 = vand.u32 %v1389, 4294901760
        %1391 = vmatpush.msra.mxu0 %v1390
        %v1392 = vand.u32 %v1000, 4294901760
        %v1393 = vsub.f32 %v1000, %v1392
        %v1394 = vand.u32 %v1393, 4294901760
        %v1395 = vsub.f32 %v1393, %v1394
        %v1396 = vand.u32 %v1395, 4294901760
        %1397 = vmatpush.msra.mxu0 %v1396
        %v1398 = vand.u32 %v992, 4294901760
        %v1399 = vsub.f32 %v992, %v1398
        %v1400 = vand.u32 %v1399, 4294901760
        %v1401 = vsub.f32 %v1399, %v1400
        %v1402 = vand.u32 %v1401, 4294901760
        %1403 = vmatpush.msra.mxu0 %v1402
        %v1404 = vand.u32 %v984, 4294901760
        %v1405 = vsub.f32 %v984, %v1404
        %v1406 = vand.u32 %v1405, 4294901760
        %v1407 = vsub.f32 %v1405, %v1406
        %v1408 = vand.u32 %v1407, 4294901760
        %1409 = vmatpush.msra.mxu0 %v1408
        %v1410 = vand.u32 %v1063, 4294901760
        %1411 = vmatmul.f32.gmra.mxu0 %v1410
        %v1412 = vpop.f32.mrf.mxu0
        %v1413 = vadd.f32 %v1347, %v1412
        %1414 = vdwg.mxu0
        %1415 = vmatpush.msra.mxu0 0.0
        %1416 = vmatpush.msra.mxu0 0.0
        %1417 = vmatpush.msra.mxu0 0.0
        %1418 = vmatpush.msra.mxu0 0.0
        %1419 = vmatpush.msra.mxu0 0.0
        %1420 = vmatpush.msra.mxu0 0.0
        %1421 = vmatpush.msra.mxu0 0.0
        %v1422 = vand.u32 %v1048, 4294901760
        %v1423 = vsub.f32 %v1048, %v1422
        %1424 = vmatpush.msra.mxu0 %v1423
        %v1425 = vand.u32 %v1040, 4294901760
        %v1426 = vsub.f32 %v1040, %v1425
        %1427 = vmatpush.msra.mxu0 %v1426
        %v1428 = vand.u32 %v1032, 4294901760
        %v1429 = vsub.f32 %v1032, %v1428
        %1430 = vmatpush.msra.mxu0 %v1429
        %v1431 = vand.u32 %v1024, 4294901760
        %v1432 = vsub.f32 %v1024, %v1431
        %1433 = vmatpush.msra.mxu0 %v1432
        %v1434 = vand.u32 %v1016, 4294901760
        %v1435 = vsub.f32 %v1016, %v1434
        %1436 = vmatpush.msra.mxu0 %v1435
        %v1437 = vand.u32 %v1008, 4294901760
        %v1438 = vsub.f32 %v1008, %v1437
        %1439 = vmatpush.msra.mxu0 %v1438
        %v1440 = vand.u32 %v1000, 4294901760
        %v1441 = vsub.f32 %v1000, %v1440
        %1442 = vmatpush.msra.mxu0 %v1441
        %v1443 = vand.u32 %v992, 4294901760
        %v1444 = vsub.f32 %v992, %v1443
        %1445 = vmatpush.msra.mxu0 %v1444
        %v1446 = vand.u32 %v984, 4294901760
        %v1447 = vsub.f32 %v984, %v1446
        %1448 = vmatpush.msra.mxu0 %v1447
        %v1449 = vand.u32 %v1063, 4294901760
        %v1450 = vsub.f32 %v1063, %v1449
        %1451 = vmatmul.f32.gmra.mxu0 %v1450
        %v1452 = vpop.f32.mrf.mxu0
        %v1453 = vadd.f32 %v1413, %v1452
        %1454 = vdwg.mxu0
        %1455 = vmatpush.msra.mxu0 0.0
        %1456 = vmatpush.msra.mxu0 0.0
        %1457 = vmatpush.msra.mxu0 0.0
        %1458 = vmatpush.msra.mxu0 0.0
        %1459 = vmatpush.msra.mxu0 0.0
        %1460 = vmatpush.msra.mxu0 0.0
        %1461 = vmatpush.msra.mxu0 0.0
        %v1462 = vand.u32 %v1048, 4294901760
        %1463 = vmatpush.msra.mxu0 %v1462
        %v1464 = vand.u32 %v1040, 4294901760
        %1465 = vmatpush.msra.mxu0 %v1464
        %v1466 = vand.u32 %v1032, 4294901760
        %1467 = vmatpush.msra.mxu0 %v1466
        %v1468 = vand.u32 %v1024, 4294901760
        %1469 = vmatpush.msra.mxu0 %v1468
        %v1470 = vand.u32 %v1016, 4294901760
        %1471 = vmatpush.msra.mxu0 %v1470
        %v1472 = vand.u32 %v1008, 4294901760
        %1473 = vmatpush.msra.mxu0 %v1472
        %v1474 = vand.u32 %v1000, 4294901760
        %1475 = vmatpush.msra.mxu0 %v1474
        %v1476 = vand.u32 %v992, 4294901760
        %1477 = vmatpush.msra.mxu0 %v1476
        %v1478 = vand.u32 %v984, 4294901760
        %1479 = vmatpush.msra.mxu0 %v1478
        %v1480 = vand.u32 %v1063, 4294901760
        %v1481 = vsub.f32 %v1063, %v1480
        %v1482 = vand.u32 %v1481, 4294901760
        %1483 = vmatmul.f32.gmra.mxu0 %v1482
        %v1484 = vpop.f32.mrf.mxu0
        %v1485 = vadd.f32 %v1453, %v1484
        %1486 = vdwg.mxu0
        %1487 = vmatpush.msra.mxu0 0.0
        %1488 = vmatpush.msra.mxu0 0.0
        %1489 = vmatpush.msra.mxu0 0.0
        %1490 = vmatpush.msra.mxu0 0.0
        %1491 = vmatpush.msra.mxu0 0.0
        %1492 = vmatpush.msra.mxu0 0.0
        %1493 = vmatpush.msra.mxu0 0.0
        %v1494 = vand.u32 %v1048, 4294901760
        %v1495 = vsub.f32 %v1048, %v1494
        %v1496 = vand.u32 %v1495, 4294901760
        %1497 = vmatpush.msra.mxu0 %v1496
        %v1498 = vand.u32 %v1040, 4294901760
        %v1499 = vsub.f32 %v1040, %v1498
        %v1500 = vand.u32 %v1499, 4294901760
        %1501 = vmatpush.msra.mxu0 %v1500
        %v1502 = vand.u32 %v1032, 4294901760
        %v1503 = vsub.f32 %v1032, %v1502
        %v1504 = vand.u32 %v1503, 4294901760
        %1505 = vmatpush.msra.mxu0 %v1504
        %v1506 = vand.u32 %v1024, 4294901760
        %v1507 = vsub.f32 %v1024, %v1506
        %v1508 = vand.u32 %v1507, 4294901760
        %1509 = vmatpush.msra.mxu0 %v1508
        %v1510 = vand.u32 %v1016, 4294901760
        %v1511 = vsub.f32 %v1016, %v1510
        %v1512 = vand.u32 %v1511, 4294901760
        %1513 = vmatpush.msra.mxu0 %v1512
        %v1514 = vand.u32 %v1008, 4294901760
        %v1515 = vsub.f32 %v1008, %v1514
        %v1516 = vand.u32 %v1515, 4294901760
        %1517 = vmatpush.msra.mxu0 %v1516
        %v1518 = vand.u32 %v1000, 4294901760
        %v1519 = vsub.f32 %v1000, %v1518
        %v1520 = vand.u32 %v1519, 4294901760
        %1521 = vmatpush.msra.mxu0 %v1520
        %v1522 = vand.u32 %v992, 4294901760
        %v1523 = vsub.f32 %v992, %v1522
        %v1524 = vand.u32 %v1523, 4294901760
        %1525 = vmatpush.msra.mxu0 %v1524
        %v1526 = vand.u32 %v984, 4294901760
        %v1527 = vsub.f32 %v984, %v1526
        %v1528 = vand.u32 %v1527, 4294901760
        %1529 = vmatpush.msra.mxu0 %v1528
        %v1530 = vand.u32 %v1063, 4294901760
        %1531 = vmatmul.f32.gmra.mxu0 %v1530
        %v1532 = vpop.f32.mrf.mxu0
        %v1533 = vadd.f32 %v1485, %v1532
        %1534 = vdwg.mxu0
        %1535 = vmatpush.msra.mxu0 0.0
        %1536 = vmatpush.msra.mxu0 0.0
        %1537 = vmatpush.msra.mxu0 0.0
        %1538 = vmatpush.msra.mxu0 0.0
        %1539 = vmatpush.msra.mxu0 0.0
        %1540 = vmatpush.msra.mxu0 0.0
        %1541 = vmatpush.msra.mxu0 0.0
        %v1542 = vand.u32 %v1048, 4294901760
        %1543 = vmatpush.msra.mxu0 %v1542
        %v1544 = vand.u32 %v1040, 4294901760
        %1545 = vmatpush.msra.mxu0 %v1544
        %v1546 = vand.u32 %v1032, 4294901760
        %1547 = vmatpush.msra.mxu0 %v1546
        %v1548 = vand.u32 %v1024, 4294901760
        %1549 = vmatpush.msra.mxu0 %v1548
        %v1550 = vand.u32 %v1016, 4294901760
        %1551 = vmatpush.msra.mxu0 %v1550
        %v1552 = vand.u32 %v1008, 4294901760
        %1553 = vmatpush.msra.mxu0 %v1552
        %v1554 = vand.u32 %v1000, 4294901760
        %1555 = vmatpush.msra.mxu0 %v1554
        %v1556 = vand.u32 %v992, 4294901760
        %1557 = vmatpush.msra.mxu0 %v1556
        %v1558 = vand.u32 %v984, 4294901760
        %1559 = vmatpush.msra.mxu0 %v1558
        %v1560 = vand.u32 %v1063, 4294901760
        %1561 = vmatmul.f32.gmra.mxu0 %v1560
        %v1562 = vpop.f32.mrf.mxu0
        %v1563 = vadd.f32 %v1533, %v1562
        %1564 = vdwg.mxu0
        %1565 = vmatpush.msra.mxu0 0.0
        %1566 = vmatpush.msra.mxu0 0.0
        %1567 = vmatpush.msra.mxu0 0.0
        %1568 = vmatpush.msra.mxu0 0.0
        %1569 = vmatpush.msra.mxu0 0.0
        %1570 = vmatpush.msra.mxu0 0.0
        %1571 = vmatpush.msra.mxu0 0.0
        %v1572 = vand.u32 %v1049, 4294901760
        %1573 = vmatpush.msra.mxu0 %v1572
        %v1574 = vand.u32 %v1041, 4294901760
        %1575 = vmatpush.msra.mxu0 %v1574
        %v1576 = vand.u32 %v1033, 4294901760
        %1577 = vmatpush.msra.mxu0 %v1576
        %v1578 = vand.u32 %v1025, 4294901760
        %1579 = vmatpush.msra.mxu0 %v1578
        %v1580 = vand.u32 %v1017, 4294901760
        %1581 = vmatpush.msra.mxu0 %v1580
        %v1582 = vand.u32 %v1009, 4294901760
        %1583 = vmatpush.msra.mxu0 %v1582
        %v1584 = vand.u32 %v1001, 4294901760
        %1585 = vmatpush.msra.mxu0 %v1584
        %v1586 = vand.u32 %v993, 4294901760
        %1587 = vmatpush.msra.mxu0 %v1586
        %v1588 = vand.u32 %v985, 4294901760
        %1589 = vmatpush.msra.mxu0 %v1588
        %v1590 = vand.u32 %v1063, 4294901760
        %v1591 = vsub.f32 %v1063, %v1590
        %v1592 = vand.u32 %v1591, 4294901760
        %v1593 = vsub.f32 %v1591, %v1592
        %v1594 = vand.u32 %v1593, 4294901760
        %1595 = vmatmul.f32.gmra.mxu0 %v1594
        %v1596 = vpop.f32.mrf.mxu0
        %v1597 = vadd.f32 %v1059, %v1596
        %1598 = vdwg.mxu0
        %1599 = vmatpush.msra.mxu0 0.0
        %1600 = vmatpush.msra.mxu0 0.0
        %1601 = vmatpush.msra.mxu0 0.0
        %1602 = vmatpush.msra.mxu0 0.0
        %1603 = vmatpush.msra.mxu0 0.0
        %1604 = vmatpush.msra.mxu0 0.0
        %1605 = vmatpush.msra.mxu0 0.0
        %v1606 = vand.u32 %v1049, 4294901760
        %v1607 = vsub.f32 %v1049, %v1606
        %v1608 = vand.u32 %v1607, 4294901760
        %v1609 = vsub.f32 %v1607, %v1608
        %v1610 = vand.u32 %v1609, 4294901760
        %1611 = vmatpush.msra.mxu0 %v1610
        %v1612 = vand.u32 %v1041, 4294901760
        %v1613 = vsub.f32 %v1041, %v1612
        %v1614 = vand.u32 %v1613, 4294901760
        %v1615 = vsub.f32 %v1613, %v1614
        %v1616 = vand.u32 %v1615, 4294901760
        %1617 = vmatpush.msra.mxu0 %v1616
        %v1618 = vand.u32 %v1033, 4294901760
        %v1619 = vsub.f32 %v1033, %v1618
        %v1620 = vand.u32 %v1619, 4294901760
        %v1621 = vsub.f32 %v1619, %v1620
        %v1622 = vand.u32 %v1621, 4294901760
        %1623 = vmatpush.msra.mxu0 %v1622
        %v1624 = vand.u32 %v1025, 4294901760
        %v1625 = vsub.f32 %v1025, %v1624
        %v1626 = vand.u32 %v1625, 4294901760
        %v1627 = vsub.f32 %v1625, %v1626
        %v1628 = vand.u32 %v1627, 4294901760
        %1629 = vmatpush.msra.mxu0 %v1628
        %v1630 = vand.u32 %v1017, 4294901760
        %v1631 = vsub.f32 %v1017, %v1630
        %v1632 = vand.u32 %v1631, 4294901760
        %v1633 = vsub.f32 %v1631, %v1632
        %v1634 = vand.u32 %v1633, 4294901760
        %1635 = vmatpush.msra.mxu0 %v1634
        %v1636 = vand.u32 %v1009, 4294901760
        %v1637 = vsub.f32 %v1009, %v1636
        %v1638 = vand.u32 %v1637, 4294901760
        %v1639 = vsub.f32 %v1637, %v1638
        %v1640 = vand.u32 %v1639, 4294901760
        %1641 = vmatpush.msra.mxu0 %v1640
        %v1642 = vand.u32 %v1001, 4294901760
        %v1643 = vsub.f32 %v1001, %v1642
        %v1644 = vand.u32 %v1643, 4294901760
        %v1645 = vsub.f32 %v1643, %v1644
        %v1646 = vand.u32 %v1645, 4294901760
        %1647 = vmatpush.msra.mxu0 %v1646
        %v1648 = vand.u32 %v993, 4294901760
        %v1649 = vsub.f32 %v993, %v1648
        %v1650 = vand.u32 %v1649, 4294901760
        %v1651 = vsub.f32 %v1649, %v1650
        %v1652 = vand.u32 %v1651, 4294901760
        %1653 = vmatpush.msra.mxu0 %v1652
        %v1654 = vand.u32 %v985, 4294901760
        %v1655 = vsub.f32 %v985, %v1654
        %v1656 = vand.u32 %v1655, 4294901760
        %v1657 = vsub.f32 %v1655, %v1656
        %v1658 = vand.u32 %v1657, 4294901760
        %1659 = vmatpush.msra.mxu0 %v1658
        %v1660 = vand.u32 %v1063, 4294901760
        %1661 = vmatmul.f32.gmra.mxu0 %v1660
        %v1662 = vpop.f32.mrf.mxu0
        %v1663 = vadd.f32 %v1597, %v1662
        %1664 = vdwg.mxu0
        %1665 = vmatpush.msra.mxu0 0.0
        %1666 = vmatpush.msra.mxu0 0.0
        %1667 = vmatpush.msra.mxu0 0.0
        %1668 = vmatpush.msra.mxu0 0.0
        %1669 = vmatpush.msra.mxu0 0.0
        %1670 = vmatpush.msra.mxu0 0.0
        %1671 = vmatpush.msra.mxu0 0.0
        %v1672 = vand.u32 %v1049, 4294901760
        %v1673 = vsub.f32 %v1049, %v1672
        %1674 = vmatpush.msra.mxu0 %v1673
        %v1675 = vand.u32 %v1041, 4294901760
        %v1676 = vsub.f32 %v1041, %v1675
        %1677 = vmatpush.msra.mxu0 %v1676
        %v1678 = vand.u32 %v1033, 4294901760
        %v1679 = vsub.f32 %v1033, %v1678
        %1680 = vmatpush.msra.mxu0 %v1679
        %v1681 = vand.u32 %v1025, 4294901760
        %v1682 = vsub.f32 %v1025, %v1681
        %1683 = vmatpush.msra.mxu0 %v1682
        %v1684 = vand.u32 %v1017, 4294901760
        %v1685 = vsub.f32 %v1017, %v1684
        %1686 = vmatpush.msra.mxu0 %v1685
        %v1687 = vand.u32 %v1009, 4294901760
        %v1688 = vsub.f32 %v1009, %v1687
        %1689 = vmatpush.msra.mxu0 %v1688
        %v1690 = vand.u32 %v1001, 4294901760
        %v1691 = vsub.f32 %v1001, %v1690
        %1692 = vmatpush.msra.mxu0 %v1691
        %v1693 = vand.u32 %v993, 4294901760
        %v1694 = vsub.f32 %v993, %v1693
        %1695 = vmatpush.msra.mxu0 %v1694
        %v1696 = vand.u32 %v985, 4294901760
        %v1697 = vsub.f32 %v985, %v1696
        %1698 = vmatpush.msra.mxu0 %v1697
        %v1699 = vand.u32 %v1063, 4294901760
        %v1700 = vsub.f32 %v1063, %v1699
        %1701 = vmatmul.f32.gmra.mxu0 %v1700
        %v1702 = vpop.f32.mrf.mxu0
        %v1703 = vadd.f32 %v1663, %v1702
        %1704 = vdwg.mxu0
        %1705 = vmatpush.msra.mxu0 0.0
        %1706 = vmatpush.msra.mxu0 0.0
        %1707 = vmatpush.msra.mxu0 0.0
        %1708 = vmatpush.msra.mxu0 0.0
        %1709 = vmatpush.msra.mxu0 0.0
        %1710 = vmatpush.msra.mxu0 0.0
        %1711 = vmatpush.msra.mxu0 0.0
        %v1712 = vand.u32 %v1049, 4294901760
        %1713 = vmatpush.msra.mxu0 %v1712
        %v1714 = vand.u32 %v1041, 4294901760
        %1715 = vmatpush.msra.mxu0 %v1714
        %v1716 = vand.u32 %v1033, 4294901760
        %1717 = vmatpush.msra.mxu0 %v1716
        %v1718 = vand.u32 %v1025, 4294901760
        %1719 = vmatpush.msra.mxu0 %v1718
        %v1720 = vand.u32 %v1017, 4294901760
        %1721 = vmatpush.msra.mxu0 %v1720
        %v1722 = vand.u32 %v1009, 4294901760
        %1723 = vmatpush.msra.mxu0 %v1722
        %v1724 = vand.u32 %v1001, 4294901760
        %1725 = vmatpush.msra.mxu0 %v1724
        %v1726 = vand.u32 %v993, 4294901760
        %1727 = vmatpush.msra.mxu0 %v1726
        %v1728 = vand.u32 %v985, 4294901760
        %1729 = vmatpush.msra.mxu0 %v1728
        %v1730 = vand.u32 %v1063, 4294901760
        %v1731 = vsub.f32 %v1063, %v1730
        %v1732 = vand.u32 %v1731, 4294901760
        %1733 = vmatmul.f32.gmra.mxu0 %v1732
        %v1734 = vpop.f32.mrf.mxu0
        %v1735 = vadd.f32 %v1703, %v1734
        %1736 = vdwg.mxu0
        %1737 = vmatpush.msra.mxu0 0.0
        %1738 = vmatpush.msra.mxu0 0.0
        %1739 = vmatpush.msra.mxu0 0.0
        %1740 = vmatpush.msra.mxu0 0.0
        %1741 = vmatpush.msra.mxu0 0.0
        %1742 = vmatpush.msra.mxu0 0.0
        %1743 = vmatpush.msra.mxu0 0.0
        %v1744 = vand.u32 %v1049, 4294901760
        %v1745 = vsub.f32 %v1049, %v1744
        %v1746 = vand.u32 %v1745, 4294901760
        %1747 = vmatpush.msra.mxu0 %v1746
        %v1748 = vand.u32 %v1041, 4294901760
        %v1749 = vsub.f32 %v1041, %v1748
        %v1750 = vand.u32 %v1749, 4294901760
        %1751 = vmatpush.msra.mxu0 %v1750
        %v1752 = vand.u32 %v1033, 4294901760
        %v1753 = vsub.f32 %v1033, %v1752
        %v1754 = vand.u32 %v1753, 4294901760
        %1755 = vmatpush.msra.mxu0 %v1754
        %v1756 = vand.u32 %v1025, 4294901760
        %v1757 = vsub.f32 %v1025, %v1756
        %v1758 = vand.u32 %v1757, 4294901760
        %1759 = vmatpush.msra.mxu0 %v1758
        %v1760 = vand.u32 %v1017, 4294901760
        %v1761 = vsub.f32 %v1017, %v1760
        %v1762 = vand.u32 %v1761, 4294901760
        %1763 = vmatpush.msra.mxu0 %v1762
        %v1764 = vand.u32 %v1009, 4294901760
        %v1765 = vsub.f32 %v1009, %v1764
        %v1766 = vand.u32 %v1765, 4294901760
        %1767 = vmatpush.msra.mxu0 %v1766
        %v1768 = vand.u32 %v1001, 4294901760
        %v1769 = vsub.f32 %v1001, %v1768
        %v1770 = vand.u32 %v1769, 4294901760
        %1771 = vmatpush.msra.mxu0 %v1770
        %v1772 = vand.u32 %v993, 4294901760
        %v1773 = vsub.f32 %v993, %v1772
        %v1774 = vand.u32 %v1773, 4294901760
        %1775 = vmatpush.msra.mxu0 %v1774
        %v1776 = vand.u32 %v985, 4294901760
        %v1777 = vsub.f32 %v985, %v1776
        %v1778 = vand.u32 %v1777, 4294901760
        %1779 = vmatpush.msra.mxu0 %v1778
        %v1780 = vand.u32 %v1063, 4294901760
        %1781 = vmatmul.f32.gmra.mxu0 %v1780
        %v1782 = vpop.f32.mrf.mxu0
        %v1783 = vadd.f32 %v1735, %v1782
        %1784 = vdwg.mxu0
        %1785 = vmatpush.msra.mxu0 0.0
        %1786 = vmatpush.msra.mxu0 0.0
        %1787 = vmatpush.msra.mxu0 0.0
        %1788 = vmatpush.msra.mxu0 0.0
        %1789 = vmatpush.msra.mxu0 0.0
        %1790 = vmatpush.msra.mxu0 0.0
        %1791 = vmatpush.msra.mxu0 0.0
        %v1792 = vand.u32 %v1049, 4294901760
        %1793 = vmatpush.msra.mxu0 %v1792
        %v1794 = vand.u32 %v1041, 4294901760
        %1795 = vmatpush.msra.mxu0 %v1794
        %v1796 = vand.u32 %v1033, 4294901760
        %1797 = vmatpush.msra.mxu0 %v1796
        %v1798 = vand.u32 %v1025, 4294901760
        %1799 = vmatpush.msra.mxu0 %v1798
        %v1800 = vand.u32 %v1017, 4294901760
        %1801 = vmatpush.msra.mxu0 %v1800
        %v1802 = vand.u32 %v1009, 4294901760
        %1803 = vmatpush.msra.mxu0 %v1802
        %v1804 = vand.u32 %v1001, 4294901760
        %1805 = vmatpush.msra.mxu0 %v1804
        %v1806 = vand.u32 %v993, 4294901760
        %1807 = vmatpush.msra.mxu0 %v1806
        %v1808 = vand.u32 %v985, 4294901760
        %1809 = vmatpush.msra.mxu0 %v1808
        %v1810 = vand.u32 %v1063, 4294901760
        %1811 = vmatmul.f32.gmra.mxu0 %v1810
        %v1812 = vpop.f32.mrf.mxu0
        %v1813 = vadd.f32 %v1783, %v1812
        %1814 = vdwg.mxu0
        %1815 = vmatpush.msra.mxu0 0.0
        %1816 = vmatpush.msra.mxu0 0.0
        %1817 = vmatpush.msra.mxu0 0.0
        %1818 = vmatpush.msra.mxu0 0.0
        %1819 = vmatpush.msra.mxu0 0.0
        %1820 = vmatpush.msra.mxu0 0.0
        %1821 = vmatpush.msra.mxu0 0.0
        %v1822 = vand.u32 %v1050, 4294901760
        %1823 = vmatpush.msra.mxu0 %v1822
        %v1824 = vand.u32 %v1042, 4294901760
        %1825 = vmatpush.msra.mxu0 %v1824
        %v1826 = vand.u32 %v1034, 4294901760
        %1827 = vmatpush.msra.mxu0 %v1826
        %v1828 = vand.u32 %v1026, 4294901760
        %1829 = vmatpush.msra.mxu0 %v1828
        %v1830 = vand.u32 %v1018, 4294901760
        %1831 = vmatpush.msra.mxu0 %v1830
        %v1832 = vand.u32 %v1010, 4294901760
        %1833 = vmatpush.msra.mxu0 %v1832
        %v1834 = vand.u32 %v1002, 4294901760
        %1835 = vmatpush.msra.mxu0 %v1834
        %v1836 = vand.u32 %v994, 4294901760
        %1837 = vmatpush.msra.mxu0 %v1836
        %v1838 = vand.u32 %v986, 4294901760
        %1839 = vmatpush.msra.mxu0 %v1838
        %v1840 = vand.u32 %v1063, 4294901760
        %v1841 = vsub.f32 %v1063, %v1840
        %v1842 = vand.u32 %v1841, 4294901760
        %v1843 = vsub.f32 %v1841, %v1842
        %v1844 = vand.u32 %v1843, 4294901760
        %1845 = vmatmul.f32.gmra.mxu0 %v1844
        %v1846 = vpop.f32.mrf.mxu0
        %v1847 = vadd.f32 %v1059, %v1846
        %1848 = vdwg.mxu0
        %1849 = vmatpush.msra.mxu0 0.0
        %1850 = vmatpush.msra.mxu0 0.0
        %1851 = vmatpush.msra.mxu0 0.0
        %1852 = vmatpush.msra.mxu0 0.0
        %1853 = vmatpush.msra.mxu0 0.0
        %1854 = vmatpush.msra.mxu0 0.0
        %1855 = vmatpush.msra.mxu0 0.0
        %v1856 = vand.u32 %v1050, 4294901760
        %v1857 = vsub.f32 %v1050, %v1856
        %v1858 = vand.u32 %v1857, 4294901760
        %v1859 = vsub.f32 %v1857, %v1858
        %v1860 = vand.u32 %v1859, 4294901760
        %1861 = vmatpush.msra.mxu0 %v1860
        %v1862 = vand.u32 %v1042, 4294901760
        %v1863 = vsub.f32 %v1042, %v1862
        %v1864 = vand.u32 %v1863, 4294901760
        %v1865 = vsub.f32 %v1863, %v1864
        %v1866 = vand.u32 %v1865, 4294901760
        %1867 = vmatpush.msra.mxu0 %v1866
        %v1868 = vand.u32 %v1034, 4294901760
        %v1869 = vsub.f32 %v1034, %v1868
        %v1870 = vand.u32 %v1869, 4294901760
        %v1871 = vsub.f32 %v1869, %v1870
        %v1872 = vand.u32 %v1871, 4294901760
        %1873 = vmatpush.msra.mxu0 %v1872
        %v1874 = vand.u32 %v1026, 4294901760
        %v1875 = vsub.f32 %v1026, %v1874
        %v1876 = vand.u32 %v1875, 4294901760
        %v1877 = vsub.f32 %v1875, %v1876
        %v1878 = vand.u32 %v1877, 4294901760
        %1879 = vmatpush.msra.mxu0 %v1878
        %v1880 = vand.u32 %v1018, 4294901760
        %v1881 = vsub.f32 %v1018, %v1880
        %v1882 = vand.u32 %v1881, 4294901760
        %v1883 = vsub.f32 %v1881, %v1882
        %v1884 = vand.u32 %v1883, 4294901760
        %1885 = vmatpush.msra.mxu0 %v1884
        %v1886 = vand.u32 %v1010, 4294901760
        %v1887 = vsub.f32 %v1010, %v1886
        %v1888 = vand.u32 %v1887, 4294901760
        %v1889 = vsub.f32 %v1887, %v1888
        %v1890 = vand.u32 %v1889, 4294901760
        %1891 = vmatpush.msra.mxu0 %v1890
        %v1892 = vand.u32 %v1002, 4294901760
        %v1893 = vsub.f32 %v1002, %v1892
        %v1894 = vand.u32 %v1893, 4294901760
        %v1895 = vsub.f32 %v1893, %v1894
        %v1896 = vand.u32 %v1895, 4294901760
        %1897 = vmatpush.msra.mxu0 %v1896
        %v1898 = vand.u32 %v994, 4294901760
        %v1899 = vsub.f32 %v994, %v1898
        %v1900 = vand.u32 %v1899, 4294901760
        %v1901 = vsub.f32 %v1899, %v1900
        %v1902 = vand.u32 %v1901, 4294901760
        %1903 = vmatpush.msra.mxu0 %v1902
        %v1904 = vand.u32 %v986, 4294901760
        %v1905 = vsub.f32 %v986, %v1904
        %v1906 = vand.u32 %v1905, 4294901760
        %v1907 = vsub.f32 %v1905, %v1906
        %v1908 = vand.u32 %v1907, 4294901760
        %1909 = vmatpush.msra.mxu0 %v1908
        %v1910 = vand.u32 %v1063, 4294901760
        %1911 = vmatmul.f32.gmra.mxu0 %v1910
        %v1912 = vpop.f32.mrf.mxu0
        %v1913 = vadd.f32 %v1847, %v1912
        %1914 = vdwg.mxu0
        %1915 = vmatpush.msra.mxu0 0.0
        %1916 = vmatpush.msra.mxu0 0.0
        %1917 = vmatpush.msra.mxu0 0.0
        %1918 = vmatpush.msra.mxu0 0.0
        %1919 = vmatpush.msra.mxu0 0.0
        %1920 = vmatpush.msra.mxu0 0.0
        %1921 = vmatpush.msra.mxu0 0.0
        %v1922 = vand.u32 %v1050, 4294901760
        %v1923 = vsub.f32 %v1050, %v1922
        %1924 = vmatpush.msra.mxu0 %v1923
        %v1925 = vand.u32 %v1042, 4294901760
        %v1926 = vsub.f32 %v1042, %v1925
        %1927 = vmatpush.msra.mxu0 %v1926
        %v1928 = vand.u32 %v1034, 4294901760
        %v1929 = vsub.f32 %v1034, %v1928
        %1930 = vmatpush.msra.mxu0 %v1929
        %v1931 = vand.u32 %v1026, 4294901760
        %v1932 = vsub.f32 %v1026, %v1931
        %1933 = vmatpush.msra.mxu0 %v1932
        %v1934 = vand.u32 %v1018, 4294901760
        %v1935 = vsub.f32 %v1018, %v1934
        %1936 = vmatpush.msra.mxu0 %v1935
        %v1937 = vand.u32 %v1010, 4294901760
        %v1938 = vsub.f32 %v1010, %v1937
        %1939 = vmatpush.msra.mxu0 %v1938
        %v1940 = vand.u32 %v1002, 4294901760
        %v1941 = vsub.f32 %v1002, %v1940
        %1942 = vmatpush.msra.mxu0 %v1941
        %v1943 = vand.u32 %v994, 4294901760
        %v1944 = vsub.f32 %v994, %v1943
        %1945 = vmatpush.msra.mxu0 %v1944
        %v1946 = vand.u32 %v986, 4294901760
        %v1947 = vsub.f32 %v986, %v1946
        %1948 = vmatpush.msra.mxu0 %v1947
        %v1949 = vand.u32 %v1063, 4294901760
        %v1950 = vsub.f32 %v1063, %v1949
        %1951 = vmatmul.f32.gmra.mxu0 %v1950
        %v1952 = vpop.f32.mrf.mxu0
        %v1953 = vadd.f32 %v1913, %v1952
        %1954 = vdwg.mxu0
        %1955 = vmatpush.msra.mxu0 0.0
        %1956 = vmatpush.msra.mxu0 0.0
        %1957 = vmatpush.msra.mxu0 0.0
        %1958 = vmatpush.msra.mxu0 0.0
        %1959 = vmatpush.msra.mxu0 0.0
        %1960 = vmatpush.msra.mxu0 0.0
        %1961 = vmatpush.msra.mxu0 0.0
        %v1962 = vand.u32 %v1050, 4294901760
        %1963 = vmatpush.msra.mxu0 %v1962
        %v1964 = vand.u32 %v1042, 4294901760
        %1965 = vmatpush.msra.mxu0 %v1964
        %v1966 = vand.u32 %v1034, 4294901760
        %1967 = vmatpush.msra.mxu0 %v1966
        %v1968 = vand.u32 %v1026, 4294901760
        %1969 = vmatpush.msra.mxu0 %v1968
        %v1970 = vand.u32 %v1018, 4294901760
        %1971 = vmatpush.msra.mxu0 %v1970
        %v1972 = vand.u32 %v1010, 4294901760
        %1973 = vmatpush.msra.mxu0 %v1972
        %v1974 = vand.u32 %v1002, 4294901760
        %1975 = vmatpush.msra.mxu0 %v1974
        %v1976 = vand.u32 %v994, 4294901760
        %1977 = vmatpush.msra.mxu0 %v1976
        %v1978 = vand.u32 %v986, 4294901760
        %1979 = vmatpush.msra.mxu0 %v1978
        %v1980 = vand.u32 %v1063, 4294901760
        %v1981 = vsub.f32 %v1063, %v1980
        %v1982 = vand.u32 %v1981, 4294901760
        %1983 = vmatmul.f32.gmra.mxu0 %v1982
        %v1984 = vpop.f32.mrf.mxu0
        %v1985 = vadd.f32 %v1953, %v1984
        %1986 = vdwg.mxu0
        %1987 = vmatpush.msra.mxu0 0.0
        %1988 = vmatpush.msra.mxu0 0.0
        %1989 = vmatpush.msra.mxu0 0.0
        %1990 = vmatpush.msra.mxu0 0.0
        %1991 = vmatpush.msra.mxu0 0.0
        %1992 = vmatpush.msra.mxu0 0.0
        %1993 = vmatpush.msra.mxu0 0.0
        %v1994 = vand.u32 %v1050, 4294901760
        %v1995 = vsub.f32 %v1050, %v1994
        %v1996 = vand.u32 %v1995, 4294901760
        %1997 = vmatpush.msra.mxu0 %v1996
        %v1998 = vand.u32 %v1042, 4294901760
        %v1999 = vsub.f32 %v1042, %v1998
        %v2000 = vand.u32 %v1999, 4294901760
        %2001 = vmatpush.msra.mxu0 %v2000
        %v2002 = vand.u32 %v1034, 4294901760
        %v2003 = vsub.f32 %v1034, %v2002
        %v2004 = vand.u32 %v2003, 4294901760
        %2005 = vmatpush.msra.mxu0 %v2004
        %v2006 = vand.u32 %v1026, 4294901760
        %v2007 = vsub.f32 %v1026, %v2006
        %v2008 = vand.u32 %v2007, 4294901760
        %2009 = vmatpush.msra.mxu0 %v2008
        %v2010 = vand.u32 %v1018, 4294901760
        %v2011 = vsub.f32 %v1018, %v2010
        %v2012 = vand.u32 %v2011, 4294901760
        %2013 = vmatpush.msra.mxu0 %v2012
        %v2014 = vand.u32 %v1010, 4294901760
        %v2015 = vsub.f32 %v1010, %v2014
        %v2016 = vand.u32 %v2015, 4294901760
        %2017 = vmatpush.msra.mxu0 %v2016
        %v2018 = vand.u32 %v1002, 4294901760
        %v2019 = vsub.f32 %v1002, %v2018
        %v2020 = vand.u32 %v2019, 4294901760
        %2021 = vmatpush.msra.mxu0 %v2020
        %v2022 = vand.u32 %v994, 4294901760
        %v2023 = vsub.f32 %v994, %v2022
        %v2024 = vand.u32 %v2023, 4294901760
        %2025 = vmatpush.msra.mxu0 %v2024
        %v2026 = vand.u32 %v986, 4294901760
        %v2027 = vsub.f32 %v986, %v2026
        %v2028 = vand.u32 %v2027, 4294901760
        %2029 = vmatpush.msra.mxu0 %v2028
        %v2030 = vand.u32 %v1063, 4294901760
        %2031 = vmatmul.f32.gmra.mxu0 %v2030
        %v2032 = vpop.f32.mrf.mxu0
        %v2033 = vadd.f32 %v1985, %v2032
        %2034 = vdwg.mxu0
        %2035 = vmatpush.msra.mxu0 0.0
        %2036 = vmatpush.msra.mxu0 0.0
        %2037 = vmatpush.msra.mxu0 0.0
        %2038 = vmatpush.msra.mxu0 0.0
        %2039 = vmatpush.msra.mxu0 0.0
        %2040 = vmatpush.msra.mxu0 0.0
        %2041 = vmatpush.msra.mxu0 0.0
        %v2042 = vand.u32 %v1050, 4294901760
        %2043 = vmatpush.msra.mxu0 %v2042
        %v2044 = vand.u32 %v1042, 4294901760
        %2045 = vmatpush.msra.mxu0 %v2044
        %v2046 = vand.u32 %v1034, 4294901760
        %2047 = vmatpush.msra.mxu0 %v2046
        %v2048 = vand.u32 %v1026, 4294901760
        %2049 = vmatpush.msra.mxu0 %v2048
        %v2050 = vand.u32 %v1018, 4294901760
        %2051 = vmatpush.msra.mxu0 %v2050
        %v2052 = vand.u32 %v1010, 4294901760
        %2053 = vmatpush.msra.mxu0 %v2052
        %v2054 = vand.u32 %v1002, 4294901760
        %2055 = vmatpush.msra.mxu0 %v2054
        %v2056 = vand.u32 %v994, 4294901760
        %2057 = vmatpush.msra.mxu0 %v2056
        %v2058 = vand.u32 %v986, 4294901760
        %2059 = vmatpush.msra.mxu0 %v2058
        %v2060 = vand.u32 %v1063, 4294901760
        %2061 = vmatmul.f32.gmra.mxu0 %v2060
        %v2062 = vpop.f32.mrf.mxu0
        %v2063 = vadd.f32 %v2033, %v2062
        %2064 = vdwg.mxu0
        %2065 = vmatpush.msra.mxu0 0.0
        %2066 = vmatpush.msra.mxu0 0.0
        %2067 = vmatpush.msra.mxu0 0.0
        %2068 = vmatpush.msra.mxu0 0.0
        %2069 = vmatpush.msra.mxu0 0.0
        %2070 = vmatpush.msra.mxu0 0.0
        %2071 = vmatpush.msra.mxu0 0.0
        %v2072 = vand.u32 %v1051, 4294901760
        %2073 = vmatpush.msra.mxu0 %v2072
        %v2074 = vand.u32 %v1043, 4294901760
        %2075 = vmatpush.msra.mxu0 %v2074
        %v2076 = vand.u32 %v1035, 4294901760
        %2077 = vmatpush.msra.mxu0 %v2076
        %v2078 = vand.u32 %v1027, 4294901760
        %2079 = vmatpush.msra.mxu0 %v2078
        %v2080 = vand.u32 %v1019, 4294901760
        %2081 = vmatpush.msra.mxu0 %v2080
        %v2082 = vand.u32 %v1011, 4294901760
        %2083 = vmatpush.msra.mxu0 %v2082
        %v2084 = vand.u32 %v1003, 4294901760
        %2085 = vmatpush.msra.mxu0 %v2084
        %v2086 = vand.u32 %v995, 4294901760
        %2087 = vmatpush.msra.mxu0 %v2086
        %v2088 = vand.u32 %v987, 4294901760
        %2089 = vmatpush.msra.mxu0 %v2088
        %v2090 = vand.u32 %v1063, 4294901760
        %v2091 = vsub.f32 %v1063, %v2090
        %v2092 = vand.u32 %v2091, 4294901760
        %v2093 = vsub.f32 %v2091, %v2092
        %v2094 = vand.u32 %v2093, 4294901760
        %2095 = vmatmul.f32.gmra.mxu0 %v2094
        %v2096 = vpop.f32.mrf.mxu0
        %v2097 = vadd.f32 %v1059, %v2096
        %2098 = vdwg.mxu0
        %2099 = vmatpush.msra.mxu0 0.0
        %2100 = vmatpush.msra.mxu0 0.0
        %2101 = vmatpush.msra.mxu0 0.0
        %2102 = vmatpush.msra.mxu0 0.0
        %2103 = vmatpush.msra.mxu0 0.0
        %2104 = vmatpush.msra.mxu0 0.0
        %2105 = vmatpush.msra.mxu0 0.0
        %v2106 = vand.u32 %v1051, 4294901760
        %v2107 = vsub.f32 %v1051, %v2106
        %v2108 = vand.u32 %v2107, 4294901760
        %v2109 = vsub.f32 %v2107, %v2108
        %v2110 = vand.u32 %v2109, 4294901760
        %2111 = vmatpush.msra.mxu0 %v2110
        %v2112 = vand.u32 %v1043, 4294901760
        %v2113 = vsub.f32 %v1043, %v2112
        %v2114 = vand.u32 %v2113, 4294901760
        %v2115 = vsub.f32 %v2113, %v2114
        %v2116 = vand.u32 %v2115, 4294901760
        %2117 = vmatpush.msra.mxu0 %v2116
        %v2118 = vand.u32 %v1035, 4294901760
        %v2119 = vsub.f32 %v1035, %v2118
        %v2120 = vand.u32 %v2119, 4294901760
        %v2121 = vsub.f32 %v2119, %v2120
        %v2122 = vand.u32 %v2121, 4294901760
        %2123 = vmatpush.msra.mxu0 %v2122
        %v2124 = vand.u32 %v1027, 4294901760
        %v2125 = vsub.f32 %v1027, %v2124
        %v2126 = vand.u32 %v2125, 4294901760
        %v2127 = vsub.f32 %v2125, %v2126
        %v2128 = vand.u32 %v2127, 4294901760
        %2129 = vmatpush.msra.mxu0 %v2128
        %v2130 = vand.u32 %v1019, 4294901760
        %v2131 = vsub.f32 %v1019, %v2130
        %v2132 = vand.u32 %v2131, 4294901760
        %v2133 = vsub.f32 %v2131, %v2132
        %v2134 = vand.u32 %v2133, 4294901760
        %2135 = vmatpush.msra.mxu0 %v2134
        %v2136 = vand.u32 %v1011, 4294901760
        %v2137 = vsub.f32 %v1011, %v2136
        %v2138 = vand.u32 %v2137, 4294901760
        %v2139 = vsub.f32 %v2137, %v2138
        %v2140 = vand.u32 %v2139, 4294901760
        %2141 = vmatpush.msra.mxu0 %v2140
        %v2142 = vand.u32 %v1003, 4294901760
        %v2143 = vsub.f32 %v1003, %v2142
        %v2144 = vand.u32 %v2143, 4294901760
        %v2145 = vsub.f32 %v2143, %v2144
        %v2146 = vand.u32 %v2145, 4294901760
        %2147 = vmatpush.msra.mxu0 %v2146
        %v2148 = vand.u32 %v995, 4294901760
        %v2149 = vsub.f32 %v995, %v2148
        %v2150 = vand.u32 %v2149, 4294901760
        %v2151 = vsub.f32 %v2149, %v2150
        %v2152 = vand.u32 %v2151, 4294901760
        %2153 = vmatpush.msra.mxu0 %v2152
        %v2154 = vand.u32 %v987, 4294901760
        %v2155 = vsub.f32 %v987, %v2154
        %v2156 = vand.u32 %v2155, 4294901760
        %v2157 = vsub.f32 %v2155, %v2156
        %v2158 = vand.u32 %v2157, 4294901760
        %2159 = vmatpush.msra.mxu0 %v2158
        %v2160 = vand.u32 %v1063, 4294901760
        %2161 = vmatmul.f32.gmra.mxu0 %v2160
        %v2162 = vpop.f32.mrf.mxu0
        %v2163 = vadd.f32 %v2097, %v2162
        %2164 = vdwg.mxu0
        %2165 = vmatpush.msra.mxu0 0.0
        %2166 = vmatpush.msra.mxu0 0.0
        %2167 = vmatpush.msra.mxu0 0.0
        %2168 = vmatpush.msra.mxu0 0.0
        %2169 = vmatpush.msra.mxu0 0.0
        %2170 = vmatpush.msra.mxu0 0.0
        %2171 = vmatpush.msra.mxu0 0.0
        %v2172 = vand.u32 %v1051, 4294901760
        %v2173 = vsub.f32 %v1051, %v2172
        %2174 = vmatpush.msra.mxu0 %v2173
        %v2175 = vand.u32 %v1043, 4294901760
        %v2176 = vsub.f32 %v1043, %v2175
        %2177 = vmatpush.msra.mxu0 %v2176
        %v2178 = vand.u32 %v1035, 4294901760
        %v2179 = vsub.f32 %v1035, %v2178
        %2180 = vmatpush.msra.mxu0 %v2179
        %v2181 = vand.u32 %v1027, 4294901760
        %v2182 = vsub.f32 %v1027, %v2181
        %2183 = vmatpush.msra.mxu0 %v2182
        %v2184 = vand.u32 %v1019, 4294901760
        %v2185 = vsub.f32 %v1019, %v2184
        %2186 = vmatpush.msra.mxu0 %v2185
        %v2187 = vand.u32 %v1011, 4294901760
        %v2188 = vsub.f32 %v1011, %v2187
        %2189 = vmatpush.msra.mxu0 %v2188
        %v2190 = vand.u32 %v1003, 4294901760
        %v2191 = vsub.f32 %v1003, %v2190
        %2192 = vmatpush.msra.mxu0 %v2191
        %v2193 = vand.u32 %v995, 4294901760
        %v2194 = vsub.f32 %v995, %v2193
        %2195 = vmatpush.msra.mxu0 %v2194
        %v2196 = vand.u32 %v987, 4294901760
        %v2197 = vsub.f32 %v987, %v2196
        %2198 = vmatpush.msra.mxu0 %v2197
        %v2199 = vand.u32 %v1063, 4294901760
        %v2200 = vsub.f32 %v1063, %v2199
        %2201 = vmatmul.f32.gmra.mxu0 %v2200
        %v2202 = vpop.f32.mrf.mxu0
        %v2203 = vadd.f32 %v2163, %v2202
        %2204 = vdwg.mxu0
        %2205 = vmatpush.msra.mxu0 0.0
        %2206 = vmatpush.msra.mxu0 0.0
        %2207 = vmatpush.msra.mxu0 0.0
        %2208 = vmatpush.msra.mxu0 0.0
        %2209 = vmatpush.msra.mxu0 0.0
        %2210 = vmatpush.msra.mxu0 0.0
        %2211 = vmatpush.msra.mxu0 0.0
        %v2212 = vand.u32 %v1051, 4294901760
        %2213 = vmatpush.msra.mxu0 %v2212
        %v2214 = vand.u32 %v1043, 4294901760
        %2215 = vmatpush.msra.mxu0 %v2214
        %v2216 = vand.u32 %v1035, 4294901760
        %2217 = vmatpush.msra.mxu0 %v2216
        %v2218 = vand.u32 %v1027, 4294901760
        %2219 = vmatpush.msra.mxu0 %v2218
        %v2220 = vand.u32 %v1019, 4294901760
        %2221 = vmatpush.msra.mxu0 %v2220
        %v2222 = vand.u32 %v1011, 4294901760
        %2223 = vmatpush.msra.mxu0 %v2222
        %v2224 = vand.u32 %v1003, 4294901760
        %2225 = vmatpush.msra.mxu0 %v2224
        %v2226 = vand.u32 %v995, 4294901760
        %2227 = vmatpush.msra.mxu0 %v2226
        %v2228 = vand.u32 %v987, 4294901760
        %2229 = vmatpush.msra.mxu0 %v2228
        %v2230 = vand.u32 %v1063, 4294901760
        %v2231 = vsub.f32 %v1063, %v2230
        %v2232 = vand.u32 %v2231, 4294901760
        %2233 = vmatmul.f32.gmra.mxu0 %v2232
        %v2234 = vpop.f32.mrf.mxu0
        %v2235 = vadd.f32 %v2203, %v2234
        %2236 = vdwg.mxu0
        %2237 = vmatpush.msra.mxu0 0.0
        %2238 = vmatpush.msra.mxu0 0.0
        %2239 = vmatpush.msra.mxu0 0.0
        %2240 = vmatpush.msra.mxu0 0.0
        %2241 = vmatpush.msra.mxu0 0.0
        %2242 = vmatpush.msra.mxu0 0.0
        %2243 = vmatpush.msra.mxu0 0.0
        %v2244 = vand.u32 %v1051, 4294901760
        %v2245 = vsub.f32 %v1051, %v2244
        %v2246 = vand.u32 %v2245, 4294901760
        %2247 = vmatpush.msra.mxu0 %v2246
        %v2248 = vand.u32 %v1043, 4294901760
        %v2249 = vsub.f32 %v1043, %v2248
        %v2250 = vand.u32 %v2249, 4294901760
        %2251 = vmatpush.msra.mxu0 %v2250
        %v2252 = vand.u32 %v1035, 4294901760
        %v2253 = vsub.f32 %v1035, %v2252
        %v2254 = vand.u32 %v2253, 4294901760
        %2255 = vmatpush.msra.mxu0 %v2254
        %v2256 = vand.u32 %v1027, 4294901760
        %v2257 = vsub.f32 %v1027, %v2256
        %v2258 = vand.u32 %v2257, 4294901760
        %2259 = vmatpush.msra.mxu0 %v2258
        %v2260 = vand.u32 %v1019, 4294901760
        %v2261 = vsub.f32 %v1019, %v2260
        %v2262 = vand.u32 %v2261, 4294901760
        %2263 = vmatpush.msra.mxu0 %v2262
        %v2264 = vand.u32 %v1011, 4294901760
        %v2265 = vsub.f32 %v1011, %v2264
        %v2266 = vand.u32 %v2265, 4294901760
        %2267 = vmatpush.msra.mxu0 %v2266
        %v2268 = vand.u32 %v1003, 4294901760
        %v2269 = vsub.f32 %v1003, %v2268
        %v2270 = vand.u32 %v2269, 4294901760
        %2271 = vmatpush.msra.mxu0 %v2270
        %v2272 = vand.u32 %v995, 4294901760
        %v2273 = vsub.f32 %v995, %v2272
        %v2274 = vand.u32 %v2273, 4294901760
        %2275 = vmatpush.msra.mxu0 %v2274
        %v2276 = vand.u32 %v987, 4294901760
        %v2277 = vsub.f32 %v987, %v2276
        %v2278 = vand.u32 %v2277, 4294901760
        %2279 = vmatpush.msra.mxu0 %v2278
        %v2280 = vand.u32 %v1063, 4294901760
        %2281 = vmatmul.f32.gmra.mxu0 %v2280
        %v2282 = vpop.f32.mrf.mxu0
        %v2283 = vadd.f32 %v2235, %v2282
        %2284 = vdwg.mxu0
        %2285 = vmatpush.msra.mxu0 0.0
        %2286 = vmatpush.msra.mxu0 0.0
        %2287 = vmatpush.msra.mxu0 0.0
        %2288 = vmatpush.msra.mxu0 0.0
        %2289 = vmatpush.msra.mxu0 0.0
        %2290 = vmatpush.msra.mxu0 0.0
        %2291 = vmatpush.msra.mxu0 0.0
        %v2292 = vand.u32 %v1051, 4294901760
        %2293 = vmatpush.msra.mxu0 %v2292
        %v2294 = vand.u32 %v1043, 4294901760
        %2295 = vmatpush.msra.mxu0 %v2294
        %v2296 = vand.u32 %v1035, 4294901760
        %2297 = vmatpush.msra.mxu0 %v2296
        %v2298 = vand.u32 %v1027, 4294901760
        %2299 = vmatpush.msra.mxu0 %v2298
        %v2300 = vand.u32 %v1019, 4294901760
        %2301 = vmatpush.msra.mxu0 %v2300
        %v2302 = vand.u32 %v1011, 4294901760
        %2303 = vmatpush.msra.mxu0 %v2302
        %v2304 = vand.u32 %v1003, 4294901760
        %2305 = vmatpush.msra.mxu0 %v2304
        %v2306 = vand.u32 %v995, 4294901760
        %2307 = vmatpush.msra.mxu0 %v2306
        %v2308 = vand.u32 %v987, 4294901760
        %2309 = vmatpush.msra.mxu0 %v2308
        %v2310 = vand.u32 %v1063, 4294901760
        %2311 = vmatmul.f32.gmra.mxu0 %v2310
        %v2312 = vpop.f32.mrf.mxu0
        %v2313 = vadd.f32 %v2283, %v2312
        %2314 = vdwg.mxu0
        %2315 = vmatpush.msra.mxu0 0.0
        %2316 = vmatpush.msra.mxu0 0.0
        %2317 = vmatpush.msra.mxu0 0.0
        %2318 = vmatpush.msra.mxu0 0.0
        %2319 = vmatpush.msra.mxu0 0.0
        %2320 = vmatpush.msra.mxu0 0.0
        %2321 = vmatpush.msra.mxu0 0.0
        %v2322 = vand.u32 %v1052, 4294901760
        %2323 = vmatpush.msra.mxu0 %v2322
        %v2324 = vand.u32 %v1044, 4294901760
        %2325 = vmatpush.msra.mxu0 %v2324
        %v2326 = vand.u32 %v1036, 4294901760
        %2327 = vmatpush.msra.mxu0 %v2326
        %v2328 = vand.u32 %v1028, 4294901760
        %2329 = vmatpush.msra.mxu0 %v2328
        %v2330 = vand.u32 %v1020, 4294901760
        %2331 = vmatpush.msra.mxu0 %v2330
        %v2332 = vand.u32 %v1012, 4294901760
        %2333 = vmatpush.msra.mxu0 %v2332
        %v2334 = vand.u32 %v1004, 4294901760
        %2335 = vmatpush.msra.mxu0 %v2334
        %v2336 = vand.u32 %v996, 4294901760
        %2337 = vmatpush.msra.mxu0 %v2336
        %v2338 = vand.u32 %v988, 4294901760
        %2339 = vmatpush.msra.mxu0 %v2338
        %v2340 = vand.u32 %v1063, 4294901760
        %v2341 = vsub.f32 %v1063, %v2340
        %v2342 = vand.u32 %v2341, 4294901760
        %v2343 = vsub.f32 %v2341, %v2342
        %v2344 = vand.u32 %v2343, 4294901760
        %2345 = vmatmul.f32.gmra.mxu0 %v2344
        %v2346 = vpop.f32.mrf.mxu0
        %v2347 = vadd.f32 %v1059, %v2346
        %2348 = vdwg.mxu0
        %2349 = vmatpush.msra.mxu0 0.0
        %2350 = vmatpush.msra.mxu0 0.0
        %2351 = vmatpush.msra.mxu0 0.0
        %2352 = vmatpush.msra.mxu0 0.0
        %2353 = vmatpush.msra.mxu0 0.0
        %2354 = vmatpush.msra.mxu0 0.0
        %2355 = vmatpush.msra.mxu0 0.0
        %v2356 = vand.u32 %v1052, 4294901760
        %v2357 = vsub.f32 %v1052, %v2356
        %v2358 = vand.u32 %v2357, 4294901760
        %v2359 = vsub.f32 %v2357, %v2358
        %v2360 = vand.u32 %v2359, 4294901760
        %2361 = vmatpush.msra.mxu0 %v2360
        %v2362 = vand.u32 %v1044, 4294901760
        %v2363 = vsub.f32 %v1044, %v2362
        %v2364 = vand.u32 %v2363, 4294901760
        %v2365 = vsub.f32 %v2363, %v2364
        %v2366 = vand.u32 %v2365, 4294901760
        %2367 = vmatpush.msra.mxu0 %v2366
        %v2368 = vand.u32 %v1036, 4294901760
        %v2369 = vsub.f32 %v1036, %v2368
        %v2370 = vand.u32 %v2369, 4294901760
        %v2371 = vsub.f32 %v2369, %v2370
        %v2372 = vand.u32 %v2371, 4294901760
        %2373 = vmatpush.msra.mxu0 %v2372
        %v2374 = vand.u32 %v1028, 4294901760
        %v2375 = vsub.f32 %v1028, %v2374
        %v2376 = vand.u32 %v2375, 4294901760
        %v2377 = vsub.f32 %v2375, %v2376
        %v2378 = vand.u32 %v2377, 4294901760
        %2379 = vmatpush.msra.mxu0 %v2378
        %v2380 = vand.u32 %v1020, 4294901760
        %v2381 = vsub.f32 %v1020, %v2380
        %v2382 = vand.u32 %v2381, 4294901760
        %v2383 = vsub.f32 %v2381, %v2382
        %v2384 = vand.u32 %v2383, 4294901760
        %2385 = vmatpush.msra.mxu0 %v2384
        %v2386 = vand.u32 %v1012, 4294901760
        %v2387 = vsub.f32 %v1012, %v2386
        %v2388 = vand.u32 %v2387, 4294901760
        %v2389 = vsub.f32 %v2387, %v2388
        %v2390 = vand.u32 %v2389, 4294901760
        %2391 = vmatpush.msra.mxu0 %v2390
        %v2392 = vand.u32 %v1004, 4294901760
        %v2393 = vsub.f32 %v1004, %v2392
        %v2394 = vand.u32 %v2393, 4294901760
        %v2395 = vsub.f32 %v2393, %v2394
        %v2396 = vand.u32 %v2395, 4294901760
        %2397 = vmatpush.msra.mxu0 %v2396
        %v2398 = vand.u32 %v996, 4294901760
        %v2399 = vsub.f32 %v996, %v2398
        %v2400 = vand.u32 %v2399, 4294901760
        %v2401 = vsub.f32 %v2399, %v2400
        %v2402 = vand.u32 %v2401, 4294901760
        %2403 = vmatpush.msra.mxu0 %v2402
        %v2404 = vand.u32 %v988, 4294901760
        %v2405 = vsub.f32 %v988, %v2404
        %v2406 = vand.u32 %v2405, 4294901760
        %v2407 = vsub.f32 %v2405, %v2406
        %v2408 = vand.u32 %v2407, 4294901760
        %2409 = vmatpush.msra.mxu0 %v2408
        %v2410 = vand.u32 %v1063, 4294901760
        %2411 = vmatmul.f32.gmra.mxu0 %v2410
        %v2412 = vpop.f32.mrf.mxu0
        %v2413 = vadd.f32 %v2347, %v2412
        %2414 = vdwg.mxu0
        %2415 = vmatpush.msra.mxu0 0.0
        %2416 = vmatpush.msra.mxu0 0.0
        %2417 = vmatpush.msra.mxu0 0.0
        %2418 = vmatpush.msra.mxu0 0.0
        %2419 = vmatpush.msra.mxu0 0.0
        %2420 = vmatpush.msra.mxu0 0.0
        %2421 = vmatpush.msra.mxu0 0.0
        %v2422 = vand.u32 %v1052, 4294901760
        %v2423 = vsub.f32 %v1052, %v2422
        %2424 = vmatpush.msra.mxu0 %v2423
        %v2425 = vand.u32 %v1044, 4294901760
        %v2426 = vsub.f32 %v1044, %v2425
        %2427 = vmatpush.msra.mxu0 %v2426
        %v2428 = vand.u32 %v1036, 4294901760
        %v2429 = vsub.f32 %v1036, %v2428
        %2430 = vmatpush.msra.mxu0 %v2429
        %v2431 = vand.u32 %v1028, 4294901760
        %v2432 = vsub.f32 %v1028, %v2431
        %2433 = vmatpush.msra.mxu0 %v2432
        %v2434 = vand.u32 %v1020, 4294901760
        %v2435 = vsub.f32 %v1020, %v2434
        %2436 = vmatpush.msra.mxu0 %v2435
        %v2437 = vand.u32 %v1012, 4294901760
        %v2438 = vsub.f32 %v1012, %v2437
        %2439 = vmatpush.msra.mxu0 %v2438
        %v2440 = vand.u32 %v1004, 4294901760
        %v2441 = vsub.f32 %v1004, %v2440
        %2442 = vmatpush.msra.mxu0 %v2441
        %v2443 = vand.u32 %v996, 4294901760
        %v2444 = vsub.f32 %v996, %v2443
        %2445 = vmatpush.msra.mxu0 %v2444
        %v2446 = vand.u32 %v988, 4294901760
        %v2447 = vsub.f32 %v988, %v2446
        %2448 = vmatpush.msra.mxu0 %v2447
        %v2449 = vand.u32 %v1063, 4294901760
        %v2450 = vsub.f32 %v1063, %v2449
        %2451 = vmatmul.f32.gmra.mxu0 %v2450
        %v2452 = vpop.f32.mrf.mxu0
        %v2453 = vadd.f32 %v2413, %v2452
        %2454 = vdwg.mxu0
        %2455 = vmatpush.msra.mxu0 0.0
        %2456 = vmatpush.msra.mxu0 0.0
        %2457 = vmatpush.msra.mxu0 0.0
        %2458 = vmatpush.msra.mxu0 0.0
        %2459 = vmatpush.msra.mxu0 0.0
        %2460 = vmatpush.msra.mxu0 0.0
        %2461 = vmatpush.msra.mxu0 0.0
        %v2462 = vand.u32 %v1052, 4294901760
        %2463 = vmatpush.msra.mxu0 %v2462
        %v2464 = vand.u32 %v1044, 4294901760
        %2465 = vmatpush.msra.mxu0 %v2464
        %v2466 = vand.u32 %v1036, 4294901760
        %2467 = vmatpush.msra.mxu0 %v2466
        %v2468 = vand.u32 %v1028, 4294901760
        %2469 = vmatpush.msra.mxu0 %v2468
        %v2470 = vand.u32 %v1020, 4294901760
        %2471 = vmatpush.msra.mxu0 %v2470
        %v2472 = vand.u32 %v1012, 4294901760
        %2473 = vmatpush.msra.mxu0 %v2472
        %v2474 = vand.u32 %v1004, 4294901760
        %2475 = vmatpush.msra.mxu0 %v2474
        %v2476 = vand.u32 %v996, 4294901760
        %2477 = vmatpush.msra.mxu0 %v2476
        %v2478 = vand.u32 %v988, 4294901760
        %2479 = vmatpush.msra.mxu0 %v2478
        %v2480 = vand.u32 %v1063, 4294901760
        %v2481 = vsub.f32 %v1063, %v2480
        %v2482 = vand.u32 %v2481, 4294901760
        %2483 = vmatmul.f32.gmra.mxu0 %v2482
        %v2484 = vpop.f32.mrf.mxu0
        %v2485 = vadd.f32 %v2453, %v2484
        %2486 = vdwg.mxu0
        %2487 = vmatpush.msra.mxu0 0.0
        %2488 = vmatpush.msra.mxu0 0.0
        %2489 = vmatpush.msra.mxu0 0.0
        %2490 = vmatpush.msra.mxu0 0.0
        %2491 = vmatpush.msra.mxu0 0.0
        %2492 = vmatpush.msra.mxu0 0.0
        %2493 = vmatpush.msra.mxu0 0.0
        %v2494 = vand.u32 %v1052, 4294901760
        %v2495 = vsub.f32 %v1052, %v2494
        %v2496 = vand.u32 %v2495, 4294901760
        %2497 = vmatpush.msra.mxu0 %v2496
        %v2498 = vand.u32 %v1044, 4294901760
        %v2499 = vsub.f32 %v1044, %v2498
        %v2500 = vand.u32 %v2499, 4294901760
        %2501 = vmatpush.msra.mxu0 %v2500
        %v2502 = vand.u32 %v1036, 4294901760
        %v2503 = vsub.f32 %v1036, %v2502
        %v2504 = vand.u32 %v2503, 4294901760
        %2505 = vmatpush.msra.mxu0 %v2504
        %v2506 = vand.u32 %v1028, 4294901760
        %v2507 = vsub.f32 %v1028, %v2506
        %v2508 = vand.u32 %v2507, 4294901760
        %2509 = vmatpush.msra.mxu0 %v2508
        %v2510 = vand.u32 %v1020, 4294901760
        %v2511 = vsub.f32 %v1020, %v2510
        %v2512 = vand.u32 %v2511, 4294901760
        %2513 = vmatpush.msra.mxu0 %v2512
        %v2514 = vand.u32 %v1012, 4294901760
        %v2515 = vsub.f32 %v1012, %v2514
        %v2516 = vand.u32 %v2515, 4294901760
        %2517 = vmatpush.msra.mxu0 %v2516
        %v2518 = vand.u32 %v1004, 4294901760
        %v2519 = vsub.f32 %v1004, %v2518
        %v2520 = vand.u32 %v2519, 4294901760
        %2521 = vmatpush.msra.mxu0 %v2520
        %v2522 = vand.u32 %v996, 4294901760
        %v2523 = vsub.f32 %v996, %v2522
        %v2524 = vand.u32 %v2523, 4294901760
        %2525 = vmatpush.msra.mxu0 %v2524
        %v2526 = vand.u32 %v988, 4294901760
        %v2527 = vsub.f32 %v988, %v2526
        %v2528 = vand.u32 %v2527, 4294901760
        %2529 = vmatpush.msra.mxu0 %v2528
        %v2530 = vand.u32 %v1063, 4294901760
        %2531 = vmatmul.f32.gmra.mxu0 %v2530
        %v2532 = vpop.f32.mrf.mxu0
        %v2533 = vadd.f32 %v2485, %v2532
        %2534 = vdwg.mxu0
        %2535 = vmatpush.msra.mxu0 0.0
        %2536 = vmatpush.msra.mxu0 0.0
        %2537 = vmatpush.msra.mxu0 0.0
        %2538 = vmatpush.msra.mxu0 0.0
        %2539 = vmatpush.msra.mxu0 0.0
        %2540 = vmatpush.msra.mxu0 0.0
        %2541 = vmatpush.msra.mxu0 0.0
        %v2542 = vand.u32 %v1052, 4294901760
        %2543 = vmatpush.msra.mxu0 %v2542
        %v2544 = vand.u32 %v1044, 4294901760
        %2545 = vmatpush.msra.mxu0 %v2544
        %v2546 = vand.u32 %v1036, 4294901760
        %2547 = vmatpush.msra.mxu0 %v2546
        %v2548 = vand.u32 %v1028, 4294901760
        %2549 = vmatpush.msra.mxu0 %v2548
        %v2550 = vand.u32 %v1020, 4294901760
        %2551 = vmatpush.msra.mxu0 %v2550
        %v2552 = vand.u32 %v1012, 4294901760
        %2553 = vmatpush.msra.mxu0 %v2552
        %v2554 = vand.u32 %v1004, 4294901760
        %2555 = vmatpush.msra.mxu0 %v2554
        %v2556 = vand.u32 %v996, 4294901760
        %2557 = vmatpush.msra.mxu0 %v2556
        %v2558 = vand.u32 %v988, 4294901760
        %2559 = vmatpush.msra.mxu0 %v2558
        %v2560 = vand.u32 %v1063, 4294901760
        %2561 = vmatmul.f32.gmra.mxu0 %v2560
        %v2562 = vpop.f32.mrf.mxu0
        %v2563 = vadd.f32 %v2533, %v2562
        %2564 = vdwg.mxu0
        %2565 = vmatpush.msra.mxu0 0.0
        %2566 = vmatpush.msra.mxu0 0.0
        %2567 = vmatpush.msra.mxu0 0.0
        %2568 = vmatpush.msra.mxu0 0.0
        %2569 = vmatpush.msra.mxu0 0.0
        %2570 = vmatpush.msra.mxu0 0.0
        %2571 = vmatpush.msra.mxu0 0.0
        %v2572 = vand.u32 %v1053, 4294901760
        %2573 = vmatpush.msra.mxu0 %v2572
        %v2574 = vand.u32 %v1045, 4294901760
        %2575 = vmatpush.msra.mxu0 %v2574
        %v2576 = vand.u32 %v1037, 4294901760
        %2577 = vmatpush.msra.mxu0 %v2576
        %v2578 = vand.u32 %v1029, 4294901760
        %2579 = vmatpush.msra.mxu0 %v2578
        %v2580 = vand.u32 %v1021, 4294901760
        %2581 = vmatpush.msra.mxu0 %v2580
        %v2582 = vand.u32 %v1013, 4294901760
        %2583 = vmatpush.msra.mxu0 %v2582
        %v2584 = vand.u32 %v1005, 4294901760
        %2585 = vmatpush.msra.mxu0 %v2584
        %v2586 = vand.u32 %v997, 4294901760
        %2587 = vmatpush.msra.mxu0 %v2586
        %v2588 = vand.u32 %v989, 4294901760
        %2589 = vmatpush.msra.mxu0 %v2588
        %v2590 = vand.u32 %v1063, 4294901760
        %v2591 = vsub.f32 %v1063, %v2590
        %v2592 = vand.u32 %v2591, 4294901760
        %v2593 = vsub.f32 %v2591, %v2592
        %v2594 = vand.u32 %v2593, 4294901760
        %2595 = vmatmul.f32.gmra.mxu0 %v2594
        %v2596 = vpop.f32.mrf.mxu0
        %v2597 = vadd.f32 %v1059, %v2596
        %2598 = vdwg.mxu0
        %2599 = vmatpush.msra.mxu0 0.0
        %2600 = vmatpush.msra.mxu0 0.0
        %2601 = vmatpush.msra.mxu0 0.0
        %2602 = vmatpush.msra.mxu0 0.0
        %2603 = vmatpush.msra.mxu0 0.0
        %2604 = vmatpush.msra.mxu0 0.0
        %2605 = vmatpush.msra.mxu0 0.0
        %v2606 = vand.u32 %v1053, 4294901760
        %v2607 = vsub.f32 %v1053, %v2606
        %v2608 = vand.u32 %v2607, 4294901760
        %v2609 = vsub.f32 %v2607, %v2608
        %v2610 = vand.u32 %v2609, 4294901760
        %2611 = vmatpush.msra.mxu0 %v2610
        %v2612 = vand.u32 %v1045, 4294901760
        %v2613 = vsub.f32 %v1045, %v2612
        %v2614 = vand.u32 %v2613, 4294901760
        %v2615 = vsub.f32 %v2613, %v2614
        %v2616 = vand.u32 %v2615, 4294901760
        %2617 = vmatpush.msra.mxu0 %v2616
        %v2618 = vand.u32 %v1037, 4294901760
        %v2619 = vsub.f32 %v1037, %v2618
        %v2620 = vand.u32 %v2619, 4294901760
        %v2621 = vsub.f32 %v2619, %v2620
        %v2622 = vand.u32 %v2621, 4294901760
        %2623 = vmatpush.msra.mxu0 %v2622
        %v2624 = vand.u32 %v1029, 4294901760
        %v2625 = vsub.f32 %v1029, %v2624
        %v2626 = vand.u32 %v2625, 4294901760
        %v2627 = vsub.f32 %v2625, %v2626
        %v2628 = vand.u32 %v2627, 4294901760
        %2629 = vmatpush.msra.mxu0 %v2628
        %v2630 = vand.u32 %v1021, 4294901760
        %v2631 = vsub.f32 %v1021, %v2630
        %v2632 = vand.u32 %v2631, 4294901760
        %v2633 = vsub.f32 %v2631, %v2632
        %v2634 = vand.u32 %v2633, 4294901760
        %2635 = vmatpush.msra.mxu0 %v2634
        %v2636 = vand.u32 %v1013, 4294901760
        %v2637 = vsub.f32 %v1013, %v2636
        %v2638 = vand.u32 %v2637, 4294901760
        %v2639 = vsub.f32 %v2637, %v2638
        %v2640 = vand.u32 %v2639, 4294901760
        %2641 = vmatpush.msra.mxu0 %v2640
        %v2642 = vand.u32 %v1005, 4294901760
        %v2643 = vsub.f32 %v1005, %v2642
        %v2644 = vand.u32 %v2643, 4294901760
        %v2645 = vsub.f32 %v2643, %v2644
        %v2646 = vand.u32 %v2645, 4294901760
        %2647 = vmatpush.msra.mxu0 %v2646
        %v2648 = vand.u32 %v997, 4294901760
        %v2649 = vsub.f32 %v997, %v2648
        %v2650 = vand.u32 %v2649, 4294901760
        %v2651 = vsub.f32 %v2649, %v2650
        %v2652 = vand.u32 %v2651, 4294901760
        %2653 = vmatpush.msra.mxu0 %v2652
        %v2654 = vand.u32 %v989, 4294901760
        %v2655 = vsub.f32 %v989, %v2654
        %v2656 = vand.u32 %v2655, 4294901760
        %v2657 = vsub.f32 %v2655, %v2656
        %v2658 = vand.u32 %v2657, 4294901760
        %2659 = vmatpush.msra.mxu0 %v2658
        %v2660 = vand.u32 %v1063, 4294901760
        %2661 = vmatmul.f32.gmra.mxu0 %v2660
        %v2662 = vpop.f32.mrf.mxu0
        %v2663 = vadd.f32 %v2597, %v2662
        %2664 = vdwg.mxu0
        %2665 = vmatpush.msra.mxu0 0.0
        %2666 = vmatpush.msra.mxu0 0.0
        %2667 = vmatpush.msra.mxu0 0.0
        %2668 = vmatpush.msra.mxu0 0.0
        %2669 = vmatpush.msra.mxu0 0.0
        %2670 = vmatpush.msra.mxu0 0.0
        %2671 = vmatpush.msra.mxu0 0.0
        %v2672 = vand.u32 %v1053, 4294901760
        %v2673 = vsub.f32 %v1053, %v2672
        %2674 = vmatpush.msra.mxu0 %v2673
        %v2675 = vand.u32 %v1045, 4294901760
        %v2676 = vsub.f32 %v1045, %v2675
        %2677 = vmatpush.msra.mxu0 %v2676
        %v2678 = vand.u32 %v1037, 4294901760
        %v2679 = vsub.f32 %v1037, %v2678
        %2680 = vmatpush.msra.mxu0 %v2679
        %v2681 = vand.u32 %v1029, 4294901760
        %v2682 = vsub.f32 %v1029, %v2681
        %2683 = vmatpush.msra.mxu0 %v2682
        %v2684 = vand.u32 %v1021, 4294901760
        %v2685 = vsub.f32 %v1021, %v2684
        %2686 = vmatpush.msra.mxu0 %v2685
        %v2687 = vand.u32 %v1013, 4294901760
        %v2688 = vsub.f32 %v1013, %v2687
        %2689 = vmatpush.msra.mxu0 %v2688
        %v2690 = vand.u32 %v1005, 4294901760
        %v2691 = vsub.f32 %v1005, %v2690
        %2692 = vmatpush.msra.mxu0 %v2691
        %v2693 = vand.u32 %v997, 4294901760
        %v2694 = vsub.f32 %v997, %v2693
        %2695 = vmatpush.msra.mxu0 %v2694
        %v2696 = vand.u32 %v989, 4294901760
        %v2697 = vsub.f32 %v989, %v2696
        %2698 = vmatpush.msra.mxu0 %v2697
        %v2699 = vand.u32 %v1063, 4294901760
        %v2700 = vsub.f32 %v1063, %v2699
        %2701 = vmatmul.f32.gmra.mxu0 %v2700
        %v2702 = vpop.f32.mrf.mxu0
        %v2703 = vadd.f32 %v2663, %v2702
        %2704 = vdwg.mxu0
        %2705 = vmatpush.msra.mxu0 0.0
        %2706 = vmatpush.msra.mxu0 0.0
        %2707 = vmatpush.msra.mxu0 0.0
        %2708 = vmatpush.msra.mxu0 0.0
        %2709 = vmatpush.msra.mxu0 0.0
        %2710 = vmatpush.msra.mxu0 0.0
        %2711 = vmatpush.msra.mxu0 0.0
        %v2712 = vand.u32 %v1053, 4294901760
        %2713 = vmatpush.msra.mxu0 %v2712
        %v2714 = vand.u32 %v1045, 4294901760
        %2715 = vmatpush.msra.mxu0 %v2714
        %v2716 = vand.u32 %v1037, 4294901760
        %2717 = vmatpush.msra.mxu0 %v2716
        %v2718 = vand.u32 %v1029, 4294901760
        %2719 = vmatpush.msra.mxu0 %v2718
        %v2720 = vand.u32 %v1021, 4294901760
        %2721 = vmatpush.msra.mxu0 %v2720
        %v2722 = vand.u32 %v1013, 4294901760
        %2723 = vmatpush.msra.mxu0 %v2722
        %v2724 = vand.u32 %v1005, 4294901760
        %2725 = vmatpush.msra.mxu0 %v2724
        %v2726 = vand.u32 %v997, 4294901760
        %2727 = vmatpush.msra.mxu0 %v2726
        %v2728 = vand.u32 %v989, 4294901760
        %2729 = vmatpush.msra.mxu0 %v2728
        %v2730 = vand.u32 %v1063, 4294901760
        %v2731 = vsub.f32 %v1063, %v2730
        %v2732 = vand.u32 %v2731, 4294901760
        %2733 = vmatmul.f32.gmra.mxu0 %v2732
        %v2734 = vpop.f32.mrf.mxu0
        %v2735 = vadd.f32 %v2703, %v2734
        %2736 = vdwg.mxu0
        %2737 = vmatpush.msra.mxu0 0.0
        %2738 = vmatpush.msra.mxu0 0.0
        %2739 = vmatpush.msra.mxu0 0.0
        %2740 = vmatpush.msra.mxu0 0.0
        %2741 = vmatpush.msra.mxu0 0.0
        %2742 = vmatpush.msra.mxu0 0.0
        %2743 = vmatpush.msra.mxu0 0.0
        %v2744 = vand.u32 %v1053, 4294901760
        %v2745 = vsub.f32 %v1053, %v2744
        %v2746 = vand.u32 %v2745, 4294901760
        %2747 = vmatpush.msra.mxu0 %v2746
        %v2748 = vand.u32 %v1045, 4294901760
        %v2749 = vsub.f32 %v1045, %v2748
        %v2750 = vand.u32 %v2749, 4294901760
        %2751 = vmatpush.msra.mxu0 %v2750
        %v2752 = vand.u32 %v1037, 4294901760
        %v2753 = vsub.f32 %v1037, %v2752
        %v2754 = vand.u32 %v2753, 4294901760
        %2755 = vmatpush.msra.mxu0 %v2754
        %v2756 = vand.u32 %v1029, 4294901760
        %v2757 = vsub.f32 %v1029, %v2756
        %v2758 = vand.u32 %v2757, 4294901760
        %2759 = vmatpush.msra.mxu0 %v2758
        %v2760 = vand.u32 %v1021, 4294901760
        %v2761 = vsub.f32 %v1021, %v2760
        %v2762 = vand.u32 %v2761, 4294901760
        %2763 = vmatpush.msra.mxu0 %v2762
        %v2764 = vand.u32 %v1013, 4294901760
        %v2765 = vsub.f32 %v1013, %v2764
        %v2766 = vand.u32 %v2765, 4294901760
        %2767 = vmatpush.msra.mxu0 %v2766
        %v2768 = vand.u32 %v1005, 4294901760
        %v2769 = vsub.f32 %v1005, %v2768
        %v2770 = vand.u32 %v2769, 4294901760
        %2771 = vmatpush.msra.mxu0 %v2770
        %v2772 = vand.u32 %v997, 4294901760
        %v2773 = vsub.f32 %v997, %v2772
        %v2774 = vand.u32 %v2773, 4294901760
        %2775 = vmatpush.msra.mxu0 %v2774
        %v2776 = vand.u32 %v989, 4294901760
        %v2777 = vsub.f32 %v989, %v2776
        %v2778 = vand.u32 %v2777, 4294901760
        %2779 = vmatpush.msra.mxu0 %v2778
        %v2780 = vand.u32 %v1063, 4294901760
        %2781 = vmatmul.f32.gmra.mxu0 %v2780
        %v2782 = vpop.f32.mrf.mxu0
        %v2783 = vadd.f32 %v2735, %v2782
        %2784 = vdwg.mxu0
        %2785 = vmatpush.msra.mxu0 0.0
        %2786 = vmatpush.msra.mxu0 0.0
        %2787 = vmatpush.msra.mxu0 0.0
        %2788 = vmatpush.msra.mxu0 0.0
        %2789 = vmatpush.msra.mxu0 0.0
        %2790 = vmatpush.msra.mxu0 0.0
        %2791 = vmatpush.msra.mxu0 0.0
        %v2792 = vand.u32 %v1053, 4294901760
        %2793 = vmatpush.msra.mxu0 %v2792
        %v2794 = vand.u32 %v1045, 4294901760
        %2795 = vmatpush.msra.mxu0 %v2794
        %v2796 = vand.u32 %v1037, 4294901760
        %2797 = vmatpush.msra.mxu0 %v2796
        %v2798 = vand.u32 %v1029, 4294901760
        %2799 = vmatpush.msra.mxu0 %v2798
        %v2800 = vand.u32 %v1021, 4294901760
        %2801 = vmatpush.msra.mxu0 %v2800
        %v2802 = vand.u32 %v1013, 4294901760
        %2803 = vmatpush.msra.mxu0 %v2802
        %v2804 = vand.u32 %v1005, 4294901760
        %2805 = vmatpush.msra.mxu0 %v2804
        %v2806 = vand.u32 %v997, 4294901760
        %2807 = vmatpush.msra.mxu0 %v2806
        %v2808 = vand.u32 %v989, 4294901760
        %2809 = vmatpush.msra.mxu0 %v2808
        %v2810 = vand.u32 %v1063, 4294901760
        %2811 = vmatmul.f32.gmra.mxu0 %v2810
        %v2812 = vpop.f32.mrf.mxu0
        %v2813 = vadd.f32 %v2783, %v2812
        %2814 = vdwg.mxu0
        %2815 = vmatpush.msra.mxu0 0.0
        %2816 = vmatpush.msra.mxu0 0.0
        %2817 = vmatpush.msra.mxu0 0.0
        %2818 = vmatpush.msra.mxu0 0.0
        %2819 = vmatpush.msra.mxu0 0.0
        %2820 = vmatpush.msra.mxu0 0.0
        %2821 = vmatpush.msra.mxu0 0.0
        %v2822 = vand.u32 %v1054, 4294901760
        %2823 = vmatpush.msra.mxu0 %v2822
        %v2824 = vand.u32 %v1046, 4294901760
        %2825 = vmatpush.msra.mxu0 %v2824
        %v2826 = vand.u32 %v1038, 4294901760
        %2827 = vmatpush.msra.mxu0 %v2826
        %v2828 = vand.u32 %v1030, 4294901760
        %2829 = vmatpush.msra.mxu0 %v2828
        %v2830 = vand.u32 %v1022, 4294901760
        %2831 = vmatpush.msra.mxu0 %v2830
        %v2832 = vand.u32 %v1014, 4294901760
        %2833 = vmatpush.msra.mxu0 %v2832
        %v2834 = vand.u32 %v1006, 4294901760
        %2835 = vmatpush.msra.mxu0 %v2834
        %v2836 = vand.u32 %v998, 4294901760
        %2837 = vmatpush.msra.mxu0 %v2836
        %v2838 = vand.u32 %v990, 4294901760
        %2839 = vmatpush.msra.mxu0 %v2838
        %v2840 = vand.u32 %v1063, 4294901760
        %v2841 = vsub.f32 %v1063, %v2840
        %v2842 = vand.u32 %v2841, 4294901760
        %v2843 = vsub.f32 %v2841, %v2842
        %v2844 = vand.u32 %v2843, 4294901760
        %2845 = vmatmul.f32.gmra.mxu0 %v2844
        %v2846 = vpop.f32.mrf.mxu0
        %v2847 = vadd.f32 %v1059, %v2846
        %2848 = vdwg.mxu0
        %2849 = vmatpush.msra.mxu0 0.0
        %2850 = vmatpush.msra.mxu0 0.0
        %2851 = vmatpush.msra.mxu0 0.0
        %2852 = vmatpush.msra.mxu0 0.0
        %2853 = vmatpush.msra.mxu0 0.0
        %2854 = vmatpush.msra.mxu0 0.0
        %2855 = vmatpush.msra.mxu0 0.0
        %v2856 = vand.u32 %v1054, 4294901760
        %v2857 = vsub.f32 %v1054, %v2856
        %v2858 = vand.u32 %v2857, 4294901760
        %v2859 = vsub.f32 %v2857, %v2858
        %v2860 = vand.u32 %v2859, 4294901760
        %2861 = vmatpush.msra.mxu0 %v2860
        %v2862 = vand.u32 %v1046, 4294901760
        %v2863 = vsub.f32 %v1046, %v2862
        %v2864 = vand.u32 %v2863, 4294901760
        %v2865 = vsub.f32 %v2863, %v2864
        %v2866 = vand.u32 %v2865, 4294901760
        %2867 = vmatpush.msra.mxu0 %v2866
        %v2868 = vand.u32 %v1038, 4294901760
        %v2869 = vsub.f32 %v1038, %v2868
        %v2870 = vand.u32 %v2869, 4294901760
        %v2871 = vsub.f32 %v2869, %v2870
        %v2872 = vand.u32 %v2871, 4294901760
        %2873 = vmatpush.msra.mxu0 %v2872
        %v2874 = vand.u32 %v1030, 4294901760
        %v2875 = vsub.f32 %v1030, %v2874
        %v2876 = vand.u32 %v2875, 4294901760
        %v2877 = vsub.f32 %v2875, %v2876
        %v2878 = vand.u32 %v2877, 4294901760
        %2879 = vmatpush.msra.mxu0 %v2878
        %v2880 = vand.u32 %v1022, 4294901760
        %v2881 = vsub.f32 %v1022, %v2880
        %v2882 = vand.u32 %v2881, 4294901760
        %v2883 = vsub.f32 %v2881, %v2882
        %v2884 = vand.u32 %v2883, 4294901760
        %2885 = vmatpush.msra.mxu0 %v2884
        %v2886 = vand.u32 %v1014, 4294901760
        %v2887 = vsub.f32 %v1014, %v2886
        %v2888 = vand.u32 %v2887, 4294901760
        %v2889 = vsub.f32 %v2887, %v2888
        %v2890 = vand.u32 %v2889, 4294901760
        %2891 = vmatpush.msra.mxu0 %v2890
        %v2892 = vand.u32 %v1006, 4294901760
        %v2893 = vsub.f32 %v1006, %v2892
        %v2894 = vand.u32 %v2893, 4294901760
        %v2895 = vsub.f32 %v2893, %v2894
        %v2896 = vand.u32 %v2895, 4294901760
        %2897 = vmatpush.msra.mxu0 %v2896
        %v2898 = vand.u32 %v998, 4294901760
        %v2899 = vsub.f32 %v998, %v2898
        %v2900 = vand.u32 %v2899, 4294901760
        %v2901 = vsub.f32 %v2899, %v2900
        %v2902 = vand.u32 %v2901, 4294901760
        %2903 = vmatpush.msra.mxu0 %v2902
        %v2904 = vand.u32 %v990, 4294901760
        %v2905 = vsub.f32 %v990, %v2904
        %v2906 = vand.u32 %v2905, 4294901760
        %v2907 = vsub.f32 %v2905, %v2906
        %v2908 = vand.u32 %v2907, 4294901760
        %2909 = vmatpush.msra.mxu0 %v2908
        %v2910 = vand.u32 %v1063, 4294901760
        %2911 = vmatmul.f32.gmra.mxu0 %v2910
        %v2912 = vpop.f32.mrf.mxu0
        %v2913 = vadd.f32 %v2847, %v2912
        %2914 = vdwg.mxu0
        %2915 = vmatpush.msra.mxu0 0.0
        %2916 = vmatpush.msra.mxu0 0.0
        %2917 = vmatpush.msra.mxu0 0.0
        %2918 = vmatpush.msra.mxu0 0.0
        %2919 = vmatpush.msra.mxu0 0.0
        %2920 = vmatpush.msra.mxu0 0.0
        %2921 = vmatpush.msra.mxu0 0.0
        %v2922 = vand.u32 %v1054, 4294901760
        %v2923 = vsub.f32 %v1054, %v2922
        %2924 = vmatpush.msra.mxu0 %v2923
        %v2925 = vand.u32 %v1046, 4294901760
        %v2926 = vsub.f32 %v1046, %v2925
        %2927 = vmatpush.msra.mxu0 %v2926
        %v2928 = vand.u32 %v1038, 4294901760
        %v2929 = vsub.f32 %v1038, %v2928
        %2930 = vmatpush.msra.mxu0 %v2929
        %v2931 = vand.u32 %v1030, 4294901760
        %v2932 = vsub.f32 %v1030, %v2931
        %2933 = vmatpush.msra.mxu0 %v2932
        %v2934 = vand.u32 %v1022, 4294901760
        %v2935 = vsub.f32 %v1022, %v2934
        %2936 = vmatpush.msra.mxu0 %v2935
        %v2937 = vand.u32 %v1014, 4294901760
        %v2938 = vsub.f32 %v1014, %v2937
        %2939 = vmatpush.msra.mxu0 %v2938
        %v2940 = vand.u32 %v1006, 4294901760
        %v2941 = vsub.f32 %v1006, %v2940
        %2942 = vmatpush.msra.mxu0 %v2941
        %v2943 = vand.u32 %v998, 4294901760
        %v2944 = vsub.f32 %v998, %v2943
        %2945 = vmatpush.msra.mxu0 %v2944
        %v2946 = vand.u32 %v990, 4294901760
        %v2947 = vsub.f32 %v990, %v2946
        %2948 = vmatpush.msra.mxu0 %v2947
        %v2949 = vand.u32 %v1063, 4294901760
        %v2950 = vsub.f32 %v1063, %v2949
        %2951 = vmatmul.f32.gmra.mxu0 %v2950
        %v2952 = vpop.f32.mrf.mxu0
        %v2953 = vadd.f32 %v2913, %v2952
        %2954 = vdwg.mxu0
        %2955 = vmatpush.msra.mxu0 0.0
        %2956 = vmatpush.msra.mxu0 0.0
        %2957 = vmatpush.msra.mxu0 0.0
        %2958 = vmatpush.msra.mxu0 0.0
        %2959 = vmatpush.msra.mxu0 0.0
        %2960 = vmatpush.msra.mxu0 0.0
        %2961 = vmatpush.msra.mxu0 0.0
        %v2962 = vand.u32 %v1054, 4294901760
        %2963 = vmatpush.msra.mxu0 %v2962
        %v2964 = vand.u32 %v1046, 4294901760
        %2965 = vmatpush.msra.mxu0 %v2964
        %v2966 = vand.u32 %v1038, 4294901760
        %2967 = vmatpush.msra.mxu0 %v2966
        %v2968 = vand.u32 %v1030, 4294901760
        %2969 = vmatpush.msra.mxu0 %v2968
        %v2970 = vand.u32 %v1022, 4294901760
        %2971 = vmatpush.msra.mxu0 %v2970
        %v2972 = vand.u32 %v1014, 4294901760
        %2973 = vmatpush.msra.mxu0 %v2972
        %v2974 = vand.u32 %v1006, 4294901760
        %2975 = vmatpush.msra.mxu0 %v2974
        %v2976 = vand.u32 %v998, 4294901760
        %2977 = vmatpush.msra.mxu0 %v2976
        %v2978 = vand.u32 %v990, 4294901760
        %2979 = vmatpush.msra.mxu0 %v2978
        %v2980 = vand.u32 %v1063, 4294901760
        %v2981 = vsub.f32 %v1063, %v2980
        %v2982 = vand.u32 %v2981, 4294901760
        %2983 = vmatmul.f32.gmra.mxu0 %v2982
        %v2984 = vpop.f32.mrf.mxu0
        %v2985 = vadd.f32 %v2953, %v2984
        %2986 = vdwg.mxu0
        %2987 = vmatpush.msra.mxu0 0.0
        %2988 = vmatpush.msra.mxu0 0.0
        %2989 = vmatpush.msra.mxu0 0.0
        %2990 = vmatpush.msra.mxu0 0.0
        %2991 = vmatpush.msra.mxu0 0.0
        %2992 = vmatpush.msra.mxu0 0.0
        %2993 = vmatpush.msra.mxu0 0.0
        %v2994 = vand.u32 %v1054, 4294901760
        %v2995 = vsub.f32 %v1054, %v2994
        %v2996 = vand.u32 %v2995, 4294901760
        %2997 = vmatpush.msra.mxu0 %v2996
        %v2998 = vand.u32 %v1046, 4294901760
        %v2999 = vsub.f32 %v1046, %v2998
        %v3000 = vand.u32 %v2999, 4294901760
        %3001 = vmatpush.msra.mxu0 %v3000
        %v3002 = vand.u32 %v1038, 4294901760
        %v3003 = vsub.f32 %v1038, %v3002
        %v3004 = vand.u32 %v3003, 4294901760
        %3005 = vmatpush.msra.mxu0 %v3004
        %v3006 = vand.u32 %v1030, 4294901760
        %v3007 = vsub.f32 %v1030, %v3006
        %v3008 = vand.u32 %v3007, 4294901760
        %3009 = vmatpush.msra.mxu0 %v3008
        %v3010 = vand.u32 %v1022, 4294901760
        %v3011 = vsub.f32 %v1022, %v3010
        %v3012 = vand.u32 %v3011, 4294901760
        %3013 = vmatpush.msra.mxu0 %v3012
        %v3014 = vand.u32 %v1014, 4294901760
        %v3015 = vsub.f32 %v1014, %v3014
        %v3016 = vand.u32 %v3015, 4294901760
        %3017 = vmatpush.msra.mxu0 %v3016
        %v3018 = vand.u32 %v1006, 4294901760
        %v3019 = vsub.f32 %v1006, %v3018
        %v3020 = vand.u32 %v3019, 4294901760
        %3021 = vmatpush.msra.mxu0 %v3020
        %v3022 = vand.u32 %v998, 4294901760
        %v3023 = vsub.f32 %v998, %v3022
        %v3024 = vand.u32 %v3023, 4294901760
        %3025 = vmatpush.msra.mxu0 %v3024
        %v3026 = vand.u32 %v990, 4294901760
        %v3027 = vsub.f32 %v990, %v3026
        %v3028 = vand.u32 %v3027, 4294901760
        %3029 = vmatpush.msra.mxu0 %v3028
        %v3030 = vand.u32 %v1063, 4294901760
        %3031 = vmatmul.f32.gmra.mxu0 %v3030
        %v3032 = vpop.f32.mrf.mxu0
        %v3033 = vadd.f32 %v2985, %v3032
        %3034 = vdwg.mxu0
        %3035 = vmatpush.msra.mxu0 0.0
        %3036 = vmatpush.msra.mxu0 0.0
        %3037 = vmatpush.msra.mxu0 0.0
        %3038 = vmatpush.msra.mxu0 0.0
        %3039 = vmatpush.msra.mxu0 0.0
        %3040 = vmatpush.msra.mxu0 0.0
        %3041 = vmatpush.msra.mxu0 0.0
        %v3042 = vand.u32 %v1054, 4294901760
        %3043 = vmatpush.msra.mxu0 %v3042
        %v3044 = vand.u32 %v1046, 4294901760
        %3045 = vmatpush.msra.mxu0 %v3044
        %v3046 = vand.u32 %v1038, 4294901760
        %3047 = vmatpush.msra.mxu0 %v3046
        %v3048 = vand.u32 %v1030, 4294901760
        %3049 = vmatpush.msra.mxu0 %v3048
        %v3050 = vand.u32 %v1022, 4294901760
        %3051 = vmatpush.msra.mxu0 %v3050
        %v3052 = vand.u32 %v1014, 4294901760
        %3053 = vmatpush.msra.mxu0 %v3052
        %v3054 = vand.u32 %v1006, 4294901760
        %3055 = vmatpush.msra.mxu0 %v3054
        %v3056 = vand.u32 %v998, 4294901760
        %3057 = vmatpush.msra.mxu0 %v3056
        %v3058 = vand.u32 %v990, 4294901760
        %3059 = vmatpush.msra.mxu0 %v3058
        %v3060 = vand.u32 %v1063, 4294901760
        %3061 = vmatmul.f32.gmra.mxu0 %v3060
        %v3062 = vpop.f32.mrf.mxu0
        %v3063 = vadd.f32 %v3033, %v3062
        %3064 = vdwg.mxu0
        %v3065 = vmax.f32 %v1313, 0.0
        %v3066 = vmax.f32 %v1563, 0.0
        %v3067 = vmax.f32 %v1813, 0.0
        %v3068 = vmax.f32 %v2063, 0.0
        %v3069 = vmax.f32 %v2313, 0.0
        %v3070 = vmax.f32 %v2563, 0.0
        %v3071 = vmax.f32 %v2813, 0.0
        %v3072 = vmax.f32 %v3063, 0.0
        %3073 = vrot.lane.b32.xlu0 %v3065, 17
        %v3074 = vpop.permute.xlu0 %3073
        %3075 = vrot.lane.b32.xlu0 %v3066, 17
        %v3076 = vpop.permute.xlu0 %3075
        %3077 = vrot.lane.b32.xlu0 %v3067, 17
        %v3078 = vpop.permute.xlu0 %3077
        %3079 = vrot.lane.b32.xlu0 %v3068, 17
        %v3080 = vpop.permute.xlu0 %3079
        %3081 = vrot.lane.b32.xlu0 %v3069, 17
        %v3082 = vpop.permute.xlu0 %3081
        %3083 = vrot.lane.b32.xlu0 %v3070, 17
        %v3084 = vpop.permute.xlu0 %3083
        %3085 = vrot.lane.b32.xlu0 %v3071, 17
        %v3086 = vpop.permute.xlu0 %3085
        %3087 = vrot.lane.b32.xlu0 %v3072, 17
        %v3088 = vpop.permute.xlu0 %3087
        %v3089 = vsel %vm662, %v3086, %v3088
        %v3090 = vsel %vm662, %v3084, %v3086
        %v3091 = vsel %vm662, %v3082, %v3084
        %v3092 = vsel %vm662, %v3080, %v3082
        %v3093 = vsel %vm662, %v3078, %v3080
        %v3094 = vsel %vm662, %v3076, %v3078
        %v3095 = vsel %vm662, %v3074, %v3076
        %v3096 = vsel %vm662, %v3088, %v3074
        %v3097 = vmul.f32 %v3096, %v502
        %v3098 = vmul.f32 %v3095, %v503
        %v3099 = vmul.f32 %v3094, %v504
        %v3100 = vmul.f32 %v3093, %v505
        %v3101 = vmul.f32 %v3092, %v506
        %v3102 = vmul.f32 %v3091, %v507
        %v3103 = vmul.f32 %v3090, %v508
        %v3104 = vmul.f32 %v3089, %v509
        %3105 = vst [vmem:[#allocation2] sm:$0xff] %v3097
        %3106 = vst [vmem:[#allocation2 + $0x8] sm:$0xff] %v3098
        %3107 = vst [vmem:[#allocation2 + $0x10] sm:$0xff] %v3099
        %3108 = vst [vmem:[#allocation2 + $0x18] sm:$0xff] %v3100
        %3109 = vst [vmem:[#allocation2 + $0x20] sm:$0xff] %v3101
        %3110 = vst [vmem:[#allocation2 + $0x28] sm:$0xff] %v3102
        %3111 = vst [vmem:[#allocation2 + $0x30] sm:$0xff] %v3103
        %3112 = vst [vmem:[#allocation2 + $0x38] sm:$0xff] %v3104
        %3113 = vrot.lane.b32.xlu0 %v3065, 16
        %v3114 = vpop.permute.xlu0 %3113
        %3115 = vrot.lane.b32.xlu0 %v3066, 16
        %v3116 = vpop.permute.xlu0 %3115
        %3117 = vrot.lane.b32.xlu0 %v3067, 16
        %v3118 = vpop.permute.xlu0 %3117
        %3119 = vrot.lane.b32.xlu0 %v3068, 16
        %v3120 = vpop.permute.xlu0 %3119
        %3121 = vrot.lane.b32.xlu0 %v3069, 16
        %v3122 = vpop.permute.xlu0 %3121
        %3123 = vrot.lane.b32.xlu0 %v3070, 16
        %v3124 = vpop.permute.xlu0 %3123
        %3125 = vrot.lane.b32.xlu0 %v3071, 16
        %v3126 = vpop.permute.xlu0 %3125
        %3127 = vrot.lane.b32.xlu0 %v3072, 16
        %v3128 = vpop.permute.xlu0 %3127
        %v3129 = vsel %vm703, %v3126, %v3128
        %v3130 = vsel %vm703, %v3124, %v3126
        %v3131 = vsel %vm703, %v3122, %v3124
        %v3132 = vsel %vm703, %v3120, %v3122
        %v3133 = vsel %vm703, %v3118, %v3120
        %v3134 = vsel %vm703, %v3116, %v3118
        %v3135 = vsel %vm703, %v3114, %v3116
        %v3136 = vsel %vm703, %v3128, %v3114
        %v3137 = vmul.f32 %v3136, %v518
        %v3138 = vmul.f32 %v3135, %v519
        %v3139 = vmul.f32 %v3134, %v520
        %v3140 = vmul.f32 %v3133, %v521
        %v3141 = vmul.f32 %v3132, %v522
        %v3142 = vmul.f32 %v3131, %v523
        %v3143 = vmul.f32 %v3130, %v524
        %v3144 = vmul.f32 %v3129, %v525
        %3145 = vst [vmem:[#allocation2 + $0x40] sm:$0xff] %v3137
        %3146 = vst [vmem:[#allocation2 + $0x48] sm:$0xff] %v3138
        %3147 = vst [vmem:[#allocation2 + $0x50] sm:$0xff] %v3139
        %3148 = vst [vmem:[#allocation2 + $0x58] sm:$0xff] %v3140
        %3149 = vst [vmem:[#allocation2 + $0x60] sm:$0xff] %v3141
        %3150 = vst [vmem:[#allocation2 + $0x68] sm:$0xff] %v3142
        %3151 = vst [vmem:[#allocation2 + $0x70] sm:$0xff] %v3143
        %3152 = vst [vmem:[#allocation2 + $0x78] sm:$0xff] %v3144
        %3153 = vrot.lane.b32.xlu0 %v3065, 15
        %v3154 = vpop.permute.xlu0 %3153
        %3155 = vrot.lane.b32.xlu0 %v3066, 15
        %v3156 = vpop.permute.xlu0 %3155
        %3157 = vrot.lane.b32.xlu0 %v3067, 15
        %v3158 = vpop.permute.xlu0 %3157
        %3159 = vrot.lane.b32.xlu0 %v3068, 15
        %v3160 = vpop.permute.xlu0 %3159
        %3161 = vrot.lane.b32.xlu0 %v3069, 15
        %v3162 = vpop.permute.xlu0 %3161
        %3163 = vrot.lane.b32.xlu0 %v3070, 15
        %v3164 = vpop.permute.xlu0 %3163
        %3165 = vrot.lane.b32.xlu0 %v3071, 15
        %v3166 = vpop.permute.xlu0 %3165
        %3167 = vrot.lane.b32.xlu0 %v3072, 15
        %v3168 = vpop.permute.xlu0 %3167
        %v3169 = vsel %vm744, %v3166, %v3168
        %v3170 = vsel %vm744, %v3164, %v3166
        %v3171 = vsel %vm744, %v3162, %v3164
        %v3172 = vsel %vm744, %v3160, %v3162
        %v3173 = vsel %vm744, %v3158, %v3160
        %v3174 = vsel %vm744, %v3156, %v3158
        %v3175 = vsel %vm744, %v3154, %v3156
        %v3176 = vsel %vm744, %v3168, %v3154
        %v3177 = vmul.f32 %v3176, %v542
        %v3178 = vmul.f32 %v3175, %v543
        %v3179 = vmul.f32 %v3174, %v544
        %v3180 = vmul.f32 %v3173, %v545
        %v3181 = vmul.f32 %v3172, %v546
        %v3182 = vmul.f32 %v3171, %v547
        %v3183 = vmul.f32 %v3170, %v548
        %v3184 = vmul.f32 %v3169, %v549
        %3185 = vst [vmem:[#allocation2 + $0x80] sm:$0xff] %v3177
        %3186 = vst [vmem:[#allocation2 + $0x88] sm:$0xff] %v3178
        %3187 = vst [vmem:[#allocation2 + $0x90] sm:$0xff] %v3179
        %3188 = vst [vmem:[#allocation2 + $0x98] sm:$0xff] %v3180
        %3189 = vst [vmem:[#allocation2 + $0xa0] sm:$0xff] %v3181
        %3190 = vst [vmem:[#allocation2 + $0xa8] sm:$0xff] %v3182
        %3191 = vst [vmem:[#allocation2 + $0xb0] sm:$0xff] %v3183
        %3192 = vst [vmem:[#allocation2 + $0xb8] sm:$0xff] %v3184
        %3193 = vrot.lane.b32.xlu0 %v3065, 1
        %v3194 = vpop.permute.xlu0 %3193
        %3195 = vrot.lane.b32.xlu0 %v3066, 1
        %v3196 = vpop.permute.xlu0 %3195
        %3197 = vrot.lane.b32.xlu0 %v3067, 1
        %v3198 = vpop.permute.xlu0 %3197
        %3199 = vrot.lane.b32.xlu0 %v3068, 1
        %v3200 = vpop.permute.xlu0 %3199
        %3201 = vrot.lane.b32.xlu0 %v3069, 1
        %v3202 = vpop.permute.xlu0 %3201
        %3203 = vrot.lane.b32.xlu0 %v3070, 1
        %v3204 = vpop.permute.xlu0 %3203
        %3205 = vrot.lane.b32.xlu0 %v3071, 1
        %v3206 = vpop.permute.xlu0 %3205
        %3207 = vrot.lane.b32.xlu0 %v3072, 1
        %v3208 = vpop.permute.xlu0 %3207
        %v3209 = vsel %vm785, %v3206, %v3208
        %v3210 = vsel %vm785, %v3204, %v3206
        %v3211 = vsel %vm785, %v3202, %v3204
        %v3212 = vsel %vm785, %v3200, %v3202
        %v3213 = vsel %vm785, %v3198, %v3200
        %v3214 = vsel %vm785, %v3196, %v3198
        %v3215 = vsel %vm785, %v3194, %v3196
        %v3216 = vsel %vm785, %v3208, %v3194
        %v3217 = vmul.f32 %v3216, %v558
        %v3218 = vmul.f32 %v3215, %v559
        %v3219 = vmul.f32 %v3214, %v560
        %v3220 = vmul.f32 %v3213, %v561
        %v3221 = vmul.f32 %v3212, %v562
        %v3222 = vmul.f32 %v3211, %v563
        %v3223 = vmul.f32 %v3210, %v564
        %v3224 = vmul.f32 %v3209, %v565
        %3225 = vst [vmem:[#allocation2 + $0xc0] sm:$0xff] %v3217
        %3226 = vst [vmem:[#allocation2 + $0xc8] sm:$0xff] %v3218
        %3227 = vst [vmem:[#allocation2 + $0xd0] sm:$0xff] %v3219
        %3228 = vst [vmem:[#allocation2 + $0xd8] sm:$0xff] %v3220
        %3229 = vst [vmem:[#allocation2 + $0xe0] sm:$0xff] %v3221
        %3230 = vst [vmem:[#allocation2 + $0xe8] sm:$0xff] %v3222
        %3231 = vst [vmem:[#allocation2 + $0xf0] sm:$0xff] %v3223
        %3232 = vst [vmem:[#allocation2 + $0xf8] sm:$0xff] %v3224
        %3233 = vst [vmem:[#allocation2 + $0x100] sm:$0xff] %v3065
        %3234 = vst [vmem:[#allocation2 + $0x108] sm:$0xff] %v3066
        %3235 = vst [vmem:[#allocation2 + $0x110] sm:$0xff] %v3067
        %3236 = vst [vmem:[#allocation2 + $0x118] sm:$0xff] %v3068
        %3237 = vst [vmem:[#allocation2 + $0x120] sm:$0xff] %v3069
        %3238 = vst [vmem:[#allocation2 + $0x128] sm:$0xff] %v3070
        %3239 = vst [vmem:[#allocation2 + $0x130] sm:$0xff] %v3071
        %3240 = vst [vmem:[#allocation2 + $0x138] sm:$0xff] %v3072
        %3241 = vrot.lane.b32.xlu0 %v3065, 127
        %v3242 = vpop.permute.xlu0 %3241
        %3243 = vrot.lane.b32.xlu0 %v3066, 127
        %v3244 = vpop.permute.xlu0 %3243
        %3245 = vrot.lane.b32.xlu0 %v3067, 127
        %v3246 = vpop.permute.xlu0 %3245
        %3247 = vrot.lane.b32.xlu0 %v3068, 127
        %v3248 = vpop.permute.xlu0 %3247
        %3249 = vrot.lane.b32.xlu0 %v3069, 127
        %v3250 = vpop.permute.xlu0 %3249
        %3251 = vrot.lane.b32.xlu0 %v3070, 127
        %v3252 = vpop.permute.xlu0 %3251
        %3253 = vrot.lane.b32.xlu0 %v3071, 127
        %v3254 = vpop.permute.xlu0 %3253
        %3255 = vrot.lane.b32.xlu0 %v3072, 127
        %v3256 = vpop.permute.xlu0 %3255
        %v3257 = vsel %vm834, %v3254, %v3256
        %v3258 = vsel %vm834, %v3252, %v3254
        %v3259 = vsel %vm834, %v3250, %v3252
        %v3260 = vsel %vm834, %v3248, %v3250
        %v3261 = vsel %vm834, %v3246, %v3248
        %v3262 = vsel %vm834, %v3244, %v3246
        %v3263 = vsel %vm834, %v3242, %v3244
        %v3264 = vsel %vm834, %v3256, %v3242
        %v3265 = vmul.f32 %v3263, %v574
        %v3266 = vmul.f32 %v3262, %v575
        %v3267 = vmul.f32 %v3261, %v576
        %v3268 = vmul.f32 %v3260, %v577
        %v3269 = vmul.f32 %v3259, %v578
        %v3270 = vmul.f32 %v3258, %v579
        %v3271 = vmul.f32 %v3257, %v580
        %v3272 = vmul.f32 %v3264, %v581
        %3273 = vst [vmem:[#allocation2 + $0x140] sm:$0xff] %v3265
        %3274 = vst [vmem:[#allocation2 + $0x148] sm:$0xff] %v3266
        %3275 = vst [vmem:[#allocation2 + $0x150] sm:$0xff] %v3267
        %3276 = vst [vmem:[#allocation2 + $0x158] sm:$0xff] %v3268
        %3277 = vst [vmem:[#allocation2 + $0x160] sm:$0xff] %v3269
        %3278 = vst [vmem:[#allocation2 + $0x168] sm:$0xff] %v3270
        %3279 = vst [vmem:[#allocation2 + $0x170] sm:$0xff] %v3271
        %3280 = vst [vmem:[#allocation2 + $0x178] sm:$0xff] %v3272
        %3281 = vrot.lane.b32.xlu0 %v3065, 113
        %v3282 = vpop.permute.xlu0 %3281
        %3283 = vrot.lane.b32.xlu0 %v3066, 113
        %v3284 = vpop.permute.xlu0 %3283
        %3285 = vrot.lane.b32.xlu0 %v3067, 113
        %v3286 = vpop.permute.xlu0 %3285
        %3287 = vrot.lane.b32.xlu0 %v3068, 113
        %v3288 = vpop.permute.xlu0 %3287
        %3289 = vrot.lane.b32.xlu0 %v3069, 113
        %v3290 = vpop.permute.xlu0 %3289
        %3291 = vrot.lane.b32.xlu0 %v3070, 113
        %v3292 = vpop.permute.xlu0 %3291
        %3293 = vrot.lane.b32.xlu0 %v3071, 113
        %v3294 = vpop.permute.xlu0 %3293
        %3295 = vrot.lane.b32.xlu0 %v3072, 113
        %v3296 = vpop.permute.xlu0 %3295
        %v3297 = vsel %vm875, %v3294, %v3296
        %v3298 = vsel %vm875, %v3292, %v3294
        %v3299 = vsel %vm875, %v3290, %v3292
        %v3300 = vsel %vm875, %v3288, %v3290
        %v3301 = vsel %vm875, %v3286, %v3288
        %v3302 = vsel %vm875, %v3284, %v3286
        %v3303 = vsel %vm875, %v3282, %v3284
        %v3304 = vsel %vm875, %v3296, %v3282
        %v3305 = vmul.f32 %v3303, %v598
        %v3306 = vmul.f32 %v3302, %v599
        %v3307 = vmul.f32 %v3301, %v600
        %v3308 = vmul.f32 %v3300, %v601
        %v3309 = vmul.f32 %v3299, %v602
        %v3310 = vmul.f32 %v3298, %v603
        %v3311 = vmul.f32 %v3297, %v604
        %v3312 = vmul.f32 %v3304, %v605
        %3313 = vst [vmem:[#allocation2 + $0x180] sm:$0xff] %v3305
        %3314 = vst [vmem:[#allocation2 + $0x188] sm:$0xff] %v3306
        %3315 = vst [vmem:[#allocation2 + $0x190] sm:$0xff] %v3307
        %3316 = vst [vmem:[#allocation2 + $0x198] sm:$0xff] %v3308
        %3317 = vst [vmem:[#allocation2 + $0x1a0] sm:$0xff] %v3309
        %3318 = vst [vmem:[#allocation2 + $0x1a8] sm:$0xff] %v3310
        %3319 = vst [vmem:[#allocation2 + $0x1b0] sm:$0xff] %v3311
        %3320 = vst [vmem:[#allocation2 + $0x1b8] sm:$0xff] %v3312
        %3321 = vrot.lane.b32.xlu0 %v3065, 112
        %v3322 = vpop.permute.xlu0 %3321
        %3323 = vrot.lane.b32.xlu0 %v3066, 112
        %v3324 = vpop.permute.xlu0 %3323
        %3325 = vrot.lane.b32.xlu0 %v3067, 112
        %v3326 = vpop.permute.xlu0 %3325
        %3327 = vrot.lane.b32.xlu0 %v3068, 112
        %v3328 = vpop.permute.xlu0 %3327
        %3329 = vrot.lane.b32.xlu0 %v3069, 112
        %v3330 = vpop.permute.xlu0 %3329
        %3331 = vrot.lane.b32.xlu0 %v3070, 112
        %v3332 = vpop.permute.xlu0 %3331
        %3333 = vrot.lane.b32.xlu0 %v3071, 112
        %v3334 = vpop.permute.xlu0 %3333
        %3335 = vrot.lane.b32.xlu0 %v3072, 112
        %v3336 = vpop.permute.xlu0 %3335
        %v3337 = vsel %vm916, %v3334, %v3336
        %v3338 = vsel %vm916, %v3332, %v3334
        %v3339 = vsel %vm916, %v3330, %v3332
        %v3340 = vsel %vm916, %v3328, %v3330
        %v3341 = vsel %vm916, %v3326, %v3328
        %v3342 = vsel %vm916, %v3324, %v3326
        %v3343 = vsel %vm916, %v3322, %v3324
        %v3344 = vsel %vm916, %v3336, %v3322
        %v3345 = vmul.f32 %v3343, %v614
        %v3346 = vmul.f32 %v3342, %v615
        %v3347 = vmul.f32 %v3341, %v616
        %v3348 = vmul.f32 %v3340, %v617
        %v3349 = vmul.f32 %v3339, %v618
        %v3350 = vmul.f32 %v3338, %v619
        %v3351 = vmul.f32 %v3337, %v620
        %v3352 = vmul.f32 %v3344, %v621
        %3353 = vst [vmem:[#allocation2 + $0x1c0] sm:$0xff] %v3345
        %3354 = vst [vmem:[#allocation2 + $0x1c8] sm:$0xff] %v3346
        %3355 = vst [vmem:[#allocation2 + $0x1d0] sm:$0xff] %v3347
        %3356 = vst [vmem:[#allocation2 + $0x1d8] sm:$0xff] %v3348
        %3357 = vst [vmem:[#allocation2 + $0x1e0] sm:$0xff] %v3349
        %3358 = vst [vmem:[#allocation2 + $0x1e8] sm:$0xff] %v3350
        %3359 = vst [vmem:[#allocation2 + $0x1f0] sm:$0xff] %v3351
        %3360 = vst [vmem:[#allocation2 + $0x1f8] sm:$0xff] %v3352
        %3361 = vrot.lane.b32.xlu0 %v3065, 111
        %v3362 = vpop.permute.xlu0 %3361
        %3363 = vrot.lane.b32.xlu0 %v3066, 111
        %v3364 = vpop.permute.xlu0 %3363
        %3365 = vrot.lane.b32.xlu0 %v3067, 111
        %v3366 = vpop.permute.xlu0 %3365
        %3367 = vrot.lane.b32.xlu0 %v3068, 111
        %v3368 = vpop.permute.xlu0 %3367
        %3369 = vrot.lane.b32.xlu0 %v3069, 111
        %v3370 = vpop.permute.xlu0 %3369
        %3371 = vrot.lane.b32.xlu0 %v3070, 111
        %v3372 = vpop.permute.xlu0 %3371
        %3373 = vrot.lane.b32.xlu0 %v3071, 111
        %v3374 = vpop.permute.xlu0 %3373
        %3375 = vrot.lane.b32.xlu0 %v3072, 111
        %v3376 = vpop.permute.xlu0 %3375
        %v3377 = vsel %vm957, %v3374, %v3376
        %v3378 = vsel %vm957, %v3372, %v3374
        %v3379 = vsel %vm957, %v3370, %v3372
        %v3380 = vsel %vm957, %v3368, %v3370
        %v3381 = vsel %vm957, %v3366, %v3368
        %v3382 = vsel %vm957, %v3364, %v3366
        %v3383 = vsel %vm957, %v3362, %v3364
        %v3384 = vsel %vm957, %v3376, %v3362
        %v3385 = vmul.f32 %v3383, %v638
        %v3386 = vmul.f32 %v3382, %v639
        %v3387 = vmul.f32 %v3381, %v640
        %v3388 = vmul.f32 %v3380, %v641
        %v3389 = vmul.f32 %v3379, %v642
        %v3390 = vmul.f32 %v3378, %v643
        %v3391 = vmul.f32 %v3377, %v644
        %v3392 = vmul.f32 %v3384, %v645
        %3393 = vst [vmem:[#allocation2 + $0x200] sm:$0xff] %v3385
        %3394 = vst [vmem:[#allocation2 + $0x208] sm:$0xff] %v3386
        %3395 = vst [vmem:[#allocation2 + $0x210] sm:$0xff] %v3387
        %3396 = vst [vmem:[#allocation2 + $0x218] sm:$0xff] %v3388
        %3397 = vst [vmem:[#allocation2 + $0x220] sm:$0xff] %v3389
        %3398 = vst [vmem:[#allocation2 + $0x228] sm:$0xff] %v3390
        %3399 = vst [vmem:[#allocation2 + $0x230] sm:$0xff] %v3391
        %3400 = vst [vmem:[#allocation2 + $0x238] sm:$0xff] %v3392
        %v3401 = vld [vmem:[%s2] sm:$0xff]
        %v3402 = vld [vmem:[#allocation2] sm:$0xff]
        %v3403 = vld [vmem:[#allocation2 + $0x8] sm:$0xff]
        %v3404 = vld [vmem:[#allocation2 + $0x10] sm:$0xff]
        %v3405 = vld [vmem:[#allocation2 + $0x18] sm:$0xff]
        %v3406 = vld [vmem:[#allocation2 + $0x20] sm:$0xff]
        %v3407 = vld [vmem:[#allocation2 + $0x28] sm:$0xff]
        %v3408 = vld [vmem:[#allocation2 + $0x30] sm:$0xff]
        %v3409 = vld [vmem:[#allocation2 + $0x38] sm:$0xff]
        %v3410 = vld [vmem:[#allocation2 + $0x40] sm:$0xff]
        %v3411 = vld [vmem:[#allocation2 + $0x48] sm:$0xff]
        %v3412 = vld [vmem:[#allocation2 + $0x50] sm:$0xff]
        %v3413 = vld [vmem:[#allocation2 + $0x58] sm:$0xff]
        %v3414 = vld [vmem:[#allocation2 + $0x60] sm:$0xff]
        %v3415 = vld [vmem:[#allocation2 + $0x68] sm:$0xff]
        %v3416 = vld [vmem:[#allocation2 + $0x70] sm:$0xff]
        %v3417 = vld [vmem:[#allocation2 + $0x78] sm:$0xff]
        %v3418 = vld [vmem:[#allocation2 + $0x80] sm:$0xff]
        %v3419 = vld [vmem:[#allocation2 + $0x88] sm:$0xff]
        %v3420 = vld [vmem:[#allocation2 + $0x90] sm:$0xff]
        %v3421 = vld [vmem:[#allocation2 + $0x98] sm:$0xff]
        %v3422 = vld [vmem:[#allocation2 + $0xa0] sm:$0xff]
        %v3423 = vld [vmem:[#allocation2 + $0xa8] sm:$0xff]
        %v3424 = vld [vmem:[#allocation2 + $0xb0] sm:$0xff]
        %v3425 = vld [vmem:[#allocation2 + $0xb8] sm:$0xff]
        %v3426 = vld [vmem:[#allocation2 + $0xc0] sm:$0xff]
        %v3427 = vld [vmem:[#allocation2 + $0xc8] sm:$0xff]
        %v3428 = vld [vmem:[#allocation2 + $0xd0] sm:$0xff]
        %v3429 = vld [vmem:[#allocation2 + $0xd8] sm:$0xff]
        %v3430 = vld [vmem:[#allocation2 + $0xe0] sm:$0xff]
        %v3431 = vld [vmem:[#allocation2 + $0xe8] sm:$0xff]
        %v3432 = vld [vmem:[#allocation2 + $0xf0] sm:$0xff]
        %v3433 = vld [vmem:[#allocation2 + $0xf8] sm:$0xff]
        %v3434 = vld [vmem:[#allocation2 + $0x100] sm:$0xff]
        %v3435 = vld [vmem:[#allocation2 + $0x108] sm:$0xff]
        %v3436 = vld [vmem:[#allocation2 + $0x110] sm:$0xff]
        %v3437 = vld [vmem:[#allocation2 + $0x118] sm:$0xff]
        %v3438 = vld [vmem:[#allocation2 + $0x120] sm:$0xff]
        %v3439 = vld [vmem:[#allocation2 + $0x128] sm:$0xff]
        %v3440 = vld [vmem:[#allocation2 + $0x130] sm:$0xff]
        %v3441 = vld [vmem:[#allocation2 + $0x138] sm:$0xff]
        %v3442 = vld [vmem:[#allocation2 + $0x140] sm:$0xff]
        %v3443 = vld [vmem:[#allocation2 + $0x148] sm:$0xff]
        %v3444 = vld [vmem:[#allocation2 + $0x150] sm:$0xff]
        %v3445 = vld [vmem:[#allocation2 + $0x158] sm:$0xff]
        %v3446 = vld [vmem:[#allocation2 + $0x160] sm:$0xff]
        %v3447 = vld [vmem:[#allocation2 + $0x168] sm:$0xff]
        %v3448 = vld [vmem:[#allocation2 + $0x170] sm:$0xff]
        %v3449 = vld [vmem:[#allocation2 + $0x178] sm:$0xff]
        %v3450 = vld [vmem:[#allocation2 + $0x180] sm:$0xff]
        %v3451 = vld [vmem:[#allocation2 + $0x188] sm:$0xff]
        %v3452 = vld [vmem:[#allocation2 + $0x190] sm:$0xff]
        %v3453 = vld [vmem:[#allocation2 + $0x198] sm:$0xff]
        %v3454 = vld [vmem:[#allocation2 + $0x1a0] sm:$0xff]
        %v3455 = vld [vmem:[#allocation2 + $0x1a8] sm:$0xff]
        %v3456 = vld [vmem:[#allocation2 + $0x1b0] sm:$0xff]
        %v3457 = vld [vmem:[#allocation2 + $0x1b8] sm:$0xff]
        %v3458 = vld [vmem:[#allocation2 + $0x1c0] sm:$0xff]
        %v3459 = vld [vmem:[#allocation2 + $0x1c8] sm:$0xff]
        %v3460 = vld [vmem:[#allocation2 + $0x1d0] sm:$0xff]
        %v3461 = vld [vmem:[#allocation2 + $0x1d8] sm:$0xff]
        %v3462 = vld [vmem:[#allocation2 + $0x1e0] sm:$0xff]
        %v3463 = vld [vmem:[#allocation2 + $0x1e8] sm:$0xff]
        %v3464 = vld [vmem:[#allocation2 + $0x1f0] sm:$0xff]
        %v3465 = vld [vmem:[#allocation2 + $0x1f8] sm:$0xff]
        %v3466 = vld [vmem:[#allocation2 + $0x200] sm:$0xff]
        %v3467 = vld [vmem:[#allocation2 + $0x208] sm:$0xff]
        %v3468 = vld [vmem:[#allocation2 + $0x210] sm:$0xff]
        %v3469 = vld [vmem:[#allocation2 + $0x218] sm:$0xff]
        %v3470 = vld [vmem:[#allocation2 + $0x220] sm:$0xff]
        %v3471 = vld [vmem:[#allocation2 + $0x228] sm:$0xff]
        %v3472 = vld [vmem:[#allocation2 + $0x230] sm:$0xff]
        %v3473 = vld [vmem:[#allocation2 + $0x238] sm:$0xff]
        %v3474 = vld [vmem:[%s4] sm:$0xff]
        %3476 = vset.pattern.permute.xlu0 0
        %3477 = vperm.xlu0 %3476, %v3474
        %v3478 = vpop.permute.xlu0 %3477
        %v3481 = vsel %vm1061, %v3401, 0
        %3483 = vmatpush.msra.mxu0 0.0
        %3484 = vmatpush.msra.mxu0 0.0
        %3485 = vmatpush.msra.mxu0 0.0
        %3486 = vmatpush.msra.mxu0 0.0
        %3487 = vmatpush.msra.mxu0 0.0
        %3488 = vmatpush.msra.mxu0 0.0
        %3489 = vmatpush.msra.mxu0 0.0
        %v3490 = vand.u32 %v3466, 4294901760
        %3491 = vmatpush.msra.mxu0 %v3490
        %v3492 = vand.u32 %v3458, 4294901760
        %3493 = vmatpush.msra.mxu0 %v3492
        %v3494 = vand.u32 %v3450, 4294901760
        %3495 = vmatpush.msra.mxu0 %v3494
        %v3496 = vand.u32 %v3442, 4294901760
        %3497 = vmatpush.msra.mxu0 %v3496
        %v3498 = vand.u32 %v3434, 4294901760
        %3499 = vmatpush.msra.mxu0 %v3498
        %v3500 = vand.u32 %v3426, 4294901760
        %3501 = vmatpush.msra.mxu0 %v3500
        %v3502 = vand.u32 %v3418, 4294901760
        %3503 = vmatpush.msra.mxu0 %v3502
        %v3504 = vand.u32 %v3410, 4294901760
        %3505 = vmatpush.msra.mxu0 %v3504
        %v3506 = vand.u32 %v3402, 4294901760
        %3507 = vmatpush.msra.mxu0 %v3506
        %v3508 = vand.u32 %v3481, 4294901760
        %v3509 = vsub.f32 %v3481, %v3508
        %v3510 = vand.u32 %v3509, 4294901760
        %v3511 = vsub.f32 %v3509, %v3510
        %v3512 = vand.u32 %v3511, 4294901760
        %3513 = vmatmul.f32.gmra.mxu0 %v3512
        %v3514 = vpop.f32.mrf.mxu0
        %v3515 = vadd.f32 %v3478, %v3514
        %3516 = vdwg.mxu0
        %3517 = vmatpush.msra.mxu0 0.0
        %3518 = vmatpush.msra.mxu0 0.0
        %3519 = vmatpush.msra.mxu0 0.0
        %3520 = vmatpush.msra.mxu0 0.0
        %3521 = vmatpush.msra.mxu0 0.0
        %3522 = vmatpush.msra.mxu0 0.0
        %3523 = vmatpush.msra.mxu0 0.0
        %v3524 = vand.u32 %v3466, 4294901760
        %v3525 = vsub.f32 %v3466, %v3524
        %v3526 = vand.u32 %v3525, 4294901760
        %v3527 = vsub.f32 %v3525, %v3526
        %v3528 = vand.u32 %v3527, 4294901760
        %3529 = vmatpush.msra.mxu0 %v3528
        %v3530 = vand.u32 %v3458, 4294901760
        %v3531 = vsub.f32 %v3458, %v3530
        %v3532 = vand.u32 %v3531, 4294901760
        %v3533 = vsub.f32 %v3531, %v3532
        %v3534 = vand.u32 %v3533, 4294901760
        %3535 = vmatpush.msra.mxu0 %v3534
        %v3536 = vand.u32 %v3450, 4294901760
        %v3537 = vsub.f32 %v3450, %v3536
        %v3538 = vand.u32 %v3537, 4294901760
        %v3539 = vsub.f32 %v3537, %v3538
        %v3540 = vand.u32 %v3539, 4294901760
        %3541 = vmatpush.msra.mxu0 %v3540
        %v3542 = vand.u32 %v3442, 4294901760
        %v3543 = vsub.f32 %v3442, %v3542
        %v3544 = vand.u32 %v3543, 4294901760
        %v3545 = vsub.f32 %v3543, %v3544
        %v3546 = vand.u32 %v3545, 4294901760
        %3547 = vmatpush.msra.mxu0 %v3546
        %v3548 = vand.u32 %v3434, 4294901760
        %v3549 = vsub.f32 %v3434, %v3548
        %v3550 = vand.u32 %v3549, 4294901760
        %v3551 = vsub.f32 %v3549, %v3550
        %v3552 = vand.u32 %v3551, 4294901760
        %3553 = vmatpush.msra.mxu0 %v3552
        %v3554 = vand.u32 %v3426, 4294901760
        %v3555 = vsub.f32 %v3426, %v3554
        %v3556 = vand.u32 %v3555, 4294901760
        %v3557 = vsub.f32 %v3555, %v3556
        %v3558 = vand.u32 %v3557, 4294901760
        %3559 = vmatpush.msra.mxu0 %v3558
        %v3560 = vand.u32 %v3418, 4294901760
        %v3561 = vsub.f32 %v3418, %v3560
        %v3562 = vand.u32 %v3561, 4294901760
        %v3563 = vsub.f32 %v3561, %v3562
        %v3564 = vand.u32 %v3563, 4294901760
        %3565 = vmatpush.msra.mxu0 %v3564
        %v3566 = vand.u32 %v3410, 4294901760
        %v3567 = vsub.f32 %v3410, %v3566
        %v3568 = vand.u32 %v3567, 4294901760
        %v3569 = vsub.f32 %v3567, %v3568
        %v3570 = vand.u32 %v3569, 4294901760
        %3571 = vmatpush.msra.mxu0 %v3570
        %v3572 = vand.u32 %v3402, 4294901760
        %v3573 = vsub.f32 %v3402, %v3572
        %v3574 = vand.u32 %v3573, 4294901760
        %v3575 = vsub.f32 %v3573, %v3574
        %v3576 = vand.u32 %v3575, 4294901760
        %3577 = vmatpush.msra.mxu0 %v3576
        %v3578 = vand.u32 %v3481, 4294901760
        %3579 = vmatmul.f32.gmra.mxu0 %v3578
        %v3580 = vpop.f32.mrf.mxu0
        %v3581 = vadd.f32 %v3515, %v3580
        %3582 = vdwg.mxu0
        %3583 = vmatpush.msra.mxu0 0.0
        %3584 = vmatpush.msra.mxu0 0.0
        %3585 = vmatpush.msra.mxu0 0.0
        %3586 = vmatpush.msra.mxu0 0.0
        %3587 = vmatpush.msra.mxu0 0.0
        %3588 = vmatpush.msra.mxu0 0.0
        %3589 = vmatpush.msra.mxu0 0.0
        %v3590 = vand.u32 %v3466, 4294901760
        %v3591 = vsub.f32 %v3466, %v3590
        %3592 = vmatpush.msra.mxu0 %v3591
        %v3593 = vand.u32 %v3458, 4294901760
        %v3594 = vsub.f32 %v3458, %v3593
        %3595 = vmatpush.msra.mxu0 %v3594
        %v3596 = vand.u32 %v3450, 4294901760
        %v3597 = vsub.f32 %v3450, %v3596
        %3598 = vmatpush.msra.mxu0 %v3597
        %v3599 = vand.u32 %v3442, 4294901760
        %v3600 = vsub.f32 %v3442, %v3599
        %3601 = vmatpush.msra.mxu0 %v3600
        %v3602 = vand.u32 %v3434, 4294901760
        %v3603 = vsub.f32 %v3434, %v3602
        %3604 = vmatpush.msra.mxu0 %v3603
        %v3605 = vand.u32 %v3426, 4294901760
        %v3606 = vsub.f32 %v3426, %v3605
        %3607 = vmatpush.msra.mxu0 %v3606
        %v3608 = vand.u32 %v3418, 4294901760
        %v3609 = vsub.f32 %v3418, %v3608
        %3610 = vmatpush.msra.mxu0 %v3609
        %v3611 = vand.u32 %v3410, 4294901760
        %v3612 = vsub.f32 %v3410, %v3611
        %3613 = vmatpush.msra.mxu0 %v3612
        %v3614 = vand.u32 %v3402, 4294901760
        %v3615 = vsub.f32 %v3402, %v3614
        %3616 = vmatpush.msra.mxu0 %v3615
        %v3617 = vand.u32 %v3481, 4294901760
        %v3618 = vsub.f32 %v3481, %v3617
        %3619 = vmatmul.f32.gmra.mxu0 %v3618
        %v3620 = vpop.f32.mrf.mxu0
        %v3621 = vadd.f32 %v3581, %v3620
        %3622 = vdwg.mxu0
        %3623 = vmatpush.msra.mxu0 0.0
        %3624 = vmatpush.msra.mxu0 0.0
        %3625 = vmatpush.msra.mxu0 0.0
        %3626 = vmatpush.msra.mxu0 0.0
        %3627 = vmatpush.msra.mxu0 0.0
        %3628 = vmatpush.msra.mxu0 0.0
        %3629 = vmatpush.msra.mxu0 0.0
        %v3630 = vand.u32 %v3466, 4294901760
        %3631 = vmatpush.msra.mxu0 %v3630
        %v3632 = vand.u32 %v3458, 4294901760
        %3633 = vmatpush.msra.mxu0 %v3632
        %v3634 = vand.u32 %v3450, 4294901760
        %3635 = vmatpush.msra.mxu0 %v3634
        %v3636 = vand.u32 %v3442, 4294901760
        %3637 = vmatpush.msra.mxu0 %v3636
        %v3638 = vand.u32 %v3434, 4294901760
        %3639 = vmatpush.msra.mxu0 %v3638
        %v3640 = vand.u32 %v3426, 4294901760
        %3641 = vmatpush.msra.mxu0 %v3640
        %v3642 = vand.u32 %v3418, 4294901760
        %3643 = vmatpush.msra.mxu0 %v3642
        %v3644 = vand.u32 %v3410, 4294901760
        %3645 = vmatpush.msra.mxu0 %v3644
        %v3646 = vand.u32 %v3402, 4294901760
        %3647 = vmatpush.msra.mxu0 %v3646
        %v3648 = vand.u32 %v3481, 4294901760
        %v3649 = vsub.f32 %v3481, %v3648
        %v3650 = vand.u32 %v3649, 4294901760
        %3651 = vmatmul.f32.gmra.mxu0 %v3650
        %v3652 = vpop.f32.mrf.mxu0
        %v3653 = vadd.f32 %v3621, %v3652
        %3654 = vdwg.mxu0
        %3655 = vmatpush.msra.mxu0 0.0
        %3656 = vmatpush.msra.mxu0 0.0
        %3657 = vmatpush.msra.mxu0 0.0
        %3658 = vmatpush.msra.mxu0 0.0
        %3659 = vmatpush.msra.mxu0 0.0
        %3660 = vmatpush.msra.mxu0 0.0
        %3661 = vmatpush.msra.mxu0 0.0
        %v3662 = vand.u32 %v3466, 4294901760
        %v3663 = vsub.f32 %v3466, %v3662
        %v3664 = vand.u32 %v3663, 4294901760
        %3665 = vmatpush.msra.mxu0 %v3664
        %v3666 = vand.u32 %v3458, 4294901760
        %v3667 = vsub.f32 %v3458, %v3666
        %v3668 = vand.u32 %v3667, 4294901760
        %3669 = vmatpush.msra.mxu0 %v3668
        %v3670 = vand.u32 %v3450, 4294901760
        %v3671 = vsub.f32 %v3450, %v3670
        %v3672 = vand.u32 %v3671, 4294901760
        %3673 = vmatpush.msra.mxu0 %v3672
        %v3674 = vand.u32 %v3442, 4294901760
        %v3675 = vsub.f32 %v3442, %v3674
        %v3676 = vand.u32 %v3675, 4294901760
        %3677 = vmatpush.msra.mxu0 %v3676
        %v3678 = vand.u32 %v3434, 4294901760
        %v3679 = vsub.f32 %v3434, %v3678
        %v3680 = vand.u32 %v3679, 4294901760
        %3681 = vmatpush.msra.mxu0 %v3680
        %v3682 = vand.u32 %v3426, 4294901760
        %v3683 = vsub.f32 %v3426, %v3682
        %v3684 = vand.u32 %v3683, 4294901760
        %3685 = vmatpush.msra.mxu0 %v3684
        %v3686 = vand.u32 %v3418, 4294901760
        %v3687 = vsub.f32 %v3418, %v3686
        %v3688 = vand.u32 %v3687, 4294901760
        %3689 = vmatpush.msra.mxu0 %v3688
        %v3690 = vand.u32 %v3410, 4294901760
        %v3691 = vsub.f32 %v3410, %v3690
        %v3692 = vand.u32 %v3691, 4294901760
        %3693 = vmatpush.msra.mxu0 %v3692
        %v3694 = vand.u32 %v3402, 4294901760
        %v3695 = vsub.f32 %v3402, %v3694
        %v3696 = vand.u32 %v3695, 4294901760
        %3697 = vmatpush.msra.mxu0 %v3696
        %v3698 = vand.u32 %v3481, 4294901760
        %3699 = vmatmul.f32.gmra.mxu0 %v3698
        %v3700 = vpop.f32.mrf.mxu0
        %v3701 = vadd.f32 %v3653, %v3700
        %3702 = vdwg.mxu0
        %3703 = vmatpush.msra.mxu0 0.0
        %3704 = vmatpush.msra.mxu0 0.0
        %3705 = vmatpush.msra.mxu0 0.0
        %3706 = vmatpush.msra.mxu0 0.0
        %3707 = vmatpush.msra.mxu0 0.0
        %3708 = vmatpush.msra.mxu0 0.0
        %3709 = vmatpush.msra.mxu0 0.0
        %v3710 = vand.u32 %v3466, 4294901760
        %3711 = vmatpush.msra.mxu0 %v3710
        %v3712 = vand.u32 %v3458, 4294901760
        %3713 = vmatpush.msra.mxu0 %v3712
        %v3714 = vand.u32 %v3450, 4294901760
        %3715 = vmatpush.msra.mxu0 %v3714
        %v3716 = vand.u32 %v3442, 4294901760
        %3717 = vmatpush.msra.mxu0 %v3716
        %v3718 = vand.u32 %v3434, 4294901760
        %3719 = vmatpush.msra.mxu0 %v3718
        %v3720 = vand.u32 %v3426, 4294901760
        %3721 = vmatpush.msra.mxu0 %v3720
        %v3722 = vand.u32 %v3418, 4294901760
        %3723 = vmatpush.msra.mxu0 %v3722
        %v3724 = vand.u32 %v3410, 4294901760
        %3725 = vmatpush.msra.mxu0 %v3724
        %v3726 = vand.u32 %v3402, 4294901760
        %3727 = vmatpush.msra.mxu0 %v3726
        %v3728 = vand.u32 %v3481, 4294901760
        %3729 = vmatmul.f32.gmra.mxu0 %v3728
        %v3730 = vpop.f32.mrf.mxu0
        %v3731 = vadd.f32 %v3701, %v3730
        %3732 = vdwg.mxu0
        %3733 = vmatpush.msra.mxu0 0.0
        %3734 = vmatpush.msra.mxu0 0.0
        %3735 = vmatpush.msra.mxu0 0.0
        %3736 = vmatpush.msra.mxu0 0.0
        %3737 = vmatpush.msra.mxu0 0.0
        %3738 = vmatpush.msra.mxu0 0.0
        %3739 = vmatpush.msra.mxu0 0.0
        %v3740 = vand.u32 %v3467, 4294901760
        %3741 = vmatpush.msra.mxu0 %v3740
        %v3742 = vand.u32 %v3459, 4294901760
        %3743 = vmatpush.msra.mxu0 %v3742
        %v3744 = vand.u32 %v3451, 4294901760
        %3745 = vmatpush.msra.mxu0 %v3744
        %v3746 = vand.u32 %v3443, 4294901760
        %3747 = vmatpush.msra.mxu0 %v3746
        %v3748 = vand.u32 %v3435, 4294901760
        %3749 = vmatpush.msra.mxu0 %v3748
        %v3750 = vand.u32 %v3427, 4294901760
        %3751 = vmatpush.msra.mxu0 %v3750
        %v3752 = vand.u32 %v3419, 4294901760
        %3753 = vmatpush.msra.mxu0 %v3752
        %v3754 = vand.u32 %v3411, 4294901760
        %3755 = vmatpush.msra.mxu0 %v3754
        %v3756 = vand.u32 %v3403, 4294901760
        %3757 = vmatpush.msra.mxu0 %v3756
        %v3758 = vand.u32 %v3481, 4294901760
        %v3759 = vsub.f32 %v3481, %v3758
        %v3760 = vand.u32 %v3759, 4294901760
        %v3761 = vsub.f32 %v3759, %v3760
        %v3762 = vand.u32 %v3761, 4294901760
        %3763 = vmatmul.f32.gmra.mxu0 %v3762
        %v3764 = vpop.f32.mrf.mxu0
        %v3765 = vadd.f32 %v3478, %v3764
        %3766 = vdwg.mxu0
        %3767 = vmatpush.msra.mxu0 0.0
        %3768 = vmatpush.msra.mxu0 0.0
        %3769 = vmatpush.msra.mxu0 0.0
        %3770 = vmatpush.msra.mxu0 0.0
        %3771 = vmatpush.msra.mxu0 0.0
        %3772 = vmatpush.msra.mxu0 0.0
        %3773 = vmatpush.msra.mxu0 0.0
        %v3774 = vand.u32 %v3467, 4294901760
        %v3775 = vsub.f32 %v3467, %v3774
        %v3776 = vand.u32 %v3775, 4294901760
        %v3777 = vsub.f32 %v3775, %v3776
        %v3778 = vand.u32 %v3777, 4294901760
        %3779 = vmatpush.msra.mxu0 %v3778
        %v3780 = vand.u32 %v3459, 4294901760
        %v3781 = vsub.f32 %v3459, %v3780
        %v3782 = vand.u32 %v3781, 4294901760
        %v3783 = vsub.f32 %v3781, %v3782
        %v3784 = vand.u32 %v3783, 4294901760
        %3785 = vmatpush.msra.mxu0 %v3784
        %v3786 = vand.u32 %v3451, 4294901760
        %v3787 = vsub.f32 %v3451, %v3786
        %v3788 = vand.u32 %v3787, 4294901760
        %v3789 = vsub.f32 %v3787, %v3788
        %v3790 = vand.u32 %v3789, 4294901760
        %3791 = vmatpush.msra.mxu0 %v3790
        %v3792 = vand.u32 %v3443, 4294901760
        %v3793 = vsub.f32 %v3443, %v3792
        %v3794 = vand.u32 %v3793, 4294901760
        %v3795 = vsub.f32 %v3793, %v3794
        %v3796 = vand.u32 %v3795, 4294901760
        %3797 = vmatpush.msra.mxu0 %v3796
        %v3798 = vand.u32 %v3435, 4294901760
        %v3799 = vsub.f32 %v3435, %v3798
        %v3800 = vand.u32 %v3799, 4294901760
        %v3801 = vsub.f32 %v3799, %v3800
        %v3802 = vand.u32 %v3801, 4294901760
        %3803 = vmatpush.msra.mxu0 %v3802
        %v3804 = vand.u32 %v3427, 4294901760
        %v3805 = vsub.f32 %v3427, %v3804
        %v3806 = vand.u32 %v3805, 4294901760
        %v3807 = vsub.f32 %v3805, %v3806
        %v3808 = vand.u32 %v3807, 4294901760
        %3809 = vmatpush.msra.mxu0 %v3808
        %v3810 = vand.u32 %v3419, 4294901760
        %v3811 = vsub.f32 %v3419, %v3810
        %v3812 = vand.u32 %v3811, 4294901760
        %v3813 = vsub.f32 %v3811, %v3812
        %v3814 = vand.u32 %v3813, 4294901760
        %3815 = vmatpush.msra.mxu0 %v3814
        %v3816 = vand.u32 %v3411, 4294901760
        %v3817 = vsub.f32 %v3411, %v3816
        %v3818 = vand.u32 %v3817, 4294901760
        %v3819 = vsub.f32 %v3817, %v3818
        %v3820 = vand.u32 %v3819, 4294901760
        %3821 = vmatpush.msra.mxu0 %v3820
        %v3822 = vand.u32 %v3403, 4294901760
        %v3823 = vsub.f32 %v3403, %v3822
        %v3824 = vand.u32 %v3823, 4294901760
        %v3825 = vsub.f32 %v3823, %v3824
        %v3826 = vand.u32 %v3825, 4294901760
        %3827 = vmatpush.msra.mxu0 %v3826
        %v3828 = vand.u32 %v3481, 4294901760
        %3829 = vmatmul.f32.gmra.mxu0 %v3828
        %v3830 = vpop.f32.mrf.mxu0
        %v3831 = vadd.f32 %v3765, %v3830
        %3832 = vdwg.mxu0
        %3833 = vmatpush.msra.mxu0 0.0
        %3834 = vmatpush.msra.mxu0 0.0
        %3835 = vmatpush.msra.mxu0 0.0
        %3836 = vmatpush.msra.mxu0 0.0
        %3837 = vmatpush.msra.mxu0 0.0
        %3838 = vmatpush.msra.mxu0 0.0
        %3839 = vmatpush.msra.mxu0 0.0
        %v3840 = vand.u32 %v3467, 4294901760
        %v3841 = vsub.f32 %v3467, %v3840
        %3842 = vmatpush.msra.mxu0 %v3841
        %v3843 = vand.u32 %v3459, 4294901760
        %v3844 = vsub.f32 %v3459, %v3843
        %3845 = vmatpush.msra.mxu0 %v3844
        %v3846 = vand.u32 %v3451, 4294901760
        %v3847 = vsub.f32 %v3451, %v3846
        %3848 = vmatpush.msra.mxu0 %v3847
        %v3849 = vand.u32 %v3443, 4294901760
        %v3850 = vsub.f32 %v3443, %v3849
        %3851 = vmatpush.msra.mxu0 %v3850
        %v3852 = vand.u32 %v3435, 4294901760
        %v3853 = vsub.f32 %v3435, %v3852
        %3854 = vmatpush.msra.mxu0 %v3853
        %v3855 = vand.u32 %v3427, 4294901760
        %v3856 = vsub.f32 %v3427, %v3855
        %3857 = vmatpush.msra.mxu0 %v3856
        %v3858 = vand.u32 %v3419, 4294901760
        %v3859 = vsub.f32 %v3419, %v3858
        %3860 = vmatpush.msra.mxu0 %v3859
        %v3861 = vand.u32 %v3411, 4294901760
        %v3862 = vsub.f32 %v3411, %v3861
        %3863 = vmatpush.msra.mxu0 %v3862
        %v3864 = vand.u32 %v3403, 4294901760
        %v3865 = vsub.f32 %v3403, %v3864
        %3866 = vmatpush.msra.mxu0 %v3865
        %v3867 = vand.u32 %v3481, 4294901760
        %v3868 = vsub.f32 %v3481, %v3867
        %3869 = vmatmul.f32.gmra.mxu0 %v3868
        %v3870 = vpop.f32.mrf.mxu0
        %v3871 = vadd.f32 %v3831, %v3870
        %3872 = vdwg.mxu0
        %3873 = vmatpush.msra.mxu0 0.0
        %3874 = vmatpush.msra.mxu0 0.0
        %3875 = vmatpush.msra.mxu0 0.0
        %3876 = vmatpush.msra.mxu0 0.0
        %3877 = vmatpush.msra.mxu0 0.0
        %3878 = vmatpush.msra.mxu0 0.0
        %3879 = vmatpush.msra.mxu0 0.0
        %v3880 = vand.u32 %v3467, 4294901760
        %3881 = vmatpush.msra.mxu0 %v3880
        %v3882 = vand.u32 %v3459, 4294901760
        %3883 = vmatpush.msra.mxu0 %v3882
        %v3884 = vand.u32 %v3451, 4294901760
        %3885 = vmatpush.msra.mxu0 %v3884
        %v3886 = vand.u32 %v3443, 4294901760
        %3887 = vmatpush.msra.mxu0 %v3886
        %v3888 = vand.u32 %v3435, 4294901760
        %3889 = vmatpush.msra.mxu0 %v3888
        %v3890 = vand.u32 %v3427, 4294901760
        %3891 = vmatpush.msra.mxu0 %v3890
        %v3892 = vand.u32 %v3419, 4294901760
        %3893 = vmatpush.msra.mxu0 %v3892
        %v3894 = vand.u32 %v3411, 4294901760
        %3895 = vmatpush.msra.mxu0 %v3894
        %v3896 = vand.u32 %v3403, 4294901760
        %3897 = vmatpush.msra.mxu0 %v3896
        %v3898 = vand.u32 %v3481, 4294901760
        %v3899 = vsub.f32 %v3481, %v3898
        %v3900 = vand.u32 %v3899, 4294901760
        %3901 = vmatmul.f32.gmra.mxu0 %v3900
        %v3902 = vpop.f32.mrf.mxu0
        %v3903 = vadd.f32 %v3871, %v3902
        %3904 = vdwg.mxu0
        %3905 = vmatpush.msra.mxu0 0.0
        %3906 = vmatpush.msra.mxu0 0.0
        %3907 = vmatpush.msra.mxu0 0.0
        %3908 = vmatpush.msra.mxu0 0.0
        %3909 = vmatpush.msra.mxu0 0.0
        %3910 = vmatpush.msra.mxu0 0.0
        %3911 = vmatpush.msra.mxu0 0.0
        %v3912 = vand.u32 %v3467, 4294901760
        %v3913 = vsub.f32 %v3467, %v3912
        %v3914 = vand.u32 %v3913, 4294901760
        %3915 = vmatpush.msra.mxu0 %v3914
        %v3916 = vand.u32 %v3459, 4294901760
        %v3917 = vsub.f32 %v3459, %v3916
        %v3918 = vand.u32 %v3917, 4294901760
        %3919 = vmatpush.msra.mxu0 %v3918
        %v3920 = vand.u32 %v3451, 4294901760
        %v3921 = vsub.f32 %v3451, %v3920
        %v3922 = vand.u32 %v3921, 4294901760
        %3923 = vmatpush.msra.mxu0 %v3922
        %v3924 = vand.u32 %v3443, 4294901760
        %v3925 = vsub.f32 %v3443, %v3924
        %v3926 = vand.u32 %v3925, 4294901760
        %3927 = vmatpush.msra.mxu0 %v3926
        %v3928 = vand.u32 %v3435, 4294901760
        %v3929 = vsub.f32 %v3435, %v3928
        %v3930 = vand.u32 %v3929, 4294901760
        %3931 = vmatpush.msra.mxu0 %v3930
        %v3932 = vand.u32 %v3427, 4294901760
        %v3933 = vsub.f32 %v3427, %v3932
        %v3934 = vand.u32 %v3933, 4294901760
        %3935 = vmatpush.msra.mxu0 %v3934
        %v3936 = vand.u32 %v3419, 4294901760
        %v3937 = vsub.f32 %v3419, %v3936
        %v3938 = vand.u32 %v3937, 4294901760
        %3939 = vmatpush.msra.mxu0 %v3938
        %v3940 = vand.u32 %v3411, 4294901760
        %v3941 = vsub.f32 %v3411, %v3940
        %v3942 = vand.u32 %v3941, 4294901760
        %3943 = vmatpush.msra.mxu0 %v3942
        %v3944 = vand.u32 %v3403, 4294901760
        %v3945 = vsub.f32 %v3403, %v3944
        %v3946 = vand.u32 %v3945, 4294901760
        %3947 = vmatpush.msra.mxu0 %v3946
        %v3948 = vand.u32 %v3481, 4294901760
        %3949 = vmatmul.f32.gmra.mxu0 %v3948
        %v3950 = vpop.f32.mrf.mxu0
        %v3951 = vadd.f32 %v3903, %v3950
        %3952 = vdwg.mxu0
        %3953 = vmatpush.msra.mxu0 0.0
        %3954 = vmatpush.msra.mxu0 0.0
        %3955 = vmatpush.msra.mxu0 0.0
        %3956 = vmatpush.msra.mxu0 0.0
        %3957 = vmatpush.msra.mxu0 0.0
        %3958 = vmatpush.msra.mxu0 0.0
        %3959 = vmatpush.msra.mxu0 0.0
        %v3960 = vand.u32 %v3467, 4294901760
        %3961 = vmatpush.msra.mxu0 %v3960
        %v3962 = vand.u32 %v3459, 4294901760
        %3963 = vmatpush.msra.mxu0 %v3962
        %v3964 = vand.u32 %v3451, 4294901760
        %3965 = vmatpush.msra.mxu0 %v3964
        %v3966 = vand.u32 %v3443, 4294901760
        %3967 = vmatpush.msra.mxu0 %v3966
        %v3968 = vand.u32 %v3435, 4294901760
        %3969 = vmatpush.msra.mxu0 %v3968
        %v3970 = vand.u32 %v3427, 4294901760
        %3971 = vmatpush.msra.mxu0 %v3970
        %v3972 = vand.u32 %v3419, 4294901760
        %3973 = vmatpush.msra.mxu0 %v3972
        %v3974 = vand.u32 %v3411, 4294901760
        %3975 = vmatpush.msra.mxu0 %v3974
        %v3976 = vand.u32 %v3403, 4294901760
        %3977 = vmatpush.msra.mxu0 %v3976
        %v3978 = vand.u32 %v3481, 4294901760
        %3979 = vmatmul.f32.gmra.mxu0 %v3978
        %v3980 = vpop.f32.mrf.mxu0
        %v3981 = vadd.f32 %v3951, %v3980
        %3982 = vdwg.mxu0
        %3983 = vmatpush.msra.mxu0 0.0
        %3984 = vmatpush.msra.mxu0 0.0
        %3985 = vmatpush.msra.mxu0 0.0
        %3986 = vmatpush.msra.mxu0 0.0
        %3987 = vmatpush.msra.mxu0 0.0
        %3988 = vmatpush.msra.mxu0 0.0
        %3989 = vmatpush.msra.mxu0 0.0
        %v3990 = vand.u32 %v3468, 4294901760
        %3991 = vmatpush.msra.mxu0 %v3990
        %v3992 = vand.u32 %v3460, 4294901760
        %3993 = vmatpush.msra.mxu0 %v3992
        %v3994 = vand.u32 %v3452, 4294901760
        %3995 = vmatpush.msra.mxu0 %v3994
        %v3996 = vand.u32 %v3444, 4294901760
        %3997 = vmatpush.msra.mxu0 %v3996
        %v3998 = vand.u32 %v3436, 4294901760
        %3999 = vmatpush.msra.mxu0 %v3998
        %v4000 = vand.u32 %v3428, 4294901760
        %4001 = vmatpush.msra.mxu0 %v4000
        %v4002 = vand.u32 %v3420, 4294901760
        %4003 = vmatpush.msra.mxu0 %v4002
        %v4004 = vand.u32 %v3412, 4294901760
        %4005 = vmatpush.msra.mxu0 %v4004
        %v4006 = vand.u32 %v3404, 4294901760
        %4007 = vmatpush.msra.mxu0 %v4006
        %v4008 = vand.u32 %v3481, 4294901760
        %v4009 = vsub.f32 %v3481, %v4008
        %v4010 = vand.u32 %v4009, 4294901760
        %v4011 = vsub.f32 %v4009, %v4010
        %v4012 = vand.u32 %v4011, 4294901760
        %4013 = vmatmul.f32.gmra.mxu0 %v4012
        %v4014 = vpop.f32.mrf.mxu0
        %v4015 = vadd.f32 %v3478, %v4014
        %4016 = vdwg.mxu0
        %4017 = vmatpush.msra.mxu0 0.0
        %4018 = vmatpush.msra.mxu0 0.0
        %4019 = vmatpush.msra.mxu0 0.0
        %4020 = vmatpush.msra.mxu0 0.0
        %4021 = vmatpush.msra.mxu0 0.0
        %4022 = vmatpush.msra.mxu0 0.0
        %4023 = vmatpush.msra.mxu0 0.0
        %v4024 = vand.u32 %v3468, 4294901760
        %v4025 = vsub.f32 %v3468, %v4024
        %v4026 = vand.u32 %v4025, 4294901760
        %v4027 = vsub.f32 %v4025, %v4026
        %v4028 = vand.u32 %v4027, 4294901760
        %4029 = vmatpush.msra.mxu0 %v4028
        %v4030 = vand.u32 %v3460, 4294901760
        %v4031 = vsub.f32 %v3460, %v4030
        %v4032 = vand.u32 %v4031, 4294901760
        %v4033 = vsub.f32 %v4031, %v4032
        %v4034 = vand.u32 %v4033, 4294901760
        %4035 = vmatpush.msra.mxu0 %v4034
        %v4036 = vand.u32 %v3452, 4294901760
        %v4037 = vsub.f32 %v3452, %v4036
        %v4038 = vand.u32 %v4037, 4294901760
        %v4039 = vsub.f32 %v4037, %v4038
        %v4040 = vand.u32 %v4039, 4294901760
        %4041 = vmatpush.msra.mxu0 %v4040
        %v4042 = vand.u32 %v3444, 4294901760
        %v4043 = vsub.f32 %v3444, %v4042
        %v4044 = vand.u32 %v4043, 4294901760
        %v4045 = vsub.f32 %v4043, %v4044
        %v4046 = vand.u32 %v4045, 4294901760
        %4047 = vmatpush.msra.mxu0 %v4046
        %v4048 = vand.u32 %v3436, 4294901760
        %v4049 = vsub.f32 %v3436, %v4048
        %v4050 = vand.u32 %v4049, 4294901760
        %v4051 = vsub.f32 %v4049, %v4050
        %v4052 = vand.u32 %v4051, 4294901760
        %4053 = vmatpush.msra.mxu0 %v4052
        %v4054 = vand.u32 %v3428, 4294901760
        %v4055 = vsub.f32 %v3428, %v4054
        %v4056 = vand.u32 %v4055, 4294901760
        %v4057 = vsub.f32 %v4055, %v4056
        %v4058 = vand.u32 %v4057, 4294901760
        %4059 = vmatpush.msra.mxu0 %v4058
        %v4060 = vand.u32 %v3420, 4294901760
        %v4061 = vsub.f32 %v3420, %v4060
        %v4062 = vand.u32 %v4061, 4294901760
        %v4063 = vsub.f32 %v4061, %v4062
        %v4064 = vand.u32 %v4063, 4294901760
        %4065 = vmatpush.msra.mxu0 %v4064
        %v4066 = vand.u32 %v3412, 4294901760
        %v4067 = vsub.f32 %v3412, %v4066
        %v4068 = vand.u32 %v4067, 4294901760
        %v4069 = vsub.f32 %v4067, %v4068
        %v4070 = vand.u32 %v4069, 4294901760
        %4071 = vmatpush.msra.mxu0 %v4070
        %v4072 = vand.u32 %v3404, 4294901760
        %v4073 = vsub.f32 %v3404, %v4072
        %v4074 = vand.u32 %v4073, 4294901760
        %v4075 = vsub.f32 %v4073, %v4074
        %v4076 = vand.u32 %v4075, 4294901760
        %4077 = vmatpush.msra.mxu0 %v4076
        %v4078 = vand.u32 %v3481, 4294901760
        %4079 = vmatmul.f32.gmra.mxu0 %v4078
        %v4080 = vpop.f32.mrf.mxu0
        %v4081 = vadd.f32 %v4015, %v4080
        %4082 = vdwg.mxu0
        %4083 = vmatpush.msra.mxu0 0.0
        %4084 = vmatpush.msra.mxu0 0.0
        %4085 = vmatpush.msra.mxu0 0.0
        %4086 = vmatpush.msra.mxu0 0.0
        %4087 = vmatpush.msra.mxu0 0.0
        %4088 = vmatpush.msra.mxu0 0.0
        %4089 = vmatpush.msra.mxu0 0.0
        %v4090 = vand.u32 %v3468, 4294901760
        %v4091 = vsub.f32 %v3468, %v4090
        %4092 = vmatpush.msra.mxu0 %v4091
        %v4093 = vand.u32 %v3460, 4294901760
        %v4094 = vsub.f32 %v3460, %v4093
        %4095 = vmatpush.msra.mxu0 %v4094
        %v4096 = vand.u32 %v3452, 4294901760
        %v4097 = vsub.f32 %v3452, %v4096
        %4098 = vmatpush.msra.mxu0 %v4097
        %v4099 = vand.u32 %v3444, 4294901760
        %v4100 = vsub.f32 %v3444, %v4099
        %4101 = vmatpush.msra.mxu0 %v4100
        %v4102 = vand.u32 %v3436, 4294901760
        %v4103 = vsub.f32 %v3436, %v4102
        %4104 = vmatpush.msra.mxu0 %v4103
        %v4105 = vand.u32 %v3428, 4294901760
        %v4106 = vsub.f32 %v3428, %v4105
        %4107 = vmatpush.msra.mxu0 %v4106
        %v4108 = vand.u32 %v3420, 4294901760
        %v4109 = vsub.f32 %v3420, %v4108
        %4110 = vmatpush.msra.mxu0 %v4109
        %v4111 = vand.u32 %v3412, 4294901760
        %v4112 = vsub.f32 %v3412, %v4111
        %4113 = vmatpush.msra.mxu0 %v4112
        %v4114 = vand.u32 %v3404, 4294901760
        %v4115 = vsub.f32 %v3404, %v4114
        %4116 = vmatpush.msra.mxu0 %v4115
        %v4117 = vand.u32 %v3481, 4294901760
        %v4118 = vsub.f32 %v3481, %v4117
        %4119 = vmatmul.f32.gmra.mxu0 %v4118
        %v4120 = vpop.f32.mrf.mxu0
        %v4121 = vadd.f32 %v4081, %v4120
        %4122 = vdwg.mxu0
        %4123 = vmatpush.msra.mxu0 0.0
        %4124 = vmatpush.msra.mxu0 0.0
        %4125 = vmatpush.msra.mxu0 0.0
        %4126 = vmatpush.msra.mxu0 0.0
        %4127 = vmatpush.msra.mxu0 0.0
        %4128 = vmatpush.msra.mxu0 0.0
        %4129 = vmatpush.msra.mxu0 0.0
        %v4130 = vand.u32 %v3468, 4294901760
        %4131 = vmatpush.msra.mxu0 %v4130
        %v4132 = vand.u32 %v3460, 4294901760
        %4133 = vmatpush.msra.mxu0 %v4132
        %v4134 = vand.u32 %v3452, 4294901760
        %4135 = vmatpush.msra.mxu0 %v4134
        %v4136 = vand.u32 %v3444, 4294901760
        %4137 = vmatpush.msra.mxu0 %v4136
        %v4138 = vand.u32 %v3436, 4294901760
        %4139 = vmatpush.msra.mxu0 %v4138
        %v4140 = vand.u32 %v3428, 4294901760
        %4141 = vmatpush.msra.mxu0 %v4140
        %v4142 = vand.u32 %v3420, 4294901760
        %4143 = vmatpush.msra.mxu0 %v4142
        %v4144 = vand.u32 %v3412, 4294901760
        %4145 = vmatpush.msra.mxu0 %v4144
        %v4146 = vand.u32 %v3404, 4294901760
        %4147 = vmatpush.msra.mxu0 %v4146
        %v4148 = vand.u32 %v3481, 4294901760
        %v4149 = vsub.f32 %v3481, %v4148
        %v4150 = vand.u32 %v4149, 4294901760
        %4151 = vmatmul.f32.gmra.mxu0 %v4150
        %v4152 = vpop.f32.mrf.mxu0
        %v4153 = vadd.f32 %v4121, %v4152
        %4154 = vdwg.mxu0
        %4155 = vmatpush.msra.mxu0 0.0
        %4156 = vmatpush.msra.mxu0 0.0
        %4157 = vmatpush.msra.mxu0 0.0
        %4158 = vmatpush.msra.mxu0 0.0
        %4159 = vmatpush.msra.mxu0 0.0
        %4160 = vmatpush.msra.mxu0 0.0
        %4161 = vmatpush.msra.mxu0 0.0
        %v4162 = vand.u32 %v3468, 4294901760
        %v4163 = vsub.f32 %v3468, %v4162
        %v4164 = vand.u32 %v4163, 4294901760
        %4165 = vmatpush.msra.mxu0 %v4164
        %v4166 = vand.u32 %v3460, 4294901760
        %v4167 = vsub.f32 %v3460, %v4166
        %v4168 = vand.u32 %v4167, 4294901760
        %4169 = vmatpush.msra.mxu0 %v4168
        %v4170 = vand.u32 %v3452, 4294901760
        %v4171 = vsub.f32 %v3452, %v4170
        %v4172 = vand.u32 %v4171, 4294901760
        %4173 = vmatpush.msra.mxu0 %v4172
        %v4174 = vand.u32 %v3444, 4294901760
        %v4175 = vsub.f32 %v3444, %v4174
        %v4176 = vand.u32 %v4175, 4294901760
        %4177 = vmatpush.msra.mxu0 %v4176
        %v4178 = vand.u32 %v3436, 4294901760
        %v4179 = vsub.f32 %v3436, %v4178
        %v4180 = vand.u32 %v4179, 4294901760
        %4181 = vmatpush.msra.mxu0 %v4180
        %v4182 = vand.u32 %v3428, 4294901760
        %v4183 = vsub.f32 %v3428, %v4182
        %v4184 = vand.u32 %v4183, 4294901760
        %4185 = vmatpush.msra.mxu0 %v4184
        %v4186 = vand.u32 %v3420, 4294901760
        %v4187 = vsub.f32 %v3420, %v4186
        %v4188 = vand.u32 %v4187, 4294901760
        %4189 = vmatpush.msra.mxu0 %v4188
        %v4190 = vand.u32 %v3412, 4294901760
        %v4191 = vsub.f32 %v3412, %v4190
        %v4192 = vand.u32 %v4191, 4294901760
        %4193 = vmatpush.msra.mxu0 %v4192
        %v4194 = vand.u32 %v3404, 4294901760
        %v4195 = vsub.f32 %v3404, %v4194
        %v4196 = vand.u32 %v4195, 4294901760
        %4197 = vmatpush.msra.mxu0 %v4196
        %v4198 = vand.u32 %v3481, 4294901760
        %4199 = vmatmul.f32.gmra.mxu0 %v4198
        %v4200 = vpop.f32.mrf.mxu0
        %v4201 = vadd.f32 %v4153, %v4200
        %4202 = vdwg.mxu0
        %4203 = vmatpush.msra.mxu0 0.0
        %4204 = vmatpush.msra.mxu0 0.0
        %4205 = vmatpush.msra.mxu0 0.0
        %4206 = vmatpush.msra.mxu0 0.0
        %4207 = vmatpush.msra.mxu0 0.0
        %4208 = vmatpush.msra.mxu0 0.0
        %4209 = vmatpush.msra.mxu0 0.0
        %v4210 = vand.u32 %v3468, 4294901760
        %4211 = vmatpush.msra.mxu0 %v4210
        %v4212 = vand.u32 %v3460, 4294901760
        %4213 = vmatpush.msra.mxu0 %v4212
        %v4214 = vand.u32 %v3452, 4294901760
        %4215 = vmatpush.msra.mxu0 %v4214
        %v4216 = vand.u32 %v3444, 4294901760
        %4217 = vmatpush.msra.mxu0 %v4216
        %v4218 = vand.u32 %v3436, 4294901760
        %4219 = vmatpush.msra.mxu0 %v4218
        %v4220 = vand.u32 %v3428, 4294901760
        %4221 = vmatpush.msra.mxu0 %v4220
        %v4222 = vand.u32 %v3420, 4294901760
        %4223 = vmatpush.msra.mxu0 %v4222
        %v4224 = vand.u32 %v3412, 4294901760
        %4225 = vmatpush.msra.mxu0 %v4224
        %v4226 = vand.u32 %v3404, 4294901760
        %4227 = vmatpush.msra.mxu0 %v4226
        %v4228 = vand.u32 %v3481, 4294901760
        %4229 = vmatmul.f32.gmra.mxu0 %v4228
        %v4230 = vpop.f32.mrf.mxu0
        %v4231 = vadd.f32 %v4201, %v4230
        %4232 = vdwg.mxu0
        %4233 = vmatpush.msra.mxu0 0.0
        %4234 = vmatpush.msra.mxu0 0.0
        %4235 = vmatpush.msra.mxu0 0.0
        %4236 = vmatpush.msra.mxu0 0.0
        %4237 = vmatpush.msra.mxu0 0.0
        %4238 = vmatpush.msra.mxu0 0.0
        %4239 = vmatpush.msra.mxu0 0.0
        %v4240 = vand.u32 %v3469, 4294901760
        %4241 = vmatpush.msra.mxu0 %v4240
        %v4242 = vand.u32 %v3461, 4294901760
        %4243 = vmatpush.msra.mxu0 %v4242
        %v4244 = vand.u32 %v3453, 4294901760
        %4245 = vmatpush.msra.mxu0 %v4244
        %v4246 = vand.u32 %v3445, 4294901760
        %4247 = vmatpush.msra.mxu0 %v4246
        %v4248 = vand.u32 %v3437, 4294901760
        %4249 = vmatpush.msra.mxu0 %v4248
        %v4250 = vand.u32 %v3429, 4294901760
        %4251 = vmatpush.msra.mxu0 %v4250
        %v4252 = vand.u32 %v3421, 4294901760
        %4253 = vmatpush.msra.mxu0 %v4252
        %v4254 = vand.u32 %v3413, 4294901760
        %4255 = vmatpush.msra.mxu0 %v4254
        %v4256 = vand.u32 %v3405, 4294901760
        %4257 = vmatpush.msra.mxu0 %v4256
        %v4258 = vand.u32 %v3481, 4294901760
        %v4259 = vsub.f32 %v3481, %v4258
        %v4260 = vand.u32 %v4259, 4294901760
        %v4261 = vsub.f32 %v4259, %v4260
        %v4262 = vand.u32 %v4261, 4294901760
        %4263 = vmatmul.f32.gmra.mxu0 %v4262
        %v4264 = vpop.f32.mrf.mxu0
        %v4265 = vadd.f32 %v3478, %v4264
        %4266 = vdwg.mxu0
        %4267 = vmatpush.msra.mxu0 0.0
        %4268 = vmatpush.msra.mxu0 0.0
        %4269 = vmatpush.msra.mxu0 0.0
        %4270 = vmatpush.msra.mxu0 0.0
        %4271 = vmatpush.msra.mxu0 0.0
        %4272 = vmatpush.msra.mxu0 0.0
        %4273 = vmatpush.msra.mxu0 0.0
        %v4274 = vand.u32 %v3469, 4294901760
        %v4275 = vsub.f32 %v3469, %v4274
        %v4276 = vand.u32 %v4275, 4294901760
        %v4277 = vsub.f32 %v4275, %v4276
        %v4278 = vand.u32 %v4277, 4294901760
        %4279 = vmatpush.msra.mxu0 %v4278
        %v4280 = vand.u32 %v3461, 4294901760
        %v4281 = vsub.f32 %v3461, %v4280
        %v4282 = vand.u32 %v4281, 4294901760
        %v4283 = vsub.f32 %v4281, %v4282
        %v4284 = vand.u32 %v4283, 4294901760
        %4285 = vmatpush.msra.mxu0 %v4284
        %v4286 = vand.u32 %v3453, 4294901760
        %v4287 = vsub.f32 %v3453, %v4286
        %v4288 = vand.u32 %v4287, 4294901760
        %v4289 = vsub.f32 %v4287, %v4288
        %v4290 = vand.u32 %v4289, 4294901760
        %4291 = vmatpush.msra.mxu0 %v4290
        %v4292 = vand.u32 %v3445, 4294901760
        %v4293 = vsub.f32 %v3445, %v4292
        %v4294 = vand.u32 %v4293, 4294901760
        %v4295 = vsub.f32 %v4293, %v4294
        %v4296 = vand.u32 %v4295, 4294901760
        %4297 = vmatpush.msra.mxu0 %v4296
        %v4298 = vand.u32 %v3437, 4294901760
        %v4299 = vsub.f32 %v3437, %v4298
        %v4300 = vand.u32 %v4299, 4294901760
        %v4301 = vsub.f32 %v4299, %v4300
        %v4302 = vand.u32 %v4301, 4294901760
        %4303 = vmatpush.msra.mxu0 %v4302
        %v4304 = vand.u32 %v3429, 4294901760
        %v4305 = vsub.f32 %v3429, %v4304
        %v4306 = vand.u32 %v4305, 4294901760
        %v4307 = vsub.f32 %v4305, %v4306
        %v4308 = vand.u32 %v4307, 4294901760
        %4309 = vmatpush.msra.mxu0 %v4308
        %v4310 = vand.u32 %v3421, 4294901760
        %v4311 = vsub.f32 %v3421, %v4310
        %v4312 = vand.u32 %v4311, 4294901760
        %v4313 = vsub.f32 %v4311, %v4312
        %v4314 = vand.u32 %v4313, 4294901760
        %4315 = vmatpush.msra.mxu0 %v4314
        %v4316 = vand.u32 %v3413, 4294901760
        %v4317 = vsub.f32 %v3413, %v4316
        %v4318 = vand.u32 %v4317, 4294901760
        %v4319 = vsub.f32 %v4317, %v4318
        %v4320 = vand.u32 %v4319, 4294901760
        %4321 = vmatpush.msra.mxu0 %v4320
        %v4322 = vand.u32 %v3405, 4294901760
        %v4323 = vsub.f32 %v3405, %v4322
        %v4324 = vand.u32 %v4323, 4294901760
        %v4325 = vsub.f32 %v4323, %v4324
        %v4326 = vand.u32 %v4325, 4294901760
        %4327 = vmatpush.msra.mxu0 %v4326
        %v4328 = vand.u32 %v3481, 4294901760
        %4329 = vmatmul.f32.gmra.mxu0 %v4328
        %v4330 = vpop.f32.mrf.mxu0
        %v4331 = vadd.f32 %v4265, %v4330
        %4332 = vdwg.mxu0
        %4333 = vmatpush.msra.mxu0 0.0
        %4334 = vmatpush.msra.mxu0 0.0
        %4335 = vmatpush.msra.mxu0 0.0
        %4336 = vmatpush.msra.mxu0 0.0
        %4337 = vmatpush.msra.mxu0 0.0
        %4338 = vmatpush.msra.mxu0 0.0
        %4339 = vmatpush.msra.mxu0 0.0
        %v4340 = vand.u32 %v3469, 4294901760
        %v4341 = vsub.f32 %v3469, %v4340
        %4342 = vmatpush.msra.mxu0 %v4341
        %v4343 = vand.u32 %v3461, 4294901760
        %v4344 = vsub.f32 %v3461, %v4343
        %4345 = vmatpush.msra.mxu0 %v4344
        %v4346 = vand.u32 %v3453, 4294901760
        %v4347 = vsub.f32 %v3453, %v4346
        %4348 = vmatpush.msra.mxu0 %v4347
        %v4349 = vand.u32 %v3445, 4294901760
        %v4350 = vsub.f32 %v3445, %v4349
        %4351 = vmatpush.msra.mxu0 %v4350
        %v4352 = vand.u32 %v3437, 4294901760
        %v4353 = vsub.f32 %v3437, %v4352
        %4354 = vmatpush.msra.mxu0 %v4353
        %v4355 = vand.u32 %v3429, 4294901760
        %v4356 = vsub.f32 %v3429, %v4355
        %4357 = vmatpush.msra.mxu0 %v4356
        %v4358 = vand.u32 %v3421, 4294901760
        %v4359 = vsub.f32 %v3421, %v4358
        %4360 = vmatpush.msra.mxu0 %v4359
        %v4361 = vand.u32 %v3413, 4294901760
        %v4362 = vsub.f32 %v3413, %v4361
        %4363 = vmatpush.msra.mxu0 %v4362
        %v4364 = vand.u32 %v3405, 4294901760
        %v4365 = vsub.f32 %v3405, %v4364
        %4366 = vmatpush.msra.mxu0 %v4365
        %v4367 = vand.u32 %v3481, 4294901760
        %v4368 = vsub.f32 %v3481, %v4367
        %4369 = vmatmul.f32.gmra.mxu0 %v4368
        %v4370 = vpop.f32.mrf.mxu0
        %v4371 = vadd.f32 %v4331, %v4370
        %4372 = vdwg.mxu0
        %4373 = vmatpush.msra.mxu0 0.0
        %4374 = vmatpush.msra.mxu0 0.0
        %4375 = vmatpush.msra.mxu0 0.0
        %4376 = vmatpush.msra.mxu0 0.0
        %4377 = vmatpush.msra.mxu0 0.0
        %4378 = vmatpush.msra.mxu0 0.0
        %4379 = vmatpush.msra.mxu0 0.0
        %v4380 = vand.u32 %v3469, 4294901760
        %4381 = vmatpush.msra.mxu0 %v4380
        %v4382 = vand.u32 %v3461, 4294901760
        %4383 = vmatpush.msra.mxu0 %v4382
        %v4384 = vand.u32 %v3453, 4294901760
        %4385 = vmatpush.msra.mxu0 %v4384
        %v4386 = vand.u32 %v3445, 4294901760
        %4387 = vmatpush.msra.mxu0 %v4386
        %v4388 = vand.u32 %v3437, 4294901760
        %4389 = vmatpush.msra.mxu0 %v4388
        %v4390 = vand.u32 %v3429, 4294901760
        %4391 = vmatpush.msra.mxu0 %v4390
        %v4392 = vand.u32 %v3421, 4294901760
        %4393 = vmatpush.msra.mxu0 %v4392
        %v4394 = vand.u32 %v3413, 4294901760
        %4395 = vmatpush.msra.mxu0 %v4394
        %v4396 = vand.u32 %v3405, 4294901760
        %4397 = vmatpush.msra.mxu0 %v4396
        %v4398 = vand.u32 %v3481, 4294901760
        %v4399 = vsub.f32 %v3481, %v4398
        %v4400 = vand.u32 %v4399, 4294901760
        %4401 = vmatmul.f32.gmra.mxu0 %v4400
        %v4402 = vpop.f32.mrf.mxu0
        %v4403 = vadd.f32 %v4371, %v4402
        %4404 = vdwg.mxu0
        %4405 = vmatpush.msra.mxu0 0.0
        %4406 = vmatpush.msra.mxu0 0.0
        %4407 = vmatpush.msra.mxu0 0.0
        %4408 = vmatpush.msra.mxu0 0.0
        %4409 = vmatpush.msra.mxu0 0.0
        %4410 = vmatpush.msra.mxu0 0.0
        %4411 = vmatpush.msra.mxu0 0.0
        %v4412 = vand.u32 %v3469, 4294901760
        %v4413 = vsub.f32 %v3469, %v4412
        %v4414 = vand.u32 %v4413, 4294901760
        %4415 = vmatpush.msra.mxu0 %v4414
        %v4416 = vand.u32 %v3461, 4294901760
        %v4417 = vsub.f32 %v3461, %v4416
        %v4418 = vand.u32 %v4417, 4294901760
        %4419 = vmatpush.msra.mxu0 %v4418
        %v4420 = vand.u32 %v3453, 4294901760
        %v4421 = vsub.f32 %v3453, %v4420
        %v4422 = vand.u32 %v4421, 4294901760
        %4423 = vmatpush.msra.mxu0 %v4422
        %v4424 = vand.u32 %v3445, 4294901760
        %v4425 = vsub.f32 %v3445, %v4424
        %v4426 = vand.u32 %v4425, 4294901760
        %4427 = vmatpush.msra.mxu0 %v4426
        %v4428 = vand.u32 %v3437, 4294901760
        %v4429 = vsub.f32 %v3437, %v4428
        %v4430 = vand.u32 %v4429, 4294901760
        %4431 = vmatpush.msra.mxu0 %v4430
        %v4432 = vand.u32 %v3429, 4294901760
        %v4433 = vsub.f32 %v3429, %v4432
        %v4434 = vand.u32 %v4433, 4294901760
        %4435 = vmatpush.msra.mxu0 %v4434
        %v4436 = vand.u32 %v3421, 4294901760
        %v4437 = vsub.f32 %v3421, %v4436
        %v4438 = vand.u32 %v4437, 4294901760
        %4439 = vmatpush.msra.mxu0 %v4438
        %v4440 = vand.u32 %v3413, 4294901760
        %v4441 = vsub.f32 %v3413, %v4440
        %v4442 = vand.u32 %v4441, 4294901760
        %4443 = vmatpush.msra.mxu0 %v4442
        %v4444 = vand.u32 %v3405, 4294901760
        %v4445 = vsub.f32 %v3405, %v4444
        %v4446 = vand.u32 %v4445, 4294901760
        %4447 = vmatpush.msra.mxu0 %v4446
        %v4448 = vand.u32 %v3481, 4294901760
        %4449 = vmatmul.f32.gmra.mxu0 %v4448
        %v4450 = vpop.f32.mrf.mxu0
        %v4451 = vadd.f32 %v4403, %v4450
        %4452 = vdwg.mxu0
        %4453 = vmatpush.msra.mxu0 0.0
        %4454 = vmatpush.msra.mxu0 0.0
        %4455 = vmatpush.msra.mxu0 0.0
        %4456 = vmatpush.msra.mxu0 0.0
        %4457 = vmatpush.msra.mxu0 0.0
        %4458 = vmatpush.msra.mxu0 0.0
        %4459 = vmatpush.msra.mxu0 0.0
        %v4460 = vand.u32 %v3469, 4294901760
        %4461 = vmatpush.msra.mxu0 %v4460
        %v4462 = vand.u32 %v3461, 4294901760
        %4463 = vmatpush.msra.mxu0 %v4462
        %v4464 = vand.u32 %v3453, 4294901760
        %4465 = vmatpush.msra.mxu0 %v4464
        %v4466 = vand.u32 %v3445, 4294901760
        %4467 = vmatpush.msra.mxu0 %v4466
        %v4468 = vand.u32 %v3437, 4294901760
        %4469 = vmatpush.msra.mxu0 %v4468
        %v4470 = vand.u32 %v3429, 4294901760
        %4471 = vmatpush.msra.mxu0 %v4470
        %v4472 = vand.u32 %v3421, 4294901760
        %4473 = vmatpush.msra.mxu0 %v4472
        %v4474 = vand.u32 %v3413, 4294901760
        %4475 = vmatpush.msra.mxu0 %v4474
        %v4476 = vand.u32 %v3405, 4294901760
        %4477 = vmatpush.msra.mxu0 %v4476
        %v4478 = vand.u32 %v3481, 4294901760
        %4479 = vmatmul.f32.gmra.mxu0 %v4478
        %v4480 = vpop.f32.mrf.mxu0
        %v4481 = vadd.f32 %v4451, %v4480
        %4482 = vdwg.mxu0
        %4483 = vmatpush.msra.mxu0 0.0
        %4484 = vmatpush.msra.mxu0 0.0
        %4485 = vmatpush.msra.mxu0 0.0
        %4486 = vmatpush.msra.mxu0 0.0
        %4487 = vmatpush.msra.mxu0 0.0
        %4488 = vmatpush.msra.mxu0 0.0
        %4489 = vmatpush.msra.mxu0 0.0
        %v4490 = vand.u32 %v3470, 4294901760
        %4491 = vmatpush.msra.mxu0 %v4490
        %v4492 = vand.u32 %v3462, 4294901760
        %4493 = vmatpush.msra.mxu0 %v4492
        %v4494 = vand.u32 %v3454, 4294901760
        %4495 = vmatpush.msra.mxu0 %v4494
        %v4496 = vand.u32 %v3446, 4294901760
        %4497 = vmatpush.msra.mxu0 %v4496
        %v4498 = vand.u32 %v3438, 4294901760
        %4499 = vmatpush.msra.mxu0 %v4498
        %v4500 = vand.u32 %v3430, 4294901760
        %4501 = vmatpush.msra.mxu0 %v4500
        %v4502 = vand.u32 %v3422, 4294901760
        %4503 = vmatpush.msra.mxu0 %v4502
        %v4504 = vand.u32 %v3414, 4294901760
        %4505 = vmatpush.msra.mxu0 %v4504
        %v4506 = vand.u32 %v3406, 4294901760
        %4507 = vmatpush.msra.mxu0 %v4506
        %v4508 = vand.u32 %v3481, 4294901760
        %v4509 = vsub.f32 %v3481, %v4508
        %v4510 = vand.u32 %v4509, 4294901760
        %v4511 = vsub.f32 %v4509, %v4510
        %v4512 = vand.u32 %v4511, 4294901760
        %4513 = vmatmul.f32.gmra.mxu0 %v4512
        %v4514 = vpop.f32.mrf.mxu0
        %v4515 = vadd.f32 %v3478, %v4514
        %4516 = vdwg.mxu0
        %4517 = vmatpush.msra.mxu0 0.0
        %4518 = vmatpush.msra.mxu0 0.0
        %4519 = vmatpush.msra.mxu0 0.0
        %4520 = vmatpush.msra.mxu0 0.0
        %4521 = vmatpush.msra.mxu0 0.0
        %4522 = vmatpush.msra.mxu0 0.0
        %4523 = vmatpush.msra.mxu0 0.0
        %v4524 = vand.u32 %v3470, 4294901760
        %v4525 = vsub.f32 %v3470, %v4524
        %v4526 = vand.u32 %v4525, 4294901760
        %v4527 = vsub.f32 %v4525, %v4526
        %v4528 = vand.u32 %v4527, 4294901760
        %4529 = vmatpush.msra.mxu0 %v4528
        %v4530 = vand.u32 %v3462, 4294901760
        %v4531 = vsub.f32 %v3462, %v4530
        %v4532 = vand.u32 %v4531, 4294901760
        %v4533 = vsub.f32 %v4531, %v4532
        %v4534 = vand.u32 %v4533, 4294901760
        %4535 = vmatpush.msra.mxu0 %v4534
        %v4536 = vand.u32 %v3454, 4294901760
        %v4537 = vsub.f32 %v3454, %v4536
        %v4538 = vand.u32 %v4537, 4294901760
        %v4539 = vsub.f32 %v4537, %v4538
        %v4540 = vand.u32 %v4539, 4294901760
        %4541 = vmatpush.msra.mxu0 %v4540
        %v4542 = vand.u32 %v3446, 4294901760
        %v4543 = vsub.f32 %v3446, %v4542
        %v4544 = vand.u32 %v4543, 4294901760
        %v4545 = vsub.f32 %v4543, %v4544
        %v4546 = vand.u32 %v4545, 4294901760
        %4547 = vmatpush.msra.mxu0 %v4546
        %v4548 = vand.u32 %v3438, 4294901760
        %v4549 = vsub.f32 %v3438, %v4548
        %v4550 = vand.u32 %v4549, 4294901760
        %v4551 = vsub.f32 %v4549, %v4550
        %v4552 = vand.u32 %v4551, 4294901760
        %4553 = vmatpush.msra.mxu0 %v4552
        %v4554 = vand.u32 %v3430, 4294901760
        %v4555 = vsub.f32 %v3430, %v4554
        %v4556 = vand.u32 %v4555, 4294901760
        %v4557 = vsub.f32 %v4555, %v4556
        %v4558 = vand.u32 %v4557, 4294901760
        %4559 = vmatpush.msra.mxu0 %v4558
        %v4560 = vand.u32 %v3422, 4294901760
        %v4561 = vsub.f32 %v3422, %v4560
        %v4562 = vand.u32 %v4561, 4294901760
        %v4563 = vsub.f32 %v4561, %v4562
        %v4564 = vand.u32 %v4563, 4294901760
        %4565 = vmatpush.msra.mxu0 %v4564
        %v4566 = vand.u32 %v3414, 4294901760
        %v4567 = vsub.f32 %v3414, %v4566
        %v4568 = vand.u32 %v4567, 4294901760
        %v4569 = vsub.f32 %v4567, %v4568
        %v4570 = vand.u32 %v4569, 4294901760
        %4571 = vmatpush.msra.mxu0 %v4570
        %v4572 = vand.u32 %v3406, 4294901760
        %v4573 = vsub.f32 %v3406, %v4572
        %v4574 = vand.u32 %v4573, 4294901760
        %v4575 = vsub.f32 %v4573, %v4574
        %v4576 = vand.u32 %v4575, 4294901760
        %4577 = vmatpush.msra.mxu0 %v4576
        %v4578 = vand.u32 %v3481, 4294901760
        %4579 = vmatmul.f32.gmra.mxu0 %v4578
        %v4580 = vpop.f32.mrf.mxu0
        %v4581 = vadd.f32 %v4515, %v4580
        %4582 = vdwg.mxu0
        %4583 = vmatpush.msra.mxu0 0.0
        %4584 = vmatpush.msra.mxu0 0.0
        %4585 = vmatpush.msra.mxu0 0.0
        %4586 = vmatpush.msra.mxu0 0.0
        %4587 = vmatpush.msra.mxu0 0.0
        %4588 = vmatpush.msra.mxu0 0.0
        %4589 = vmatpush.msra.mxu0 0.0
        %v4590 = vand.u32 %v3470, 4294901760
        %v4591 = vsub.f32 %v3470, %v4590
        %4592 = vmatpush.msra.mxu0 %v4591
        %v4593 = vand.u32 %v3462, 4294901760
        %v4594 = vsub.f32 %v3462, %v4593
        %4595 = vmatpush.msra.mxu0 %v4594
        %v4596 = vand.u32 %v3454, 4294901760
        %v4597 = vsub.f32 %v3454, %v4596
        %4598 = vmatpush.msra.mxu0 %v4597
        %v4599 = vand.u32 %v3446, 4294901760
        %v4600 = vsub.f32 %v3446, %v4599
        %4601 = vmatpush.msra.mxu0 %v4600
        %v4602 = vand.u32 %v3438, 4294901760
        %v4603 = vsub.f32 %v3438, %v4602
        %4604 = vmatpush.msra.mxu0 %v4603
        %v4605 = vand.u32 %v3430, 4294901760
        %v4606 = vsub.f32 %v3430, %v4605
        %4607 = vmatpush.msra.mxu0 %v4606
        %v4608 = vand.u32 %v3422, 4294901760
        %v4609 = vsub.f32 %v3422, %v4608
        %4610 = vmatpush.msra.mxu0 %v4609
        %v4611 = vand.u32 %v3414, 4294901760
        %v4612 = vsub.f32 %v3414, %v4611
        %4613 = vmatpush.msra.mxu0 %v4612
        %v4614 = vand.u32 %v3406, 4294901760
        %v4615 = vsub.f32 %v3406, %v4614
        %4616 = vmatpush.msra.mxu0 %v4615
        %v4617 = vand.u32 %v3481, 4294901760
        %v4618 = vsub.f32 %v3481, %v4617
        %4619 = vmatmul.f32.gmra.mxu0 %v4618
        %v4620 = vpop.f32.mrf.mxu0
        %v4621 = vadd.f32 %v4581, %v4620
        %4622 = vdwg.mxu0
        %4623 = vmatpush.msra.mxu0 0.0
        %4624 = vmatpush.msra.mxu0 0.0
        %4625 = vmatpush.msra.mxu0 0.0
        %4626 = vmatpush.msra.mxu0 0.0
        %4627 = vmatpush.msra.mxu0 0.0
        %4628 = vmatpush.msra.mxu0 0.0
        %4629 = vmatpush.msra.mxu0 0.0
        %v4630 = vand.u32 %v3470, 4294901760
        %4631 = vmatpush.msra.mxu0 %v4630
        %v4632 = vand.u32 %v3462, 4294901760
        %4633 = vmatpush.msra.mxu0 %v4632
        %v4634 = vand.u32 %v3454, 4294901760
        %4635 = vmatpush.msra.mxu0 %v4634
        %v4636 = vand.u32 %v3446, 4294901760
        %4637 = vmatpush.msra.mxu0 %v4636
        %v4638 = vand.u32 %v3438, 4294901760
        %4639 = vmatpush.msra.mxu0 %v4638
        %v4640 = vand.u32 %v3430, 4294901760
        %4641 = vmatpush.msra.mxu0 %v4640
        %v4642 = vand.u32 %v3422, 4294901760
        %4643 = vmatpush.msra.mxu0 %v4642
        %v4644 = vand.u32 %v3414, 4294901760
        %4645 = vmatpush.msra.mxu0 %v4644
        %v4646 = vand.u32 %v3406, 4294901760
        %4647 = vmatpush.msra.mxu0 %v4646
        %v4648 = vand.u32 %v3481, 4294901760
        %v4649 = vsub.f32 %v3481, %v4648
        %v4650 = vand.u32 %v4649, 4294901760
        %4651 = vmatmul.f32.gmra.mxu0 %v4650
        %v4652 = vpop.f32.mrf.mxu0
        %v4653 = vadd.f32 %v4621, %v4652
        %4654 = vdwg.mxu0
        %4655 = vmatpush.msra.mxu0 0.0
        %4656 = vmatpush.msra.mxu0 0.0
        %4657 = vmatpush.msra.mxu0 0.0
        %4658 = vmatpush.msra.mxu0 0.0
        %4659 = vmatpush.msra.mxu0 0.0
        %4660 = vmatpush.msra.mxu0 0.0
        %4661 = vmatpush.msra.mxu0 0.0
        %v4662 = vand.u32 %v3470, 4294901760
        %v4663 = vsub.f32 %v3470, %v4662
        %v4664 = vand.u32 %v4663, 4294901760
        %4665 = vmatpush.msra.mxu0 %v4664
        %v4666 = vand.u32 %v3462, 4294901760
        %v4667 = vsub.f32 %v3462, %v4666
        %v4668 = vand.u32 %v4667, 4294901760
        %4669 = vmatpush.msra.mxu0 %v4668
        %v4670 = vand.u32 %v3454, 4294901760
        %v4671 = vsub.f32 %v3454, %v4670
        %v4672 = vand.u32 %v4671, 4294901760
        %4673 = vmatpush.msra.mxu0 %v4672
        %v4674 = vand.u32 %v3446, 4294901760
        %v4675 = vsub.f32 %v3446, %v4674
        %v4676 = vand.u32 %v4675, 4294901760
        %4677 = vmatpush.msra.mxu0 %v4676
        %v4678 = vand.u32 %v3438, 4294901760
        %v4679 = vsub.f32 %v3438, %v4678
        %v4680 = vand.u32 %v4679, 4294901760
        %4681 = vmatpush.msra.mxu0 %v4680
        %v4682 = vand.u32 %v3430, 4294901760
        %v4683 = vsub.f32 %v3430, %v4682
        %v4684 = vand.u32 %v4683, 4294901760
        %4685 = vmatpush.msra.mxu0 %v4684
        %v4686 = vand.u32 %v3422, 4294901760
        %v4687 = vsub.f32 %v3422, %v4686
        %v4688 = vand.u32 %v4687, 4294901760
        %4689 = vmatpush.msra.mxu0 %v4688
        %v4690 = vand.u32 %v3414, 4294901760
        %v4691 = vsub.f32 %v3414, %v4690
        %v4692 = vand.u32 %v4691, 4294901760
        %4693 = vmatpush.msra.mxu0 %v4692
        %v4694 = vand.u32 %v3406, 4294901760
        %v4695 = vsub.f32 %v3406, %v4694
        %v4696 = vand.u32 %v4695, 4294901760
        %4697 = vmatpush.msra.mxu0 %v4696
        %v4698 = vand.u32 %v3481, 4294901760
        %4699 = vmatmul.f32.gmra.mxu0 %v4698
        %v4700 = vpop.f32.mrf.mxu0
        %v4701 = vadd.f32 %v4653, %v4700
        %4702 = vdwg.mxu0
        %4703 = vmatpush.msra.mxu0 0.0
        %4704 = vmatpush.msra.mxu0 0.0
        %4705 = vmatpush.msra.mxu0 0.0
        %4706 = vmatpush.msra.mxu0 0.0
        %4707 = vmatpush.msra.mxu0 0.0
        %4708 = vmatpush.msra.mxu0 0.0
        %4709 = vmatpush.msra.mxu0 0.0
        %v4710 = vand.u32 %v3470, 4294901760
        %4711 = vmatpush.msra.mxu0 %v4710
        %v4712 = vand.u32 %v3462, 4294901760
        %4713 = vmatpush.msra.mxu0 %v4712
        %v4714 = vand.u32 %v3454, 4294901760
        %4715 = vmatpush.msra.mxu0 %v4714
        %v4716 = vand.u32 %v3446, 4294901760
        %4717 = vmatpush.msra.mxu0 %v4716
        %v4718 = vand.u32 %v3438, 4294901760
        %4719 = vmatpush.msra.mxu0 %v4718
        %v4720 = vand.u32 %v3430, 4294901760
        %4721 = vmatpush.msra.mxu0 %v4720
        %v4722 = vand.u32 %v3422, 4294901760
        %4723 = vmatpush.msra.mxu0 %v4722
        %v4724 = vand.u32 %v3414, 4294901760
        %4725 = vmatpush.msra.mxu0 %v4724
        %v4726 = vand.u32 %v3406, 4294901760
        %4727 = vmatpush.msra.mxu0 %v4726
        %v4728 = vand.u32 %v3481, 4294901760
        %4729 = vmatmul.f32.gmra.mxu0 %v4728
        %v4730 = vpop.f32.mrf.mxu0
        %v4731 = vadd.f32 %v4701, %v4730
        %4732 = vdwg.mxu0
        %4733 = vmatpush.msra.mxu0 0.0
        %4734 = vmatpush.msra.mxu0 0.0
        %4735 = vmatpush.msra.mxu0 0.0
        %4736 = vmatpush.msra.mxu0 0.0
        %4737 = vmatpush.msra.mxu0 0.0
        %4738 = vmatpush.msra.mxu0 0.0
        %4739 = vmatpush.msra.mxu0 0.0
        %v4740 = vand.u32 %v3471, 4294901760
        %4741 = vmatpush.msra.mxu0 %v4740
        %v4742 = vand.u32 %v3463, 4294901760
        %4743 = vmatpush.msra.mxu0 %v4742
        %v4744 = vand.u32 %v3455, 4294901760
        %4745 = vmatpush.msra.mxu0 %v4744
        %v4746 = vand.u32 %v3447, 4294901760
        %4747 = vmatpush.msra.mxu0 %v4746
        %v4748 = vand.u32 %v3439, 4294901760
        %4749 = vmatpush.msra.mxu0 %v4748
        %v4750 = vand.u32 %v3431, 4294901760
        %4751 = vmatpush.msra.mxu0 %v4750
        %v4752 = vand.u32 %v3423, 4294901760
        %4753 = vmatpush.msra.mxu0 %v4752
        %v4754 = vand.u32 %v3415, 4294901760
        %4755 = vmatpush.msra.mxu0 %v4754
        %v4756 = vand.u32 %v3407, 4294901760
        %4757 = vmatpush.msra.mxu0 %v4756
        %v4758 = vand.u32 %v3481, 4294901760
        %v4759 = vsub.f32 %v3481, %v4758
        %v4760 = vand.u32 %v4759, 4294901760
        %v4761 = vsub.f32 %v4759, %v4760
        %v4762 = vand.u32 %v4761, 4294901760
        %4763 = vmatmul.f32.gmra.mxu0 %v4762
        %v4764 = vpop.f32.mrf.mxu0
        %v4765 = vadd.f32 %v3478, %v4764
        %4766 = vdwg.mxu0
        %4767 = vmatpush.msra.mxu0 0.0
        %4768 = vmatpush.msra.mxu0 0.0
        %4769 = vmatpush.msra.mxu0 0.0
        %4770 = vmatpush.msra.mxu0 0.0
        %4771 = vmatpush.msra.mxu0 0.0
        %4772 = vmatpush.msra.mxu0 0.0
        %4773 = vmatpush.msra.mxu0 0.0
        %v4774 = vand.u32 %v3471, 4294901760
        %v4775 = vsub.f32 %v3471, %v4774
        %v4776 = vand.u32 %v4775, 4294901760
        %v4777 = vsub.f32 %v4775, %v4776
        %v4778 = vand.u32 %v4777, 4294901760
        %4779 = vmatpush.msra.mxu0 %v4778
        %v4780 = vand.u32 %v3463, 4294901760
        %v4781 = vsub.f32 %v3463, %v4780
        %v4782 = vand.u32 %v4781, 4294901760
        %v4783 = vsub.f32 %v4781, %v4782
        %v4784 = vand.u32 %v4783, 4294901760
        %4785 = vmatpush.msra.mxu0 %v4784
        %v4786 = vand.u32 %v3455, 4294901760
        %v4787 = vsub.f32 %v3455, %v4786
        %v4788 = vand.u32 %v4787, 4294901760
        %v4789 = vsub.f32 %v4787, %v4788
        %v4790 = vand.u32 %v4789, 4294901760
        %4791 = vmatpush.msra.mxu0 %v4790
        %v4792 = vand.u32 %v3447, 4294901760
        %v4793 = vsub.f32 %v3447, %v4792
        %v4794 = vand.u32 %v4793, 4294901760
        %v4795 = vsub.f32 %v4793, %v4794
        %v4796 = vand.u32 %v4795, 4294901760
        %4797 = vmatpush.msra.mxu0 %v4796
        %v4798 = vand.u32 %v3439, 4294901760
        %v4799 = vsub.f32 %v3439, %v4798
        %v4800 = vand.u32 %v4799, 4294901760
        %v4801 = vsub.f32 %v4799, %v4800
        %v4802 = vand.u32 %v4801, 4294901760
        %4803 = vmatpush.msra.mxu0 %v4802
        %v4804 = vand.u32 %v3431, 4294901760
        %v4805 = vsub.f32 %v3431, %v4804
        %v4806 = vand.u32 %v4805, 4294901760
        %v4807 = vsub.f32 %v4805, %v4806
        %v4808 = vand.u32 %v4807, 4294901760
        %4809 = vmatpush.msra.mxu0 %v4808
        %v4810 = vand.u32 %v3423, 4294901760
        %v4811 = vsub.f32 %v3423, %v4810
        %v4812 = vand.u32 %v4811, 4294901760
        %v4813 = vsub.f32 %v4811, %v4812
        %v4814 = vand.u32 %v4813, 4294901760
        %4815 = vmatpush.msra.mxu0 %v4814
        %v4816 = vand.u32 %v3415, 4294901760
        %v4817 = vsub.f32 %v3415, %v4816
        %v4818 = vand.u32 %v4817, 4294901760
        %v4819 = vsub.f32 %v4817, %v4818
        %v4820 = vand.u32 %v4819, 4294901760
        %4821 = vmatpush.msra.mxu0 %v4820
        %v4822 = vand.u32 %v3407, 4294901760
        %v4823 = vsub.f32 %v3407, %v4822
        %v4824 = vand.u32 %v4823, 4294901760
        %v4825 = vsub.f32 %v4823, %v4824
        %v4826 = vand.u32 %v4825, 4294901760
        %4827 = vmatpush.msra.mxu0 %v4826
        %v4828 = vand.u32 %v3481, 4294901760
        %4829 = vmatmul.f32.gmra.mxu0 %v4828
        %v4830 = vpop.f32.mrf.mxu0
        %v4831 = vadd.f32 %v4765, %v4830
        %4832 = vdwg.mxu0
        %4833 = vmatpush.msra.mxu0 0.0
        %4834 = vmatpush.msra.mxu0 0.0
        %4835 = vmatpush.msra.mxu0 0.0
        %4836 = vmatpush.msra.mxu0 0.0
        %4837 = vmatpush.msra.mxu0 0.0
        %4838 = vmatpush.msra.mxu0 0.0
        %4839 = vmatpush.msra.mxu0 0.0
        %v4840 = vand.u32 %v3471, 4294901760
        %v4841 = vsub.f32 %v3471, %v4840
        %4842 = vmatpush.msra.mxu0 %v4841
        %v4843 = vand.u32 %v3463, 4294901760
        %v4844 = vsub.f32 %v3463, %v4843
        %4845 = vmatpush.msra.mxu0 %v4844
        %v4846 = vand.u32 %v3455, 4294901760
        %v4847 = vsub.f32 %v3455, %v4846
        %4848 = vmatpush.msra.mxu0 %v4847
        %v4849 = vand.u32 %v3447, 4294901760
        %v4850 = vsub.f32 %v3447, %v4849
        %4851 = vmatpush.msra.mxu0 %v4850
        %v4852 = vand.u32 %v3439, 4294901760
        %v4853 = vsub.f32 %v3439, %v4852
        %4854 = vmatpush.msra.mxu0 %v4853
        %v4855 = vand.u32 %v3431, 4294901760
        %v4856 = vsub.f32 %v3431, %v4855
        %4857 = vmatpush.msra.mxu0 %v4856
        %v4858 = vand.u32 %v3423, 4294901760
        %v4859 = vsub.f32 %v3423, %v4858
        %4860 = vmatpush.msra.mxu0 %v4859
        %v4861 = vand.u32 %v3415, 4294901760
        %v4862 = vsub.f32 %v3415, %v4861
        %4863 = vmatpush.msra.mxu0 %v4862
        %v4864 = vand.u32 %v3407, 4294901760
        %v4865 = vsub.f32 %v3407, %v4864
        %4866 = vmatpush.msra.mxu0 %v4865
        %v4867 = vand.u32 %v3481, 4294901760
        %v4868 = vsub.f32 %v3481, %v4867
        %4869 = vmatmul.f32.gmra.mxu0 %v4868
        %v4870 = vpop.f32.mrf.mxu0
        %v4871 = vadd.f32 %v4831, %v4870
        %4872 = vdwg.mxu0
        %4873 = vmatpush.msra.mxu0 0.0
        %4874 = vmatpush.msra.mxu0 0.0
        %4875 = vmatpush.msra.mxu0 0.0
        %4876 = vmatpush.msra.mxu0 0.0
        %4877 = vmatpush.msra.mxu0 0.0
        %4878 = vmatpush.msra.mxu0 0.0
        %4879 = vmatpush.msra.mxu0 0.0
        %v4880 = vand.u32 %v3471, 4294901760
        %4881 = vmatpush.msra.mxu0 %v4880
        %v4882 = vand.u32 %v3463, 4294901760
        %4883 = vmatpush.msra.mxu0 %v4882
        %v4884 = vand.u32 %v3455, 4294901760
        %4885 = vmatpush.msra.mxu0 %v4884
        %v4886 = vand.u32 %v3447, 4294901760
        %4887 = vmatpush.msra.mxu0 %v4886
        %v4888 = vand.u32 %v3439, 4294901760
        %4889 = vmatpush.msra.mxu0 %v4888
        %v4890 = vand.u32 %v3431, 4294901760
        %4891 = vmatpush.msra.mxu0 %v4890
        %v4892 = vand.u32 %v3423, 4294901760
        %4893 = vmatpush.msra.mxu0 %v4892
        %v4894 = vand.u32 %v3415, 4294901760
        %4895 = vmatpush.msra.mxu0 %v4894
        %v4896 = vand.u32 %v3407, 4294901760
        %4897 = vmatpush.msra.mxu0 %v4896
        %v4898 = vand.u32 %v3481, 4294901760
        %v4899 = vsub.f32 %v3481, %v4898
        %v4900 = vand.u32 %v4899, 4294901760
        %4901 = vmatmul.f32.gmra.mxu0 %v4900
        %v4902 = vpop.f32.mrf.mxu0
        %v4903 = vadd.f32 %v4871, %v4902
        %4904 = vdwg.mxu0
        %4905 = vmatpush.msra.mxu0 0.0
        %4906 = vmatpush.msra.mxu0 0.0
        %4907 = vmatpush.msra.mxu0 0.0
        %4908 = vmatpush.msra.mxu0 0.0
        %4909 = vmatpush.msra.mxu0 0.0
        %4910 = vmatpush.msra.mxu0 0.0
        %4911 = vmatpush.msra.mxu0 0.0
        %v4912 = vand.u32 %v3471, 4294901760
        %v4913 = vsub.f32 %v3471, %v4912
        %v4914 = vand.u32 %v4913, 4294901760
        %4915 = vmatpush.msra.mxu0 %v4914
        %v4916 = vand.u32 %v3463, 4294901760
        %v4917 = vsub.f32 %v3463, %v4916
        %v4918 = vand.u32 %v4917, 4294901760
        %4919 = vmatpush.msra.mxu0 %v4918
        %v4920 = vand.u32 %v3455, 4294901760
        %v4921 = vsub.f32 %v3455, %v4920
        %v4922 = vand.u32 %v4921, 4294901760
        %4923 = vmatpush.msra.mxu0 %v4922
        %v4924 = vand.u32 %v3447, 4294901760
        %v4925 = vsub.f32 %v3447, %v4924
        %v4926 = vand.u32 %v4925, 4294901760
        %4927 = vmatpush.msra.mxu0 %v4926
        %v4928 = vand.u32 %v3439, 4294901760
        %v4929 = vsub.f32 %v3439, %v4928
        %v4930 = vand.u32 %v4929, 4294901760
        %4931 = vmatpush.msra.mxu0 %v4930
        %v4932 = vand.u32 %v3431, 4294901760
        %v4933 = vsub.f32 %v3431, %v4932
        %v4934 = vand.u32 %v4933, 4294901760
        %4935 = vmatpush.msra.mxu0 %v4934
        %v4936 = vand.u32 %v3423, 4294901760
        %v4937 = vsub.f32 %v3423, %v4936
        %v4938 = vand.u32 %v4937, 4294901760
        %4939 = vmatpush.msra.mxu0 %v4938
        %v4940 = vand.u32 %v3415, 4294901760
        %v4941 = vsub.f32 %v3415, %v4940
        %v4942 = vand.u32 %v4941, 4294901760
        %4943 = vmatpush.msra.mxu0 %v4942
        %v4944 = vand.u32 %v3407, 4294901760
        %v4945 = vsub.f32 %v3407, %v4944
        %v4946 = vand.u32 %v4945, 4294901760
        %4947 = vmatpush.msra.mxu0 %v4946
        %v4948 = vand.u32 %v3481, 4294901760
        %4949 = vmatmul.f32.gmra.mxu0 %v4948
        %v4950 = vpop.f32.mrf.mxu0
        %v4951 = vadd.f32 %v4903, %v4950
        %4952 = vdwg.mxu0
        %4953 = vmatpush.msra.mxu0 0.0
        %4954 = vmatpush.msra.mxu0 0.0
        %4955 = vmatpush.msra.mxu0 0.0
        %4956 = vmatpush.msra.mxu0 0.0
        %4957 = vmatpush.msra.mxu0 0.0
        %4958 = vmatpush.msra.mxu0 0.0
        %4959 = vmatpush.msra.mxu0 0.0
        %v4960 = vand.u32 %v3471, 4294901760
        %4961 = vmatpush.msra.mxu0 %v4960
        %v4962 = vand.u32 %v3463, 4294901760
        %4963 = vmatpush.msra.mxu0 %v4962
        %v4964 = vand.u32 %v3455, 4294901760
        %4965 = vmatpush.msra.mxu0 %v4964
        %v4966 = vand.u32 %v3447, 4294901760
        %4967 = vmatpush.msra.mxu0 %v4966
        %v4968 = vand.u32 %v3439, 4294901760
        %4969 = vmatpush.msra.mxu0 %v4968
        %v4970 = vand.u32 %v3431, 4294901760
        %4971 = vmatpush.msra.mxu0 %v4970
        %v4972 = vand.u32 %v3423, 4294901760
        %4973 = vmatpush.msra.mxu0 %v4972
        %v4974 = vand.u32 %v3415, 4294901760
        %4975 = vmatpush.msra.mxu0 %v4974
        %v4976 = vand.u32 %v3407, 4294901760
        %4977 = vmatpush.msra.mxu0 %v4976
        %v4978 = vand.u32 %v3481, 4294901760
        %4979 = vmatmul.f32.gmra.mxu0 %v4978
        %v4980 = vpop.f32.mrf.mxu0
        %v4981 = vadd.f32 %v4951, %v4980
        %4982 = vdwg.mxu0
        %4983 = vmatpush.msra.mxu0 0.0
        %4984 = vmatpush.msra.mxu0 0.0
        %4985 = vmatpush.msra.mxu0 0.0
        %4986 = vmatpush.msra.mxu0 0.0
        %4987 = vmatpush.msra.mxu0 0.0
        %4988 = vmatpush.msra.mxu0 0.0
        %4989 = vmatpush.msra.mxu0 0.0
        %v4990 = vand.u32 %v3472, 4294901760
        %4991 = vmatpush.msra.mxu0 %v4990
        %v4992 = vand.u32 %v3464, 4294901760
        %4993 = vmatpush.msra.mxu0 %v4992
        %v4994 = vand.u32 %v3456, 4294901760
        %4995 = vmatpush.msra.mxu0 %v4994
        %v4996 = vand.u32 %v3448, 4294901760
        %4997 = vmatpush.msra.mxu0 %v4996
        %v4998 = vand.u32 %v3440, 4294901760
        %4999 = vmatpush.msra.mxu0 %v4998
        %v5000 = vand.u32 %v3432, 4294901760
        %5001 = vmatpush.msra.mxu0 %v5000
        %v5002 = vand.u32 %v3424, 4294901760
        %5003 = vmatpush.msra.mxu0 %v5002
        %v5004 = vand.u32 %v3416, 4294901760
        %5005 = vmatpush.msra.mxu0 %v5004
        %v5006 = vand.u32 %v3408, 4294901760
        %5007 = vmatpush.msra.mxu0 %v5006
        %v5008 = vand.u32 %v3481, 4294901760
        %v5009 = vsub.f32 %v3481, %v5008
        %v5010 = vand.u32 %v5009, 4294901760
        %v5011 = vsub.f32 %v5009, %v5010
        %v5012 = vand.u32 %v5011, 4294901760
        %5013 = vmatmul.f32.gmra.mxu0 %v5012
        %v5014 = vpop.f32.mrf.mxu0
        %v5015 = vadd.f32 %v3478, %v5014
        %5016 = vdwg.mxu0
        %5017 = vmatpush.msra.mxu0 0.0
        %5018 = vmatpush.msra.mxu0 0.0
        %5019 = vmatpush.msra.mxu0 0.0
        %5020 = vmatpush.msra.mxu0 0.0
        %5021 = vmatpush.msra.mxu0 0.0
        %5022 = vmatpush.msra.mxu0 0.0
        %5023 = vmatpush.msra.mxu0 0.0
        %v5024 = vand.u32 %v3472, 4294901760
        %v5025 = vsub.f32 %v3472, %v5024
        %v5026 = vand.u32 %v5025, 4294901760
        %v5027 = vsub.f32 %v5025, %v5026
        %v5028 = vand.u32 %v5027, 4294901760
        %5029 = vmatpush.msra.mxu0 %v5028
        %v5030 = vand.u32 %v3464, 4294901760
        %v5031 = vsub.f32 %v3464, %v5030
        %v5032 = vand.u32 %v5031, 4294901760
        %v5033 = vsub.f32 %v5031, %v5032
        %v5034 = vand.u32 %v5033, 4294901760
        %5035 = vmatpush.msra.mxu0 %v5034
        %v5036 = vand.u32 %v3456, 4294901760
        %v5037 = vsub.f32 %v3456, %v5036
        %v5038 = vand.u32 %v5037, 4294901760
        %v5039 = vsub.f32 %v5037, %v5038
        %v5040 = vand.u32 %v5039, 4294901760
        %5041 = vmatpush.msra.mxu0 %v5040
        %v5042 = vand.u32 %v3448, 4294901760
        %v5043 = vsub.f32 %v3448, %v5042
        %v5044 = vand.u32 %v5043, 4294901760
        %v5045 = vsub.f32 %v5043, %v5044
        %v5046 = vand.u32 %v5045, 4294901760
        %5047 = vmatpush.msra.mxu0 %v5046
        %v5048 = vand.u32 %v3440, 4294901760
        %v5049 = vsub.f32 %v3440, %v5048
        %v5050 = vand.u32 %v5049, 4294901760
        %v5051 = vsub.f32 %v5049, %v5050
        %v5052 = vand.u32 %v5051, 4294901760
        %5053 = vmatpush.msra.mxu0 %v5052
        %v5054 = vand.u32 %v3432, 4294901760
        %v5055 = vsub.f32 %v3432, %v5054
        %v5056 = vand.u32 %v5055, 4294901760
        %v5057 = vsub.f32 %v5055, %v5056
        %v5058 = vand.u32 %v5057, 4294901760
        %5059 = vmatpush.msra.mxu0 %v5058
        %v5060 = vand.u32 %v3424, 4294901760
        %v5061 = vsub.f32 %v3424, %v5060
        %v5062 = vand.u32 %v5061, 4294901760
        %v5063 = vsub.f32 %v5061, %v5062
        %v5064 = vand.u32 %v5063, 4294901760
        %5065 = vmatpush.msra.mxu0 %v5064
        %v5066 = vand.u32 %v3416, 4294901760
        %v5067 = vsub.f32 %v3416, %v5066
        %v5068 = vand.u32 %v5067, 4294901760
        %v5069 = vsub.f32 %v5067, %v5068
        %v5070 = vand.u32 %v5069, 4294901760
        %5071 = vmatpush.msra.mxu0 %v5070
        %v5072 = vand.u32 %v3408, 4294901760
        %v5073 = vsub.f32 %v3408, %v5072
        %v5074 = vand.u32 %v5073, 4294901760
        %v5075 = vsub.f32 %v5073, %v5074
        %v5076 = vand.u32 %v5075, 4294901760
        %5077 = vmatpush.msra.mxu0 %v5076
        %v5078 = vand.u32 %v3481, 4294901760
        %5079 = vmatmul.f32.gmra.mxu0 %v5078
        %v5080 = vpop.f32.mrf.mxu0
        %v5081 = vadd.f32 %v5015, %v5080
        %5082 = vdwg.mxu0
        %5083 = vmatpush.msra.mxu0 0.0
        %5084 = vmatpush.msra.mxu0 0.0
        %5085 = vmatpush.msra.mxu0 0.0
        %5086 = vmatpush.msra.mxu0 0.0
        %5087 = vmatpush.msra.mxu0 0.0
        %5088 = vmatpush.msra.mxu0 0.0
        %5089 = vmatpush.msra.mxu0 0.0
        %v5090 = vand.u32 %v3472, 4294901760
        %v5091 = vsub.f32 %v3472, %v5090
        %5092 = vmatpush.msra.mxu0 %v5091
        %v5093 = vand.u32 %v3464, 4294901760
        %v5094 = vsub.f32 %v3464, %v5093
        %5095 = vmatpush.msra.mxu0 %v5094
        %v5096 = vand.u32 %v3456, 4294901760
        %v5097 = vsub.f32 %v3456, %v5096
        %5098 = vmatpush.msra.mxu0 %v5097
        %v5099 = vand.u32 %v3448, 4294901760
        %v5100 = vsub.f32 %v3448, %v5099
        %5101 = vmatpush.msra.mxu0 %v5100
        %v5102 = vand.u32 %v3440, 4294901760
        %v5103 = vsub.f32 %v3440, %v5102
        %5104 = vmatpush.msra.mxu0 %v5103
        %v5105 = vand.u32 %v3432, 4294901760
        %v5106 = vsub.f32 %v3432, %v5105
        %5107 = vmatpush.msra.mxu0 %v5106
        %v5108 = vand.u32 %v3424, 4294901760
        %v5109 = vsub.f32 %v3424, %v5108
        %5110 = vmatpush.msra.mxu0 %v5109
        %v5111 = vand.u32 %v3416, 4294901760
        %v5112 = vsub.f32 %v3416, %v5111
        %5113 = vmatpush.msra.mxu0 %v5112
        %v5114 = vand.u32 %v3408, 4294901760
        %v5115 = vsub.f32 %v3408, %v5114
        %5116 = vmatpush.msra.mxu0 %v5115
        %v5117 = vand.u32 %v3481, 4294901760
        %v5118 = vsub.f32 %v3481, %v5117
        %5119 = vmatmul.f32.gmra.mxu0 %v5118
        %v5120 = vpop.f32.mrf.mxu0
        %v5121 = vadd.f32 %v5081, %v5120
        %5122 = vdwg.mxu0
        %5123 = vmatpush.msra.mxu0 0.0
        %5124 = vmatpush.msra.mxu0 0.0
        %5125 = vmatpush.msra.mxu0 0.0
        %5126 = vmatpush.msra.mxu0 0.0
        %5127 = vmatpush.msra.mxu0 0.0
        %5128 = vmatpush.msra.mxu0 0.0
        %5129 = vmatpush.msra.mxu0 0.0
        %v5130 = vand.u32 %v3472, 4294901760
        %5131 = vmatpush.msra.mxu0 %v5130
        %v5132 = vand.u32 %v3464, 4294901760
        %5133 = vmatpush.msra.mxu0 %v5132
        %v5134 = vand.u32 %v3456, 4294901760
        %5135 = vmatpush.msra.mxu0 %v5134
        %v5136 = vand.u32 %v3448, 4294901760
        %5137 = vmatpush.msra.mxu0 %v5136
        %v5138 = vand.u32 %v3440, 4294901760
        %5139 = vmatpush.msra.mxu0 %v5138
        %v5140 = vand.u32 %v3432, 4294901760
        %5141 = vmatpush.msra.mxu0 %v5140
        %v5142 = vand.u32 %v3424, 4294901760
        %5143 = vmatpush.msra.mxu0 %v5142
        %v5144 = vand.u32 %v3416, 4294901760
        %5145 = vmatpush.msra.mxu0 %v5144
        %v5146 = vand.u32 %v3408, 4294901760
        %5147 = vmatpush.msra.mxu0 %v5146
        %v5148 = vand.u32 %v3481, 4294901760
        %v5149 = vsub.f32 %v3481, %v5148
        %v5150 = vand.u32 %v5149, 4294901760
        %5151 = vmatmul.f32.gmra.mxu0 %v5150
        %v5152 = vpop.f32.mrf.mxu0
        %v5153 = vadd.f32 %v5121, %v5152
        %5154 = vdwg.mxu0
        %5155 = vmatpush.msra.mxu0 0.0
        %5156 = vmatpush.msra.mxu0 0.0
        %5157 = vmatpush.msra.mxu0 0.0
        %5158 = vmatpush.msra.mxu0 0.0
        %5159 = vmatpush.msra.mxu0 0.0
        %5160 = vmatpush.msra.mxu0 0.0
        %5161 = vmatpush.msra.mxu0 0.0
        %v5162 = vand.u32 %v3472, 4294901760
        %v5163 = vsub.f32 %v3472, %v5162
        %v5164 = vand.u32 %v5163, 4294901760
        %5165 = vmatpush.msra.mxu0 %v5164
        %v5166 = vand.u32 %v3464, 4294901760
        %v5167 = vsub.f32 %v3464, %v5166
        %v5168 = vand.u32 %v5167, 4294901760
        %5169 = vmatpush.msra.mxu0 %v5168
        %v5170 = vand.u32 %v3456, 4294901760
        %v5171 = vsub.f32 %v3456, %v5170
        %v5172 = vand.u32 %v5171, 4294901760
        %5173 = vmatpush.msra.mxu0 %v5172
        %v5174 = vand.u32 %v3448, 4294901760
        %v5175 = vsub.f32 %v3448, %v5174
        %v5176 = vand.u32 %v5175, 4294901760
        %5177 = vmatpush.msra.mxu0 %v5176
        %v5178 = vand.u32 %v3440, 4294901760
        %v5179 = vsub.f32 %v3440, %v5178
        %v5180 = vand.u32 %v5179, 4294901760
        %5181 = vmatpush.msra.mxu0 %v5180
        %v5182 = vand.u32 %v3432, 4294901760
        %v5183 = vsub.f32 %v3432, %v5182
        %v5184 = vand.u32 %v5183, 4294901760
        %5185 = vmatpush.msra.mxu0 %v5184
        %v5186 = vand.u32 %v3424, 4294901760
        %v5187 = vsub.f32 %v3424, %v5186
        %v5188 = vand.u32 %v5187, 4294901760
        %5189 = vmatpush.msra.mxu0 %v5188
        %v5190 = vand.u32 %v3416, 4294901760
        %v5191 = vsub.f32 %v3416, %v5190
        %v5192 = vand.u32 %v5191, 4294901760
        %5193 = vmatpush.msra.mxu0 %v5192
        %v5194 = vand.u32 %v3408, 4294901760
        %v5195 = vsub.f32 %v3408, %v5194
        %v5196 = vand.u32 %v5195, 4294901760
        %5197 = vmatpush.msra.mxu0 %v5196
        %v5198 = vand.u32 %v3481, 4294901760
        %5199 = vmatmul.f32.gmra.mxu0 %v5198
        %v5200 = vpop.f32.mrf.mxu0
        %v5201 = vadd.f32 %v5153, %v5200
        %5202 = vdwg.mxu0
        %5203 = vmatpush.msra.mxu0 0.0
        %5204 = vmatpush.msra.mxu0 0.0
        %5205 = vmatpush.msra.mxu0 0.0
        %5206 = vmatpush.msra.mxu0 0.0
        %5207 = vmatpush.msra.mxu0 0.0
        %5208 = vmatpush.msra.mxu0 0.0
        %5209 = vmatpush.msra.mxu0 0.0
        %v5210 = vand.u32 %v3472, 4294901760
        %5211 = vmatpush.msra.mxu0 %v5210
        %v5212 = vand.u32 %v3464, 4294901760
        %5213 = vmatpush.msra.mxu0 %v5212
        %v5214 = vand.u32 %v3456, 4294901760
        %5215 = vmatpush.msra.mxu0 %v5214
        %v5216 = vand.u32 %v3448, 4294901760
        %5217 = vmatpush.msra.mxu0 %v5216
        %v5218 = vand.u32 %v3440, 4294901760
        %5219 = vmatpush.msra.mxu0 %v5218
        %v5220 = vand.u32 %v3432, 4294901760
        %5221 = vmatpush.msra.mxu0 %v5220
        %v5222 = vand.u32 %v3424, 4294901760
        %5223 = vmatpush.msra.mxu0 %v5222
        %v5224 = vand.u32 %v3416, 4294901760
        %5225 = vmatpush.msra.mxu0 %v5224
        %v5226 = vand.u32 %v3408, 4294901760
        %5227 = vmatpush.msra.mxu0 %v5226
        %v5228 = vand.u32 %v3481, 4294901760
        %5229 = vmatmul.f32.gmra.mxu0 %v5228
        %v5230 = vpop.f32.mrf.mxu0
        %v5231 = vadd.f32 %v5201, %v5230
        %5232 = vdwg.mxu0
        %5233 = vmatpush.msra.mxu0 0.0
        %5234 = vmatpush.msra.mxu0 0.0
        %5235 = vmatpush.msra.mxu0 0.0
        %5236 = vmatpush.msra.mxu0 0.0
        %5237 = vmatpush.msra.mxu0 0.0
        %5238 = vmatpush.msra.mxu0 0.0
        %5239 = vmatpush.msra.mxu0 0.0
        %v5240 = vand.u32 %v3473, 4294901760
        %5241 = vmatpush.msra.mxu0 %v5240
        %v5242 = vand.u32 %v3465, 4294901760
        %5243 = vmatpush.msra.mxu0 %v5242
        %v5244 = vand.u32 %v3457, 4294901760
        %5245 = vmatpush.msra.mxu0 %v5244
        %v5246 = vand.u32 %v3449, 4294901760
        %5247 = vmatpush.msra.mxu0 %v5246
        %v5248 = vand.u32 %v3441, 4294901760
        %5249 = vmatpush.msra.mxu0 %v5248
        %v5250 = vand.u32 %v3433, 4294901760
        %5251 = vmatpush.msra.mxu0 %v5250
        %v5252 = vand.u32 %v3425, 4294901760
        %5253 = vmatpush.msra.mxu0 %v5252
        %v5254 = vand.u32 %v3417, 4294901760
        %5255 = vmatpush.msra.mxu0 %v5254
        %v5256 = vand.u32 %v3409, 4294901760
        %5257 = vmatpush.msra.mxu0 %v5256
        %v5258 = vand.u32 %v3481, 4294901760
        %v5259 = vsub.f32 %v3481, %v5258
        %v5260 = vand.u32 %v5259, 4294901760
        %v5261 = vsub.f32 %v5259, %v5260
        %v5262 = vand.u32 %v5261, 4294901760
        %5263 = vmatmul.f32.gmra.mxu0 %v5262
        %v5264 = vpop.f32.mrf.mxu0
        %v5265 = vadd.f32 %v3478, %v5264
        %5266 = vdwg.mxu0
        %5267 = vmatpush.msra.mxu0 0.0
        %5268 = vmatpush.msra.mxu0 0.0
        %5269 = vmatpush.msra.mxu0 0.0
        %5270 = vmatpush.msra.mxu0 0.0
        %5271 = vmatpush.msra.mxu0 0.0
        %5272 = vmatpush.msra.mxu0 0.0
        %5273 = vmatpush.msra.mxu0 0.0
        %v5274 = vand.u32 %v3473, 4294901760
        %v5275 = vsub.f32 %v3473, %v5274
        %v5276 = vand.u32 %v5275, 4294901760
        %v5277 = vsub.f32 %v5275, %v5276
        %v5278 = vand.u32 %v5277, 4294901760
        %5279 = vmatpush.msra.mxu0 %v5278
        %v5280 = vand.u32 %v3465, 4294901760
        %v5281 = vsub.f32 %v3465, %v5280
        %v5282 = vand.u32 %v5281, 4294901760
        %v5283 = vsub.f32 %v5281, %v5282
        %v5284 = vand.u32 %v5283, 4294901760
        %5285 = vmatpush.msra.mxu0 %v5284
        %v5286 = vand.u32 %v3457, 4294901760
        %v5287 = vsub.f32 %v3457, %v5286
        %v5288 = vand.u32 %v5287, 4294901760
        %v5289 = vsub.f32 %v5287, %v5288
        %v5290 = vand.u32 %v5289, 4294901760
        %5291 = vmatpush.msra.mxu0 %v5290
        %v5292 = vand.u32 %v3449, 4294901760
        %v5293 = vsub.f32 %v3449, %v5292
        %v5294 = vand.u32 %v5293, 4294901760
        %v5295 = vsub.f32 %v5293, %v5294
        %v5296 = vand.u32 %v5295, 4294901760
        %5297 = vmatpush.msra.mxu0 %v5296
        %v5298 = vand.u32 %v3441, 4294901760
        %v5299 = vsub.f32 %v3441, %v5298
        %v5300 = vand.u32 %v5299, 4294901760
        %v5301 = vsub.f32 %v5299, %v5300
        %v5302 = vand.u32 %v5301, 4294901760
        %5303 = vmatpush.msra.mxu0 %v5302
        %v5304 = vand.u32 %v3433, 4294901760
        %v5305 = vsub.f32 %v3433, %v5304
        %v5306 = vand.u32 %v5305, 4294901760
        %v5307 = vsub.f32 %v5305, %v5306
        %v5308 = vand.u32 %v5307, 4294901760
        %5309 = vmatpush.msra.mxu0 %v5308
        %v5310 = vand.u32 %v3425, 4294901760
        %v5311 = vsub.f32 %v3425, %v5310
        %v5312 = vand.u32 %v5311, 4294901760
        %v5313 = vsub.f32 %v5311, %v5312
        %v5314 = vand.u32 %v5313, 4294901760
        %5315 = vmatpush.msra.mxu0 %v5314
        %v5316 = vand.u32 %v3417, 4294901760
        %v5317 = vsub.f32 %v3417, %v5316
        %v5318 = vand.u32 %v5317, 4294901760
        %v5319 = vsub.f32 %v5317, %v5318
        %v5320 = vand.u32 %v5319, 4294901760
        %5321 = vmatpush.msra.mxu0 %v5320
        %v5322 = vand.u32 %v3409, 4294901760
        %v5323 = vsub.f32 %v3409, %v5322
        %v5324 = vand.u32 %v5323, 4294901760
        %v5325 = vsub.f32 %v5323, %v5324
        %v5326 = vand.u32 %v5325, 4294901760
        %5327 = vmatpush.msra.mxu0 %v5326
        %v5328 = vand.u32 %v3481, 4294901760
        %5329 = vmatmul.f32.gmra.mxu0 %v5328
        %v5330 = vpop.f32.mrf.mxu0
        %v5331 = vadd.f32 %v5265, %v5330
        %5332 = vdwg.mxu0
        %5333 = vmatpush.msra.mxu0 0.0
        %5334 = vmatpush.msra.mxu0 0.0
        %5335 = vmatpush.msra.mxu0 0.0
        %5336 = vmatpush.msra.mxu0 0.0
        %5337 = vmatpush.msra.mxu0 0.0
        %5338 = vmatpush.msra.mxu0 0.0
        %5339 = vmatpush.msra.mxu0 0.0
        %v5340 = vand.u32 %v3473, 4294901760
        %v5341 = vsub.f32 %v3473, %v5340
        %5342 = vmatpush.msra.mxu0 %v5341
        %v5343 = vand.u32 %v3465, 4294901760
        %v5344 = vsub.f32 %v3465, %v5343
        %5345 = vmatpush.msra.mxu0 %v5344
        %v5346 = vand.u32 %v3457, 4294901760
        %v5347 = vsub.f32 %v3457, %v5346
        %5348 = vmatpush.msra.mxu0 %v5347
        %v5349 = vand.u32 %v3449, 4294901760
        %v5350 = vsub.f32 %v3449, %v5349
        %5351 = vmatpush.msra.mxu0 %v5350
        %v5352 = vand.u32 %v3441, 4294901760
        %v5353 = vsub.f32 %v3441, %v5352
        %5354 = vmatpush.msra.mxu0 %v5353
        %v5355 = vand.u32 %v3433, 4294901760
        %v5356 = vsub.f32 %v3433, %v5355
        %5357 = vmatpush.msra.mxu0 %v5356
        %v5358 = vand.u32 %v3425, 4294901760
        %v5359 = vsub.f32 %v3425, %v5358
        %5360 = vmatpush.msra.mxu0 %v5359
        %v5361 = vand.u32 %v3417, 4294901760
        %v5362 = vsub.f32 %v3417, %v5361
        %5363 = vmatpush.msra.mxu0 %v5362
        %v5364 = vand.u32 %v3409, 4294901760
        %v5365 = vsub.f32 %v3409, %v5364
        %5366 = vmatpush.msra.mxu0 %v5365
        %v5367 = vand.u32 %v3481, 4294901760
        %v5368 = vsub.f32 %v3481, %v5367
        %5369 = vmatmul.f32.gmra.mxu0 %v5368
        %v5370 = vpop.f32.mrf.mxu0
        %v5371 = vadd.f32 %v5331, %v5370
        %5372 = vdwg.mxu0
        %5373 = vmatpush.msra.mxu0 0.0
        %5374 = vmatpush.msra.mxu0 0.0
        %5375 = vmatpush.msra.mxu0 0.0
        %5376 = vmatpush.msra.mxu0 0.0
        %5377 = vmatpush.msra.mxu0 0.0
        %5378 = vmatpush.msra.mxu0 0.0
        %5379 = vmatpush.msra.mxu0 0.0
        %v5380 = vand.u32 %v3473, 4294901760
        %5381 = vmatpush.msra.mxu0 %v5380
        %v5382 = vand.u32 %v3465, 4294901760
        %5383 = vmatpush.msra.mxu0 %v5382
        %v5384 = vand.u32 %v3457, 4294901760
        %5385 = vmatpush.msra.mxu0 %v5384
        %v5386 = vand.u32 %v3449, 4294901760
        %5387 = vmatpush.msra.mxu0 %v5386
        %v5388 = vand.u32 %v3441, 4294901760
        %5389 = vmatpush.msra.mxu0 %v5388
        %v5390 = vand.u32 %v3433, 4294901760
        %5391 = vmatpush.msra.mxu0 %v5390
        %v5392 = vand.u32 %v3425, 4294901760
        %5393 = vmatpush.msra.mxu0 %v5392
        %v5394 = vand.u32 %v3417, 4294901760
        %5395 = vmatpush.msra.mxu0 %v5394
        %v5396 = vand.u32 %v3409, 4294901760
        %5397 = vmatpush.msra.mxu0 %v5396
        %v5398 = vand.u32 %v3481, 4294901760
        %v5399 = vsub.f32 %v3481, %v5398
        %v5400 = vand.u32 %v5399, 4294901760
        %5401 = vmatmul.f32.gmra.mxu0 %v5400
        %v5402 = vpop.f32.mrf.mxu0
        %v5403 = vadd.f32 %v5371, %v5402
        %5404 = vdwg.mxu0
        %5405 = vmatpush.msra.mxu0 0.0
        %5406 = vmatpush.msra.mxu0 0.0
        %5407 = vmatpush.msra.mxu0 0.0
        %5408 = vmatpush.msra.mxu0 0.0
        %5409 = vmatpush.msra.mxu0 0.0
        %5410 = vmatpush.msra.mxu0 0.0
        %5411 = vmatpush.msra.mxu0 0.0
        %v5412 = vand.u32 %v3473, 4294901760
        %v5413 = vsub.f32 %v3473, %v5412
        %v5414 = vand.u32 %v5413, 4294901760
        %5415 = vmatpush.msra.mxu0 %v5414
        %v5416 = vand.u32 %v3465, 4294901760
        %v5417 = vsub.f32 %v3465, %v5416
        %v5418 = vand.u32 %v5417, 4294901760
        %5419 = vmatpush.msra.mxu0 %v5418
        %v5420 = vand.u32 %v3457, 4294901760
        %v5421 = vsub.f32 %v3457, %v5420
        %v5422 = vand.u32 %v5421, 4294901760
        %5423 = vmatpush.msra.mxu0 %v5422
        %v5424 = vand.u32 %v3449, 4294901760
        %v5425 = vsub.f32 %v3449, %v5424
        %v5426 = vand.u32 %v5425, 4294901760
        %5427 = vmatpush.msra.mxu0 %v5426
        %v5428 = vand.u32 %v3441, 4294901760
        %v5429 = vsub.f32 %v3441, %v5428
        %v5430 = vand.u32 %v5429, 4294901760
        %5431 = vmatpush.msra.mxu0 %v5430
        %v5432 = vand.u32 %v3433, 4294901760
        %v5433 = vsub.f32 %v3433, %v5432
        %v5434 = vand.u32 %v5433, 4294901760
        %5435 = vmatpush.msra.mxu0 %v5434
        %v5436 = vand.u32 %v3425, 4294901760
        %v5437 = vsub.f32 %v3425, %v5436
        %v5438 = vand.u32 %v5437, 4294901760
        %5439 = vmatpush.msra.mxu0 %v5438
        %v5440 = vand.u32 %v3417, 4294901760
        %v5441 = vsub.f32 %v3417, %v5440
        %v5442 = vand.u32 %v5441, 4294901760
        %5443 = vmatpush.msra.mxu0 %v5442
        %v5444 = vand.u32 %v3409, 4294901760
        %v5445 = vsub.f32 %v3409, %v5444
        %v5446 = vand.u32 %v5445, 4294901760
        %5447 = vmatpush.msra.mxu0 %v5446
        %v5448 = vand.u32 %v3481, 4294901760
        %5449 = vmatmul.f32.gmra.mxu0 %v5448
        %v5450 = vpop.f32.mrf.mxu0
        %v5451 = vadd.f32 %v5403, %v5450
        %5452 = vdwg.mxu0
        %5453 = vmatpush.msra.mxu0 0.0
        %5454 = vmatpush.msra.mxu0 0.0
        %5455 = vmatpush.msra.mxu0 0.0
        %5456 = vmatpush.msra.mxu0 0.0
        %5457 = vmatpush.msra.mxu0 0.0
        %5458 = vmatpush.msra.mxu0 0.0
        %5459 = vmatpush.msra.mxu0 0.0
        %v5460 = vand.u32 %v3473, 4294901760
        %5461 = vmatpush.msra.mxu0 %v5460
        %v5462 = vand.u32 %v3465, 4294901760
        %5463 = vmatpush.msra.mxu0 %v5462
        %v5464 = vand.u32 %v3457, 4294901760
        %5465 = vmatpush.msra.mxu0 %v5464
        %v5466 = vand.u32 %v3449, 4294901760
        %5467 = vmatpush.msra.mxu0 %v5466
        %v5468 = vand.u32 %v3441, 4294901760
        %5469 = vmatpush.msra.mxu0 %v5468
        %v5470 = vand.u32 %v3433, 4294901760
        %5471 = vmatpush.msra.mxu0 %v5470
        %v5472 = vand.u32 %v3425, 4294901760
        %5473 = vmatpush.msra.mxu0 %v5472
        %v5474 = vand.u32 %v3417, 4294901760
        %5475 = vmatpush.msra.mxu0 %v5474
        %v5476 = vand.u32 %v3409, 4294901760
        %5477 = vmatpush.msra.mxu0 %v5476
        %v5478 = vand.u32 %v3481, 4294901760
        %5479 = vmatmul.f32.gmra.mxu0 %v5478
        %v5480 = vpop.f32.mrf.mxu0
        %v5481 = vadd.f32 %v5451, %v5480
        %5482 = vdwg.mxu0
        %v5483 = vadd.f32 %v3731, %v245
        %v5484 = vadd.f32 %v3981, %v246
        %v5485 = vadd.f32 %v4231, %v247
        %v5486 = vadd.f32 %v4481, %v248
        %v5487 = vadd.f32 %v4731, %v249
        %v5488 = vadd.f32 %v4981, %v250
        %v5489 = vadd.f32 %v5231, %v251
        %v5490 = vadd.f32 %v5481, %v252
        %v5491 = vmax.f32 %v5483, 0.0
        %v5492 = vmax.f32 %v5484, 0.0
        %v5493 = vmax.f32 %v5485, 0.0
        %v5494 = vmax.f32 %v5486, 0.0
        %v5495 = vmax.f32 %v5487, 0.0
        %v5496 = vmax.f32 %v5488, 0.0
        %v5497 = vmax.f32 %v5489, 0.0
        %v5498 = vmax.f32 %v5490, 0.0
        %5499 = vst [vmem:[%s242] sm:$0xff] %v5491
        %5500 = vst [vmem:[%s242 + $0x8] sm:$0xff] %v5492
        %5501 = vst [vmem:[%s242 + $0x10] sm:$0xff] %v5493
        %5502 = vst [vmem:[%s242 + $0x18] sm:$0xff] %v5494
        %5503 = vst [vmem:[%s242 + $0x20] sm:$0xff] %v5495
        %5504 = vst [vmem:[%s242 + $0x28] sm:$0xff] %v5496
        %5505 = vst [vmem:[%s242 + $0x30] sm:$0xff] %v5497
        %5506 = vst [vmem:[%s242 + $0x38] sm:$0xff] %v5498
        %s5507 = sand.u32 %s140, 1
        %s5508 = scalar_lea.sflag [#allocation5], %s5507
        %s5509 = sand.u32 %s140, 1
        %s5510 = smul.addr %s5509, 64
        %s5511 = scalar_lea.vmem [#allocation6], %s5510
        // Predicated region
        $region45: #{tpu_custom_call.1} parent=39 // pred_check
          %p5512 = pneg %p150
        $region46: #{tpu_custom_call.1} parent=39 // pred_check_branch
          %5514 = sbr.rel (%p5512) target = $region48
        $region47: #{tpu_custom_call.1} parent=39 // pred_region
          %s5515 = smul.u32 8, %s22
          %5517 = vsyncadd %s5508, 0
          %s5518 = smul.addr %s5515, 8
          %s5519 = scalar_lea.hbm %s5, %s5518
          %s5521 = sshll.u32 %s5511, 4
          %s5522 = int_to_ptr.vmem [resolvable:$true] %s5521
          %s5523 = sshll.u32 %s5519, 4
          %s5524 = int_to_ptr.hbm [resolvable:$true] %s5523
          %5526 = dma.vmem_to_hbm [thread:$0]  %s5522, 1024, %s5524, %s5508
        $region48: #{tpu_custom_call.1} parent=39 // pred_fallthru
          _
      $region40: #{tpu_custom_call.1} parent=5 // pred_fallthru
        _
      %p5527 = scmp.le.s32.totalorder 2, %s17
      // Predicated region
      $region49: #{tpu_custom_call.1} parent=5 // pred_check
        %p5528 = pneg %p5527
      $region50: #{tpu_custom_call.1} parent=5 // pred_check_branch
        %5530 = sbr.rel (%p5528) target = $region52
      $region51: #{tpu_custom_call.1} parent=5 // pred_region
        %s5531 = ssub.s32 %s17, 2
        // Predicated region
        $region53: #{tpu_custom_call.1} parent=51 // pred_check
          %p5532 = pneg %p156
        $region54: #{tpu_custom_call.1} parent=51 // pred_check_branch
          %5534 = sbr.rel (%p5532) target = $region56
        $region55: #{tpu_custom_call.1} parent=51 // pred_region
          %s5535 = sand.u32 %s141, 1
          %s5536 = scalar_lea.sflag [#allocation5], %s5535
          %s5537 = sand.u32 %s141, 1
          %s5538 = smul.addr %s5537, 64
          %s5539 = scalar_lea.vmem [#allocation6], %s5538
          %5541 = dma.done %s5536, 1024
        $region56: #{tpu_custom_call.1} parent=51 // pred_fallthru
          _
      $region52: #{tpu_custom_call.1} parent=5 // pred_fallthru
        _
    $region6: #{tpu_custom_call.1} parent=1 // loop_footer
      %s21 = sadd.s32 1, %s17
    $region7: #{tpu_custom_call.1} parent=1 // loop_footer_branch
      %16 = sbr.rel target = $region3
    $region8: #{tpu_custom_call.1} parent=1 // loop_exit
      _
    %5542 = vsyncpa [#allocation4], 1
    %s5543 = scalar_lea.sflag [#allocation4], 1
    %5544 = vsyncpa %s5543, 1
    %5545 = vsyncpa [#allocation5], 1
    %s5546 = scalar_lea.sflag [#allocation5], 1
    %5547 = vsyncpa %s5546, 1

</llo_original>
